<compile_context>
chip_gen: v7x
topology: tpu7x:2x2x1
jax: 0.10.0
libtpu: 0.0.40
codegen_flags: <defaults>
</compile_context>

<pallas_src>
import functools

import jax
import jax.numpy as jnp
import numpy as np
from jax.experimental import pallas as pl
from jax.experimental.pallas import tpu as pltpu

_LANE = 128   # channel dims are padded to a multiple of the lane width


def _round_up(n, m):
    return ((n + m - 1) // m) * m


# ----------------------- fully fused multi-layer kernel ---------------------

def _make_tcn_kernel(layer_cfgs, Lp, Cmax, P_max):
    """Whole TCN stack on one VMEM-resident (Lp, Cmax) activation tile."""

    def kernel(*refs):
        it = iter(refs)
        x_ref = next(it)                       # (1, Lp, Cmax) bf16
        w_refs = []
        for cfg in layer_cfgs:
            entry = {"w1": next(it), "b1": next(it),
                     "w2": next(it), "b2": next(it)}
            if cfg["has_conv3"]:
                entry["w3"] = next(it)
                entry["b3"] = next(it)
            w_refs.append(entry)
        o_ref = next(it)                       # (1, Lp, Cmax) bf16
        xpad = next(it)                        # (P_max + Lp, Cmax) bf16 VMEM
        hpad = next(it)                        # (P_max + Lp, Cmax) bf16 VMEM

        # Causal left-pad regions: zeroed once, never written again.
        if P_max > 0:
            zpad = jnp.zeros((P_max, Cmax), jnp.bfloat16)
            xpad[0:P_max, :] = zpad
            hpad[0:P_max, :] = zpad
        # Layer-0 input (residual source for layer 0) into the body region.
        xpad[P_max:, :] = x_ref[0]

        def im2col(ref, K, dilation, P):
            # Concatenate the K dilation-shifted causal slices along lanes;
            # all offsets are static Python ints (layers unrolled).
            off = P_max - P
            parts = [ref[off + k * dilation: off + k * dilation + Lp, :]
                     for k in range(K)]
            return parts[0] if K == 1 else jnp.concatenate(parts, axis=-1)

        for cfg, w in zip(layer_cfgs, w_refs):
            K, d, P = cfg["K"], cfg["dilation"], cfg["P"]

            # conv1 -> bias -> ReLU   (single MXU matmul, K*Cmax contraction)
            h = jnp.dot(im2col(xpad, K, d, P), w["w1"][...],
                        preferred_element_type=jnp.float32)
            h = jnp.maximum(h + w["b1"][...], 0.0)
            hpad[P_max:, :] = h.astype(jnp.bfloat16)   # never leaves VMEM

            # conv2 -> bias -> (ReLU)
            y = jnp.dot(im2col(hpad, K, d, P), w["w2"][...],
                        preferred_element_type=jnp.float32)
            y = y + w["b2"][...]
            if cfg["relu_out"]:
                y = jnp.maximum(y, 0.0)

            # residual path (1x1 conv if channel dims differ) + add
            xc = xpad[P_max:, :]
            if cfg["has_conv3"]:
                res = jnp.dot(xc, w["w3"][...],
                              preferred_element_type=jnp.float32) + w["b3"][...]
            else:
                res = xc.astype(jnp.float32)

            # Output of this layer becomes the next layer's (VMEM) input.
            xpad[P_max:, :] = (y + res).astype(jnp.bfloat16)

        o_ref[0] = xpad[P_max:, :]

    return kernel


def tcn_forward(x_ncl, pparams, *, layer_cfgs, target_size):
    """Forward pass of _TCNModule.  x_ncl: (B, C_in, L) -> (B, target_size, L)."""
    B, Cin, L = x_ncl.shape
    Cmax = pparams[0]["b1"].shape[1]
    Lp = max(_round_up(L, 8), 8)
    P_max = max(cfg["P"] for cfg in layer_cfgs)

    # (B, L, C) layout; zero-pad time (causal convs never look right, so the
    # right padding cannot pollute real rows) and channels (stay exactly zero).
    x = jnp.transpose(x_ncl, (0, 2, 1))
    x = jnp.pad(x, ((0, 0), (0, Lp - L), (0, Cmax - Cin))).astype(jnp.bfloat16)

    kernel = _make_tcn_kernel(layer_cfgs, Lp, Cmax, P_max)

    in_specs = [pl.BlockSpec((1, Lp, Cmax), lambda b: (b, 0, 0))]
    args = [x]
    for cfg, p in zip(layer_cfgs, pparams):
        K = cfg["K"]
        in_specs += [
            pl.BlockSpec((K * Cmax, Cmax), lambda b: (0, 0)),
            pl.BlockSpec((1, Cmax), lambda b: (0, 0)),
            pl.BlockSpec((K * Cmax, Cmax), lambda b: (0, 0)),
            pl.BlockSpec((1, Cmax), lambda b: (0, 0)),
        ]
        args += [p["w1"], p["b1"], p["w2"], p["b2"]]
        if cfg["has_conv3"]:
            in_specs += [
                pl.BlockSpec((Cmax, Cmax), lambda b: (0, 0)),
                pl.BlockSpec((1, Cmax), lambda b: (0, 0)),
            ]
            args += [p["w3"], p["b3"]]

    # VMEM budget: actual working set with headroom (clamped well below v7x).
    est = 2 * (P_max + Lp) * Cmax * 2            # two bf16 staging scratches
    est += 2 * 2 * Lp * Cmax * 2                 # in/out blocks, double-buffered
    for p in pparams:
        for v in p.values():
            est += 2 * v.size * v.dtype.itemsize
    vmem_limit = int(min(max(2 * est, 16 * 1024 * 1024), 48 * 1024 * 1024))

    grid_spec = pltpu.PrefetchScalarGridSpec(
        num_scalar_prefetch=0,
        grid=(B,),
        in_specs=in_specs,
        out_specs=pl.BlockSpec((1, Lp, Cmax), lambda b: (b, 0, 0)),
        scratch_shapes=[
            pltpu.VMEM((P_max + Lp, Cmax), jnp.bfloat16),   # x + causal pad
            pltpu.VMEM((P_max + Lp, Cmax), jnp.bfloat16),   # h + causal pad
        ],
    )
    out = pl.pallas_call(
        kernel,
        out_shape=jax.ShapeDtypeStruct((B, Lp, Cmax), jnp.bfloat16),
        grid_spec=grid_spec,
        compiler_params=pltpu.CompilerParams(
            dimension_semantics=("parallel",),
            vmem_limit_bytes=vmem_limit),
    )(*args)

    y = out[:, :L, :target_size].astype(jnp.float32)        # crop padding
    return jnp.transpose(y, (0, 2, 1))                      # (B, C_out, L)


# --------------------------------- parameters -------------------------------

def init_tcn_params(key, input_size, kernel_size, num_filters, num_layers,
                    dilation_base, target_size):
    """Deterministic f32 params with PyTorch-equivalent shapes, (K, Cin, Cout)."""
    params = []
    for i in range(num_layers):
        in_dim = input_size if i == 0 else num_filters
        out_dim = target_size if i == num_layers - 1 else num_filters
        key, k1, k2, k3, k4, k5, k6 = jax.random.split(key, 7)
        s1 = 1.0 / np.sqrt(in_dim * kernel_size)
        s2 = 1.0 / np.sqrt(num_filters * kernel_size)
        p = {
            "w1": jax.random.uniform(k1, (kernel_size, in_dim, num_filters),
                                     jnp.float32, -s1, s1),
            "b1": jax.random.uniform(k2, (num_filters,), jnp.float32, -s1, s1),
            "w2": jax.random.uniform(k3, (kernel_size, num_filters, out_dim),
                                     jnp.float32, -s2, s2),
            "b2": jax.random.uniform(k4, (out_dim,), jnp.float32, -s2, s2),
        }
        if in_dim != out_dim:
            s3 = 1.0 / np.sqrt(in_dim)
            p["w3"] = jax.random.uniform(k5, (1, in_dim, out_dim),
                                         jnp.float32, -s3, s3)
            p["b3"] = jax.random.uniform(k6, (out_dim,), jnp.float32, -s3, s3)
        params.append(p)
    return params


def make_layer_cfgs(input_size, kernel_size, num_filters, num_layers,
                    dilation_base, target_size):
    cfgs = []
    for i in range(num_layers):
        in_dim = input_size if i == 0 else num_filters
        out_dim = target_size if i == num_layers - 1 else num_filters
        d = dilation_base ** i
        cfgs.append(dict(K=kernel_size, dilation=d, P=d * (kernel_size - 1),
                         has_conv3=(in_dim != out_dim),
                         relu_out=(i != num_layers - 1)))
    return cfgs


def prepare_params(params, Cmax):
    """Pad every channel dim to Cmax, cast weights bf16 / biases f32, and
    pre-reshape conv weights to im2col layout (K*Cmax, Cmax)."""
    prepped = []
    for p in params:
        K = p["w1"].shape[0]

        def pad_w(w):
            return jnp.pad(w, ((0, 0), (0, Cmax - w.shape[1]),
                               (0, Cmax - w.shape[2]))).astype(jnp.bfloat16)

        def pad_b(b):
            return jnp.pad(b, (0, Cmax - b.shape[0])).reshape(1, Cmax).astype(
                jnp.float32)

        q = {
            "w1": pad_w(p["w1"]).reshape(K * Cmax, Cmax),
            "b1": pad_b(p["b1"]),
            "w2": pad_w(p["w2"]).reshape(K * Cmax, Cmax),
            "b2": pad_b(p["b2"]),
        }
        if "w3" in p:
            q["w3"] = pad_w(p["w3"]).reshape(Cmax, Cmax)
            q["b3"] = pad_b(p["b3"])
        prepped.append(q)
    return prepped


# ------------------------- pure-JAX reference (verification) ----------------

def _conv1d_ref(x_ncl, w_kio, b_o, dilation):
    K = w_kio.shape[0]
    pad = dilation * (K - 1)
    xp = jnp.pad(x_ncl.astype(jnp.bfloat16), ((0, 0), (0, 0), (pad, 0)))
    w_oik = jnp.transpose(w_kio, (2, 1, 0)).astype(jnp.bfloat16)
    y = jax.lax.conv_general_dilated(
        xp, w_oik, window_strides=(1,), padding="VALID",
        rhs_dilation=(dilation,), dimension_numbers=("NCH", "OIH", "NCH"),
        preferred_element_type=jnp.float32)
    return y + b_o[None, :, None].astype(jnp.float32)


def tcn_forward_ref(x_ncl, params, *, kernel_size, dilation_base, num_layers):
    x = x_ncl.astype(jnp.bfloat16)                # mirror kernel's bf16 path
    for i, p in enumerate(params):
        d = dilation_base ** i
        last = (i == num_layers - 1)
        h = jax.nn.relu(_conv1d_ref(x, p["w1"], p["b1"], d)).astype(jnp.bfloat16)
        y = _conv1d_ref(h, p["w2"], p["b2"], d)
        if not last:
            y = jax.nn.relu(y)
        if "w3" in p:
            residual = _conv1d_ref(x, p["w3"], p["b3"], 1)
        else:
            residual = x.astype(jnp.float32)
        x = (y + residual).astype(jnp.bfloat16)
    return x.astype(jnp.float32)


# ------------------------------------ main -----------------------------------

if __name__ == "__main__":
    B, L = 2, 16
    input_size = 4        # input channels
    kernel_size = 3
    num_filters = 8
    num_layers = 3
    dilation_base = 2
    target_size = 2

    key = jax.random.PRNGKey(0)
    kx, kp = jax.random.split(key)
    x = jax.random.normal(kx, (B, input_size, L), jnp.float32)   # NCL like PyTorch

    params = init_tcn_params(kp, input_size, kernel_size, num_filters,
                             num_layers, dilation_base, target_size)
    Cmax = _round_up(max(input_size, num_filters, target_size), _LANE)
    pparams = prepare_params(params, Cmax)
    layer_cfgs = make_layer_cfgs(input_size, kernel_size, num_filters,
                                 num_layers, dilation_base, target_size)

    fwd = jax.jit(functools.partial(
        tcn_forward, layer_cfgs=layer_cfgs, target_size=target_size))
    out = jax.block_until_ready(fwd(x, pparams))

    ref = tcn_forward_ref(x, params, kernel_size=kernel_size,
                          dilation_base=dilation_base, num_layers=num_layers)

    assert out.shape == (B, target_size, L), out.shape
    np.testing.assert_allclose(np.asarray(out), np.asarray(ref),
                               rtol=2e-2, atol=2e-2)
    print("KERNEL_OK")
</pallas_src>

<mosaic_0001>
module attributes {stable_mosaic.version = 11 : i64} {
  func.func @kernel(%arg0: i32, %arg1: memref<1x16x128xbf16, #tpu.memory_space<vmem>>, %arg2: memref<384x128xbf16, #tpu.memory_space<vmem>>, %arg3: memref<1x128xf32, #tpu.memory_space<vmem>>, %arg4: memref<384x128xbf16, #tpu.memory_space<vmem>>, %arg5: memref<1x128xf32, #tpu.memory_space<vmem>>, %arg6: memref<128x128xbf16, #tpu.memory_space<vmem>>, %arg7: memref<1x128xf32, #tpu.memory_space<vmem>>, %arg8: memref<384x128xbf16, #tpu.memory_space<vmem>>, %arg9: memref<1x128xf32, #tpu.memory_space<vmem>>, %arg10: memref<384x128xbf16, #tpu.memory_space<vmem>>, %arg11: memref<1x128xf32, #tpu.memory_space<vmem>>, %arg12: memref<384x128xbf16, #tpu.memory_space<vmem>>, %arg13: memref<1x128xf32, #tpu.memory_space<vmem>>, %arg14: memref<384x128xbf16, #tpu.memory_space<vmem>>, %arg15: memref<1x128xf32, #tpu.memory_space<vmem>>, %arg16: memref<128x128xbf16, #tpu.memory_space<vmem>>, %arg17: memref<1x128xf32, #tpu.memory_space<vmem>>, %arg18: memref<1x16x128xbf16, #tpu.memory_space<vmem>>, %arg19: memref<24x128xbf16, #tpu.memory_space<vmem>>, %arg20: memref<24x128xbf16, #tpu.memory_space<vmem>>) attributes {dimension_semantics = [#tpu.dimension_semantics<parallel>], iteration_bounds = array<i64: 2>, scalar_prefetch = 0 : i64, scratch_operands = 2 : i64, tpu.core_type = #tpu.core_type<tc>, window_params = [{transform_indices = @transform_0, window_bounds = array<i64: 1, 16, 128>}, {pipeline_mode = #tpu.pipeline_mode<synchronous>, transform_indices = @transform_1, window_bounds = array<i64: 384, 128>}, {pipeline_mode = #tpu.pipeline_mode<synchronous>, transform_indices = @transform_2, window_bounds = array<i64: 1, 128>}, {pipeline_mode = #tpu.pipeline_mode<synchronous>, transform_indices = @transform_3, window_bounds = array<i64: 384, 128>}, {pipeline_mode = #tpu.pipeline_mode<synchronous>, transform_indices = @transform_4, window_bounds = array<i64: 1, 128>}, {pipeline_mode = #tpu.pipeline_mode<synchronous>, transform_indices = @transform_5, window_bounds = array<i64: 128, 128>}, {pipeline_mode = #tpu.pipeline_mode<synchronous>, transform_indices = @transform_6, window_bounds = array<i64: 1, 128>}, {pipeline_mode = #tpu.pipeline_mode<synchronous>, transform_indices = @transform_7, window_bounds = array<i64: 384, 128>}, {pipeline_mode = #tpu.pipeline_mode<synchronous>, transform_indices = @transform_8, window_bounds = array<i64: 1, 128>}, {pipeline_mode = #tpu.pipeline_mode<synchronous>, transform_indices = @transform_9, window_bounds = array<i64: 384, 128>}, {pipeline_mode = #tpu.pipeline_mode<synchronous>, transform_indices = @transform_10, window_bounds = array<i64: 1, 128>}, {pipeline_mode = #tpu.pipeline_mode<synchronous>, transform_indices = @transform_11, window_bounds = array<i64: 384, 128>}, {pipeline_mode = #tpu.pipeline_mode<synchronous>, transform_indices = @transform_12, window_bounds = array<i64: 1, 128>}, {pipeline_mode = #tpu.pipeline_mode<synchronous>, transform_indices = @transform_13, window_bounds = array<i64: 384, 128>}, {pipeline_mode = #tpu.pipeline_mode<synchronous>, transform_indices = @transform_14, window_bounds = array<i64: 1, 128>}, {pipeline_mode = #tpu.pipeline_mode<synchronous>, transform_indices = @transform_15, window_bounds = array<i64: 128, 128>}, {pipeline_mode = #tpu.pipeline_mode<synchronous>, transform_indices = @transform_16, window_bounds = array<i64: 1, 128>}, {transform_indices = @transform_17, window_bounds = array<i64: 1, 16, 128>}]} {
    %cst = arith.constant 0.000000e+00 : bf16
    %0 = vector.broadcast %cst : bf16 to vector<8x128xbf16>
    %c0 = arith.constant 0 : index
    %c0_0 = arith.constant 0 : index
    %1 = vector.load %arg19[%c0, %c0_0] : memref<24x128xbf16, #tpu.memory_space<vmem>>, vector<8x128xbf16>
    tpu.vector_store %arg19[%c0, %c0_0], %0 {strides = array<i32>} : memref<24x128xbf16, #tpu.memory_space<vmem>>, vector<8x128xbf16>,
    %c0_1 = arith.constant 0 : index
    %c0_2 = arith.constant 0 : index
    %2 = vector.load %arg20[%c0_1, %c0_2] : memref<24x128xbf16, #tpu.memory_space<vmem>>, vector<8x128xbf16>
    tpu.vector_store %arg20[%c0_1, %c0_2], %0 {strides = array<i32>} : memref<24x128xbf16, #tpu.memory_space<vmem>>, vector<8x128xbf16>,
    %c0_3 = arith.constant 0 : index
    %c0_4 = arith.constant 0 : index
    %c0_5 = arith.constant 0 : index
    %3 = vector.load %arg1[%c0_3, %c0_4, %c0_5] : memref<1x16x128xbf16, #tpu.memory_space<vmem>>, vector<1x16x128xbf16>
    %4 = vector.shape_cast %3 : vector<1x16x128xbf16> to vector<16x128xbf16>
    %c8 = arith.constant 8 : index
    %c0_6 = arith.constant 0 : index
    %5 = vector.load %arg19[%c8, %c0_6] : memref<24x128xbf16, #tpu.memory_space<vmem>>, vector<16x128xbf16>
    tpu.vector_store %arg19[%c8, %c0_6], %4 {strides = array<i32>} : memref<24x128xbf16, #tpu.memory_space<vmem>>, vector<16x128xbf16>,
    %c6 = arith.constant 6 : index
    %c0_7 = arith.constant 0 : index
    %6 = vector.load %arg19[%c6, %c0_7] : memref<24x128xbf16, #tpu.memory_space<vmem>>, vector<16x128xbf16>
    %c7 = arith.constant 7 : index
    %c0_8 = arith.constant 0 : index
    %7 = vector.load %arg19[%c7, %c0_8] : memref<24x128xbf16, #tpu.memory_space<vmem>>, vector<16x128xbf16>
    %c8_9 = arith.constant 8 : index
    %c0_10 = arith.constant 0 : index
    %8 = vector.load %arg19[%c8_9, %c0_10] : memref<24x128xbf16, #tpu.memory_space<vmem>>, vector<16x128xbf16>
    %9 = tpu.concatenate %6, %7, %8 in 1 : vector<16x128xbf16>, vector<16x128xbf16>, vector<16x128xbf16> -> vector<16x384xbf16>
    %c0_11 = arith.constant 0 : index
    %c0_12 = arith.constant 0 : index
    %10 = vector.load %arg2[%c0_11, %c0_12] : memref<384x128xbf16, #tpu.memory_space<vmem>>, vector<384x128xbf16>
    %cst_13 = arith.constant dense<0.000000e+00> : vector<16x128xf32>
    %11 = tpu.matmul %9, %10, %cst_13 {dimension_numbers = #tpu.dot_dimension_numbers<[1], [0], [0], [1], [0, 0, 1, 1], [], []>} : vector<16x384xbf16>, vector<384x128xbf16>, vector<16x128xf32> -> vector<16x128xf32>
    %c0_14 = arith.constant 0 : index
    %c0_15 = arith.constant 0 : index
    %12 = vector.load %arg3[%c0_14, %c0_15] : memref<1x128xf32, #tpu.memory_space<vmem>>, vector<1x128xf32>
    %13 = vector.broadcast %12 : vector<1x128xf32> to vector<16x128xf32>
    %14 = arith.addf %11, %13 : vector<16x128xf32>
    %cst_16 = arith.constant 0.000000e+00 : f32
    %15 = vector.broadcast %cst_16 : f32 to vector<16x128xf32>
    %16 = arith.maximumf %14, %15 : vector<16x128xf32>
    %17 = arith.truncf %16 : vector<16x128xf32> to vector<16x128xbf16>
    %c8_17 = arith.constant 8 : index
    %c0_18 = arith.constant 0 : index
    %18 = vector.load %arg20[%c8_17, %c0_18] : memref<24x128xbf16, #tpu.memory_space<vmem>>, vector<16x128xbf16>
    tpu.vector_store %arg20[%c8_17, %c0_18], %17 {strides = array<i32>} : memref<24x128xbf16, #tpu.memory_space<vmem>>, vector<16x128xbf16>,
    %c6_19 = arith.constant 6 : index
    %c0_20 = arith.constant 0 : index
    %19 = vector.load %arg20[%c6_19, %c0_20] : memref<24x128xbf16, #tpu.memory_space<vmem>>, vector<16x128xbf16>
    %c7_21 = arith.constant 7 : index
    %c0_22 = arith.constant 0 : index
    %20 = vector.load %arg20[%c7_21, %c0_22] : memref<24x128xbf16, #tpu.memory_space<vmem>>, vector<16x128xbf16>
    %c8_23 = arith.constant 8 : index
    %c0_24 = arith.constant 0 : index
    %21 = vector.load %arg20[%c8_23, %c0_24] : memref<24x128xbf16, #tpu.memory_space<vmem>>, vector<16x128xbf16>
    %22 = tpu.concatenate %19, %20, %21 in 1 : vector<16x128xbf16>, vector<16x128xbf16>, vector<16x128xbf16> -> vector<16x384xbf16>
    %c0_25 = arith.constant 0 : index
    %c0_26 = arith.constant 0 : index
    %23 = vector.load %arg4[%c0_25, %c0_26] : memref<384x128xbf16, #tpu.memory_space<vmem>>, vector<384x128xbf16>
    %cst_27 = arith.constant dense<0.000000e+00> : vector<16x128xf32>
    %24 = tpu.matmul %22, %23, %cst_27 {dimension_numbers = #tpu.dot_dimension_numbers<[1], [0], [0], [1], [0, 0, 1, 1], [], []>} : vector<16x384xbf16>, vector<384x128xbf16>, vector<16x128xf32> -> vector<16x128xf32>
    %c0_28 = arith.constant 0 : index
    %c0_29 = arith.constant 0 : index
    %25 = vector.load %arg5[%c0_28, %c0_29] : memref<1x128xf32, #tpu.memory_space<vmem>>, vector<1x128xf32>
    %26 = vector.broadcast %25 : vector<1x128xf32> to vector<16x128xf32>
    %27 = arith.addf %24, %26 : vector<16x128xf32>
    %cst_30 = arith.constant 0.000000e+00 : f32
    %28 = vector.broadcast %cst_30 : f32 to vector<16x128xf32>
    %29 = arith.maximumf %27, %28 : vector<16x128xf32>
    %c8_31 = arith.constant 8 : index
    %c0_32 = arith.constant 0 : index
    %30 = vector.load %arg19[%c8_31, %c0_32] : memref<24x128xbf16, #tpu.memory_space<vmem>>, vector<16x128xbf16>
    %c0_33 = arith.constant 0 : index
    %c0_34 = arith.constant 0 : index
    %31 = vector.load %arg6[%c0_33, %c0_34] : memref<128x128xbf16, #tpu.memory_space<vmem>>, vector<128x128xbf16>
    %cst_35 = arith.constant dense<0.000000e+00> : vector<16x128xf32>
    %32 = tpu.matmul %30, %31, %cst_35 {dimension_numbers = #tpu.dot_dimension_numbers<[1], [0], [0], [1], [0, 0, 1, 1], [], []>} : vector<16x128xbf16>, vector<128x128xbf16>, vector<16x128xf32> -> vector<16x128xf32>
    %c0_36 = arith.constant 0 : index
    %c0_37 = arith.constant 0 : index
    %33 = vector.load %arg7[%c0_36, %c0_37] : memref<1x128xf32, #tpu.memory_space<vmem>>, vector<1x128xf32>
    %34 = vector.broadcast %33 : vector<1x128xf32> to vector<16x128xf32>
    %35 = arith.addf %32, %34 : vector<16x128xf32>
    %36 = arith.addf %29, %35 : vector<16x128xf32>
    %37 = arith.truncf %36 : vector<16x128xf32> to vector<16x128xbf16>
    %c8_38 = arith.constant 8 : index
    %c0_39 = arith.constant 0 : index
    %38 = vector.load %arg19[%c8_38, %c0_39] : memref<24x128xbf16, #tpu.memory_space<vmem>>, vector<16x128xbf16>
    tpu.vector_store %arg19[%c8_38, %c0_39], %37 {strides = array<i32>} : memref<24x128xbf16, #tpu.memory_space<vmem>>, vector<16x128xbf16>,
    %c4 = arith.constant 4 : index
    %c0_40 = arith.constant 0 : index
    %39 = vector.load %arg19[%c4, %c0_40] : memref<24x128xbf16, #tpu.memory_space<vmem>>, vector<16x128xbf16>
    %c6_41 = arith.constant 6 : index
    %c0_42 = arith.constant 0 : index
    %40 = vector.load %arg19[%c6_41, %c0_42] : memref<24x128xbf16, #tpu.memory_space<vmem>>, vector<16x128xbf16>
    %c8_43 = arith.constant 8 : index
    %c0_44 = arith.constant 0 : index
    %41 = vector.load %arg19[%c8_43, %c0_44] : memref<24x128xbf16, #tpu.memory_space<vmem>>, vector<16x128xbf16>
    %42 = tpu.concatenate %39, %40, %41 in 1 : vector<16x128xbf16>, vector<16x128xbf16>, vector<16x128xbf16> -> vector<16x384xbf16>
    %c0_45 = arith.constant 0 : index
    %c0_46 = arith.constant 0 : index
    %43 = vector.load %arg8[%c0_45, %c0_46] : memref<384x128xbf16, #tpu.memory_space<vmem>>, vector<384x128xbf16>
    %cst_47 = arith.constant dense<0.000000e+00> : vector<16x128xf32>
    %44 = tpu.matmul %42, %43, %cst_47 {dimension_numbers = #tpu.dot_dimension_numbers<[1], [0], [0], [1], [0, 0, 1, 1], [], []>} : vector<16x384xbf16>, vector<384x128xbf16>, vector<16x128xf32> -> vector<16x128xf32>
    %c0_48 = arith.constant 0 : index
    %c0_49 = arith.constant 0 : index
    %45 = vector.load %arg9[%c0_48, %c0_49] : memref<1x128xf32, #tpu.memory_space<vmem>>, vector<1x128xf32>
    %46 = vector.broadcast %45 : vector<1x128xf32> to vector<16x128xf32>
    %47 = arith.addf %44, %46 : vector<16x128xf32>
    %cst_50 = arith.constant 0.000000e+00 : f32
    %48 = vector.broadcast %cst_50 : f32 to vector<16x128xf32>
    %49 = arith.maximumf %47, %48 : vector<16x128xf32>
    %50 = arith.truncf %49 : vector<16x128xf32> to vector<16x128xbf16>
    %c8_51 = arith.constant 8 : index
    %c0_52 = arith.constant 0 : index
    %51 = vector.load %arg20[%c8_51, %c0_52] : memref<24x128xbf16, #tpu.memory_space<vmem>>, vector<16x128xbf16>
    tpu.vector_store %arg20[%c8_51, %c0_52], %50 {strides = array<i32>} : memref<24x128xbf16, #tpu.memory_space<vmem>>, vector<16x128xbf16>,
    %c4_53 = arith.constant 4 : index
    %c0_54 = arith.constant 0 : index
    %52 = vector.load %arg20[%c4_53, %c0_54] : memref<24x128xbf16, #tpu.memory_space<vmem>>, vector<16x128xbf16>
    %c6_55 = arith.constant 6 : index
    %c0_56 = arith.constant 0 : index
    %53 = vector.load %arg20[%c6_55, %c0_56] : memref<24x128xbf16, #tpu.memory_space<vmem>>, vector<16x128xbf16>
    %c8_57 = arith.constant 8 : index
    %c0_58 = arith.constant 0 : index
    %54 = vector.load %arg20[%c8_57, %c0_58] : memref<24x128xbf16, #tpu.memory_space<vmem>>, vector<16x128xbf16>
    %55 = tpu.concatenate %52, %53, %54 in 1 : vector<16x128xbf16>, vector<16x128xbf16>, vector<16x128xbf16> -> vector<16x384xbf16>
    %c0_59 = arith.constant 0 : index
    %c0_60 = arith.constant 0 : index
    %56 = vector.load %arg10[%c0_59, %c0_60] : memref<384x128xbf16, #tpu.memory_space<vmem>>, vector<384x128xbf16>
    %cst_61 = arith.constant dense<0.000000e+00> : vector<16x128xf32>
    %57 = tpu.matmul %55, %56, %cst_61 {dimension_numbers = #tpu.dot_dimension_numbers<[1], [0], [0], [1], [0, 0, 1, 1], [], []>} : vector<16x384xbf16>, vector<384x128xbf16>, vector<16x128xf32> -> vector<16x128xf32>
    %c0_62 = arith.constant 0 : index
    %c0_63 = arith.constant 0 : index
    %58 = vector.load %arg11[%c0_62, %c0_63] : memref<1x128xf32, #tpu.memory_space<vmem>>, vector<1x128xf32>
    %59 = vector.broadcast %58 : vector<1x128xf32> to vector<16x128xf32>
    %60 = arith.addf %57, %59 : vector<16x128xf32>
    %cst_64 = arith.constant 0.000000e+00 : f32
    %61 = vector.broadcast %cst_64 : f32 to vector<16x128xf32>
    %62 = arith.maximumf %60, %61 : vector<16x128xf32>
    %c8_65 = arith.constant 8 : index
    %c0_66 = arith.constant 0 : index
    %63 = vector.load %arg19[%c8_65, %c0_66] : memref<24x128xbf16, #tpu.memory_space<vmem>>, vector<16x128xbf16>
    %64 = arith.extf %63 : vector<16x128xbf16> to vector<16x128xf32>
    %65 = arith.addf %62, %64 : vector<16x128xf32>
    %66 = arith.truncf %65 : vector<16x128xf32> to vector<16x128xbf16>
    %c8_67 = arith.constant 8 : index
    %c0_68 = arith.constant 0 : index
    %67 = vector.load %arg19[%c8_67, %c0_68] : memref<24x128xbf16, #tpu.memory_space<vmem>>, vector<16x128xbf16>
    tpu.vector_store %arg19[%c8_67, %c0_68], %66 {strides = array<i32>} : memref<24x128xbf16, #tpu.memory_space<vmem>>, vector<16x128xbf16>,
    %c0_69 = arith.constant 0 : index
    %c0_70 = arith.constant 0 : index
    %68 = vector.load %arg19[%c0_69, %c0_70] : memref<24x128xbf16, #tpu.memory_space<vmem>>, vector<16x128xbf16>
    %c4_71 = arith.constant 4 : index
    %c0_72 = arith.constant 0 : index
    %69 = vector.load %arg19[%c4_71, %c0_72] : memref<24x128xbf16, #tpu.memory_space<vmem>>, vector<16x128xbf16>
    %c8_73 = arith.constant 8 : index
    %c0_74 = arith.constant 0 : index
    %70 = vector.load %arg19[%c8_73, %c0_74] : memref<24x128xbf16, #tpu.memory_space<vmem>>, vector<16x128xbf16>
    %71 = tpu.concatenate %68, %69, %70 in 1 : vector<16x128xbf16>, vector<16x128xbf16>, vector<16x128xbf16> -> vector<16x384xbf16>
    %c0_75 = arith.constant 0 : index
    %c0_76 = arith.constant 0 : index
    %72 = vector.load %arg12[%c0_75, %c0_76] : memref<384x128xbf16, #tpu.memory_space<vmem>>, vector<384x128xbf16>
    %cst_77 = arith.constant dense<0.000000e+00> : vector<16x128xf32>
    %73 = tpu.matmul %71, %72, %cst_77 {dimension_numbers = #tpu.dot_dimension_numbers<[1], [0], [0], [1], [0, 0, 1, 1], [], []>} : vector<16x384xbf16>, vector<384x128xbf16>, vector<16x128xf32> -> vector<16x128xf32>
    %c0_78 = arith.constant 0 : index
    %c0_79 = arith.constant 0 : index
    %74 = vector.load %arg13[%c0_78, %c0_79] : memref<1x128xf32, #tpu.memory_space<vmem>>, vector<1x128xf32>
    %75 = vector.broadcast %74 : vector<1x128xf32> to vector<16x128xf32>
    %76 = arith.addf %73, %75 : vector<16x128xf32>
    %cst_80 = arith.constant 0.000000e+00 : f32
    %77 = vector.broadcast %cst_80 : f32 to vector<16x128xf32>
    %78 = arith.maximumf %76, %77 : vector<16x128xf32>
    %79 = arith.truncf %78 : vector<16x128xf32> to vector<16x128xbf16>
    %c8_81 = arith.constant 8 : index
    %c0_82 = arith.constant 0 : index
    %80 = vector.load %arg20[%c8_81, %c0_82] : memref<24x128xbf16, #tpu.memory_space<vmem>>, vector<16x128xbf16>
    tpu.vector_store %arg20[%c8_81, %c0_82], %79 {strides = array<i32>} : memref<24x128xbf16, #tpu.memory_space<vmem>>, vector<16x128xbf16>,
    %c0_83 = arith.constant 0 : index
    %c0_84 = arith.constant 0 : index
    %81 = vector.load %arg20[%c0_83, %c0_84] : memref<24x128xbf16, #tpu.memory_space<vmem>>, vector<16x128xbf16>
    %c4_85 = arith.constant 4 : index
    %c0_86 = arith.constant 0 : index
    %82 = vector.load %arg20[%c4_85, %c0_86] : memref<24x128xbf16, #tpu.memory_space<vmem>>, vector<16x128xbf16>
    %c8_87 = arith.constant 8 : index
    %c0_88 = arith.constant 0 : index
    %83 = vector.load %arg20[%c8_87, %c0_88] : memref<24x128xbf16, #tpu.memory_space<vmem>>, vector<16x128xbf16>
    %84 = tpu.concatenate %81, %82, %83 in 1 : vector<16x128xbf16>, vector<16x128xbf16>, vector<16x128xbf16> -> vector<16x384xbf16>
    %c0_89 = arith.constant 0 : index
    %c0_90 = arith.constant 0 : index
    %85 = vector.load %arg14[%c0_89, %c0_90] : memref<384x128xbf16, #tpu.memory_space<vmem>>, vector<384x128xbf16>
    %cst_91 = arith.constant dense<0.000000e+00> : vector<16x128xf32>
    %86 = tpu.matmul %84, %85, %cst_91 {dimension_numbers = #tpu.dot_dimension_numbers<[1], [0], [0], [1], [0, 0, 1, 1], [], []>} : vector<16x384xbf16>, vector<384x128xbf16>, vector<16x128xf32> -> vector<16x128xf32>
    %c0_92 = arith.constant 0 : index
    %c0_93 = arith.constant 0 : index
    %87 = vector.load %arg15[%c0_92, %c0_93] : memref<1x128xf32, #tpu.memory_space<vmem>>, vector<1x128xf32>
    %88 = vector.broadcast %87 : vector<1x128xf32> to vector<16x128xf32>
    %89 = arith.addf %86, %88 : vector<16x128xf32>
    %c8_94 = arith.constant 8 : index
    %c0_95 = arith.constant 0 : index
    %90 = vector.load %arg19[%c8_94, %c0_95] : memref<24x128xbf16, #tpu.memory_space<vmem>>, vector<16x128xbf16>
    %c0_96 = arith.constant 0 : index
    %c0_97 = arith.constant 0 : index
    %91 = vector.load %arg16[%c0_96, %c0_97] : memref<128x128xbf16, #tpu.memory_space<vmem>>, vector<128x128xbf16>
    %cst_98 = arith.constant dense<0.000000e+00> : vector<16x128xf32>
    %92 = tpu.matmul %90, %91, %cst_98 {dimension_numbers = #tpu.dot_dimension_numbers<[1], [0], [0], [1], [0, 0, 1, 1], [], []>} : vector<16x128xbf16>, vector<128x128xbf16>, vector<16x128xf32> -> vector<16x128xf32>
    %c0_99 = arith.constant 0 : index
    %c0_100 = arith.constant 0 : index
    %93 = vector.load %arg17[%c0_99, %c0_100] : memref<1x128xf32, #tpu.memory_space<vmem>>, vector<1x128xf32>
    %94 = vector.broadcast %93 : vector<1x128xf32> to vector<16x128xf32>
    %95 = arith.addf %92, %94 : vector<16x128xf32>
    %96 = arith.addf %89, %95 : vector<16x128xf32>
    %97 = arith.truncf %96 : vector<16x128xf32> to vector<16x128xbf16>
    %c8_101 = arith.constant 8 : index
    %c0_102 = arith.constant 0 : index
    %98 = vector.load %arg19[%c8_101, %c0_102] : memref<24x128xbf16, #tpu.memory_space<vmem>>, vector<16x128xbf16>
    tpu.vector_store %arg19[%c8_101, %c0_102], %97 {strides = array<i32>} : memref<24x128xbf16, #tpu.memory_space<vmem>>, vector<16x128xbf16>,
    %c8_103 = arith.constant 8 : index
    %c0_104 = arith.constant 0 : index
    %99 = vector.load %arg19[%c8_103, %c0_104] : memref<24x128xbf16, #tpu.memory_space<vmem>>, vector<16x128xbf16>
    %c0_105 = arith.constant 0 : index
    %c0_106 = arith.constant 0 : index
    %c0_107 = arith.constant 0 : index
    %100 = vector.load %arg18[%c0_105, %c0_106, %c0_107] : memref<1x16x128xbf16, #tpu.memory_space<vmem>>, vector<1x16x128xbf16>
    %101 = vector.shape_cast %100 : vector<1x16x128xbf16> to vector<16x128xbf16>
    %102 = vector.shape_cast %99 : vector<16x128xbf16> to vector<1x16x128xbf16>
    tpu.vector_store %arg18[%c0_105, %c0_106, %c0_107], %102 {strides = array<i32>} : memref<1x16x128xbf16, #tpu.memory_space<vmem>>, vector<1x16x128xbf16>,
    return
  }
  func.func @transform_0(%arg0: i32) -> (i32, i32, i32) {
    %c0_i32 = arith.constant 0 : i32
    %c0_i32_0 = arith.constant 0 : i32
    %c0_i32_1 = arith.constant 0 : i32
    return %arg0, %c0_i32, %c0_i32_0 : i32, i32, i32
  }
  func.func @transform_1(%arg0: i32) -> (i32, i32) {
    %c0_i32 = arith.constant 0 : i32
    %c0_i32_0 = arith.constant 0 : i32
    %c0_i32_1 = arith.constant 0 : i32
    return %c0_i32, %c0_i32_0 : i32, i32
  }
  func.func @transform_2(%arg0: i32) -> (i32, i32) {
    %c0_i32 = arith.constant 0 : i32
    %c0_i32_0 = arith.constant 0 : i32
    %c0_i32_1 = arith.constant 0 : i32
    return %c0_i32, %c0_i32_0 : i32, i32
  }
  func.func @transform_3(%arg0: i32) -> (i32, i32) {
    %c0_i32 = arith.constant 0 : i32
    %c0_i32_0 = arith.constant 0 : i32
    %c0_i32_1 = arith.constant 0 : i32
    return %c0_i32, %c0_i32_0 : i32, i32
  }
  func.func @transform_4(%arg0: i32) -> (i32, i32) {
    %c0_i32 = arith.constant 0 : i32
    %c0_i32_0 = arith.constant 0 : i32
    %c0_i32_1 = arith.constant 0 : i32
    return %c0_i32, %c0_i32_0 : i32, i32
  }
  func.func @transform_5(%arg0: i32) -> (i32, i32) {
    %c0_i32 = arith.constant 0 : i32
    %c0_i32_0 = arith.constant 0 : i32
    %c0_i32_1 = arith.constant 0 : i32
    return %c0_i32, %c0_i32_0 : i32, i32
  }
  func.func @transform_6(%arg0: i32) -> (i32, i32) {
    %c0_i32 = arith.constant 0 : i32
    %c0_i32_0 = arith.constant 0 : i32
    %c0_i32_1 = arith.constant 0 : i32
    return %c0_i32, %c0_i32_0 : i32, i32
  }
  func.func @transform_7(%arg0: i32) -> (i32, i32) {
    %c0_i32 = arith.constant 0 : i32
    %c0_i32_0 = arith.constant 0 : i32
    %c0_i32_1 = arith.constant 0 : i32
    return %c0_i32, %c0_i32_0 : i32, i32
  }
  func.func @transform_8(%arg0: i32) -> (i32, i32) {
    %c0_i32 = arith.constant 0 : i32
    %c0_i32_0 = arith.constant 0 : i32
    %c0_i32_1 = arith.constant 0 : i32
    return %c0_i32, %c0_i32_0 : i32, i32
  }
  func.func @transform_9(%arg0: i32) -> (i32, i32) {
    %c0_i32 = arith.constant 0 : i32
    %c0_i32_0 = arith.constant 0 : i32
    %c0_i32_1 = arith.constant 0 : i32
    return %c0_i32, %c0_i32_0 : i32, i32
  }
  func.func @transform_10(%arg0: i32) -> (i32, i32) {
    %c0_i32 = arith.constant 0 : i32
    %c0_i32_0 = arith.constant 0 : i32
    %c0_i32_1 = arith.constant 0 : i32
    return %c0_i32, %c0_i32_0 : i32, i32
  }
  func.func @transform_11(%arg0: i32) -> (i32, i32) {
    %c0_i32 = arith.constant 0 : i32
    %c0_i32_0 = arith.constant 0 : i32
    %c0_i32_1 = arith.constant 0 : i32
    return %c0_i32, %c0_i32_0 : i32, i32
  }
  func.func @transform_12(%arg0: i32) -> (i32, i32) {
    %c0_i32 = arith.constant 0 : i32
    %c0_i32_0 = arith.constant 0 : i32
    %c0_i32_1 = arith.constant 0 : i32
    return %c0_i32, %c0_i32_0 : i32, i32
  }
  func.func @transform_13(%arg0: i32) -> (i32, i32) {
    %c0_i32 = arith.constant 0 : i32
    %c0_i32_0 = arith.constant 0 : i32
    %c0_i32_1 = arith.constant 0 : i32
    return %c0_i32, %c0_i32_0 : i32, i32
  }
  func.func @transform_14(%arg0: i32) -> (i32, i32) {
    %c0_i32 = arith.constant 0 : i32
    %c0_i32_0 = arith.constant 0 : i32
    %c0_i32_1 = arith.constant 0 : i32
    return %c0_i32, %c0_i32_0 : i32, i32
  }
  func.func @transform_15(%arg0: i32) -> (i32, i32) {
    %c0_i32 = arith.constant 0 : i32
    %c0_i32_0 = arith.constant 0 : i32
    %c0_i32_1 = arith.constant 0 : i32
    return %c0_i32, %c0_i32_0 : i32, i32
  }
  func.func @transform_16(%arg0: i32) -> (i32, i32) {
    %c0_i32 = arith.constant 0 : i32
    %c0_i32_0 = arith.constant 0 : i32
    %c0_i32_1 = arith.constant 0 : i32
    return %c0_i32, %c0_i32_0 : i32, i32
  }
  func.func @transform_17(%arg0: i32) -> (i32, i32, i32) {
    %c0_i32 = arith.constant 0 : i32
    %c0_i32_0 = arith.constant 0 : i32
    %c0_i32_1 = arith.constant 0 : i32
    return %arg0, %c0_i32, %c0_i32_0 : i32, i32, i32
  }
}

</mosaic_0001>

<llo_original>
// kernel: tcn_forward.1
$region0: #{tcn_forward.1}
  #allocation0 [shape = 'u32[]', space=smem, size = 0x4, offset = 0x4, fixed_abs, tag = 'smem constant byte address 0x4 - core index']
  #allocation1 [shape = 'u32[144,128]{1,0:T(1,128)}', space=vmem, size = 0x12000, scoped, tag = 'internal scratch']
  #allocation2 [shape = 'bf16[24,128]{1,0:T(8,128)(2,1)}', space=vmem, size = 0x1800, scoped, tag = 'scratch operand']
  #allocation3 [shape = 'bf16[24,128]{1,0:T(8,128)(2,1)}', space=vmem, size = 0x1800, scoped, tag = 'scratch operand']
  %s0 = inlined_call_operand.vmem [shape: bf16[2,16,128], index: 0, kind: input, shape index: {}]
  %s1 = inlined_call_operand.hbm [shape: bf16[384,128], index: 1, kind: input, shape index: {}]
  %s2 = inlined_call_operand.vmem [shape: f32[1,128], index: 2, kind: input, shape index: {}]
  %s3 = inlined_call_operand.hbm [shape: bf16[384,128], index: 3, kind: input, shape index: {}]
  %s4 = inlined_call_operand.hbm [shape: f32[1,128], index: 4, kind: input, shape index: {}]
  %s5 = inlined_call_operand.vmem [shape: bf16[128,128], index: 5, kind: input, shape index: {}]
  %s6 = inlined_call_operand.hbm [shape: f32[1,128], index: 6, kind: input, shape index: {}]
  %s7 = inlined_call_operand.hbm [shape: bf16[384,128], index: 7, kind: input, shape index: {}]
  %s8 = inlined_call_operand.hbm [shape: f32[1,128], index: 8, kind: input, shape index: {}]
  %s9 = inlined_call_operand.hbm [shape: bf16[384,128], index: 9, kind: input, shape index: {}]
  %s10 = inlined_call_operand.hbm [shape: f32[1,128], index: 10, kind: input, shape index: {}]
  %s11 = inlined_call_operand.hbm [shape: bf16[384,128], index: 11, kind: input, shape index: {}]
  %s12 = inlined_call_operand.hbm [shape: f32[1,128], index: 12, kind: input, shape index: {}]
  %s13 = inlined_call_operand.hbm [shape: bf16[384,128], index: 13, kind: input, shape index: {}]
  %s14 = inlined_call_operand.hbm [shape: f32[1,128], index: 14, kind: input, shape index: {}]
  %s15 = inlined_call_operand.vmem [shape: bf16[128,128], index: 15, kind: input, shape index: {}]
  %s16 = inlined_call_operand.hbm [shape: f32[1,128], index: 16, kind: input, shape index: {}]
  %s17 = inlined_call_operand.vmem [shape: bf16[2,16,128], index: 17, kind: output, shape index: {}]
  %s18 = sld [smem:[#allocation0]]
  $region153: #{tcn_forward.1} parent=0
    _
  %s20 = ssub.s32 1, %s18
  %s21 = scalar_select 0, %s20, %s18
  $region1: #{tcn_forward.1} parent=0
    #allocation4 [shape = 'u8[98304]{0}', space=vmem, size = 0x18000, scoped, tag = 'input window, operand 1, single buffered']
    #allocation5 [shape = 's32[2]{0}', space=sflag, size = 0x8, scoped, tag = 'scoped memory for tcn_forward.1']
    #allocation6 [shape = 'u8[98304]{0}', space=vmem, size = 0x18000, scoped, tag = 'input window, operand 3, single buffered']
    #allocation7 [shape = 's32[1]{0}', space=sflag, size = 0x4, scoped, tag = 'scoped memory for tcn_forward.1']
    #allocation8 [shape = 'u8[512]{0}', space=vmem, size = 0x400, scoped, tag = 'input window, operand 4, single buffered']
    #allocation9 [shape = 'u8[512]{0}', space=vmem, size = 0x400, scoped, tag = 'input window, operand 6, single buffered']
    #allocation10 [shape = 's32[1]{0}', space=sflag, size = 0x4, scoped, tag = 'scoped memory for tcn_forward.1']
    #allocation11 [shape = 'u8[98304]{0}', space=vmem, size = 0x18000, scoped, tag = 'input window, operand 7, single buffered']
    #allocation12 [shape = 'u8[512]{0}', space=vmem, size = 0x400, scoped, tag = 'input window, operand 8, single buffered']
    #allocation13 [shape = 's32[1]{0}', space=sflag, size = 0x4, scoped, tag = 'scoped memory for tcn_forward.1']
    #allocation14 [shape = 'u8[98304]{0}', space=vmem, size = 0x18000, scoped, tag = 'input window, operand 9, single buffered']
    #allocation15 [shape = 'u8[512]{0}', space=vmem, size = 0x400, scoped, tag = 'input window, operand 10, single buffered']
    #allocation16 [shape = 's32[1]{0}', space=sflag, size = 0x4, scoped, tag = 'scoped memory for tcn_forward.1']
    #allocation17 [shape = 'u8[98304]{0}', space=vmem, size = 0x18000, scoped, tag = 'input window, operand 11, single buffered']
    #allocation18 [shape = 'u8[512]{0}', space=vmem, size = 0x400, scoped, tag = 'input window, operand 12, single buffered']
    #allocation19 [shape = 's32[1]{0}', space=sflag, size = 0x4, scoped, tag = 'scoped memory for tcn_forward.1']
    #allocation20 [shape = 'u8[98304]{0}', space=vmem, size = 0x18000, scoped, tag = 'input window, operand 13, single buffered']
    #allocation21 [shape = 'u8[512]{0}', space=vmem, size = 0x400, scoped, tag = 'input window, operand 14, single buffered']
    #allocation22 [shape = 's32[1]{0}', space=sflag, size = 0x4, scoped, tag = 'scoped memory for tcn_forward.1']
    #allocation23 [shape = 'u8[512]{0}', space=vmem, size = 0x400, scoped, tag = 'input window, operand 16, single buffered']
    %22 = vsyncpa [#allocation5], 0
    %23 = vsyncpa [#allocation7], 0
    %24 = vsyncpa [#allocation10], 0
    %25 = vsyncpa [#allocation13], 0
    %26 = vsyncpa [#allocation16], 0
    %27 = vsyncpa [#allocation19], 0
    %28 = vsyncpa [#allocation22], 0
    loop: start=0, step=1, limit=4
    $region2: #{tcn_forward.1} parent=1 // loop_pre_header
      _
    $region3: #{tcn_forward.1} parent=1 // loop_header
      %s30 = sphi 0, %s34
      %p31 = scmp.ge.s32.totalorder %s30, 4
      %s40 = sphi 0, %s42
      %s43 = sphi 0, %s40
      %s44 = sphi 0, %s43
      %s60 = sphi 0, %s44
      %s64 = sphi 0, %s64
      %s66 = sphi 0, %s64
      %s67 = sphi 0, %s66
      %s81 = sphi 0, %s67
      %s85 = sphi 0, %s85
      %s87 = sphi 0, %s85
      %s88 = sphi 0, %s87
      %s102 = sphi 0, %s88
      %s106 = sphi 0, %s106
      %s108 = sphi 0, %s106
      %s109 = sphi 0, %s108
      %s123 = sphi 0, %s109
      %s127 = sphi 0, %s127
      %s129 = sphi 0, %s127
      %s130 = sphi 0, %s129
      %s144 = sphi 0, %s130
      %s148 = sphi 0, %s148
      %s150 = sphi 0, %s148
      %s151 = sphi 0, %s150
      %s165 = sphi 0, %s151
      %s169 = sphi 0, %s169
      %s171 = sphi 0, %s169
      %s172 = sphi 0, %s171
      %s186 = sphi 0, %s172
      %s190 = sphi 0, %s190
      %s192 = sphi 0, %s190
      %s193 = sphi 0, %s192
      %s207 = sphi 0, %s193
      %s211 = sphi 0, %s211
      %s213 = sphi 0, %s211
      %s214 = sphi 0, %s213
      %s228 = sphi 0, %s214
      %s232 = sphi 0, %s232
      %s234 = sphi 0, %s232
      %s235 = sphi 0, %s234
      %s249 = sphi 0, %s235
      %s253 = sphi 0, %s253
      %s255 = sphi 0, %s253
      %s256 = sphi 0, %s255
      %s270 = sphi 0, %s256
      %s274 = sphi 0, %s274
      %s276 = sphi 0, %s274
      %s277 = sphi 0, %s276
      %s291 = sphi 0, %s277
      %s295 = sphi 0, %s295
      %s297 = sphi 0, %s295
      %s298 = sphi 0, %s297
      %s312 = sphi 0, %s298
      %s316 = sphi 0, %s316
      %s318 = sphi 0, %s316
      %s319 = sphi 0, %s318
      %s333 = sphi 0, %s319
      %s337 = sphi 0, %s337
      %s339 = sphi 0, %s337
      %s340 = sphi 0, %s339
      %s354 = sphi 0, %s340
      %s358 = sphi 0, %s358
      %s360 = sphi 0, %s358
      %s361 = sphi 0, %s360
      %s375 = sphi 0, %s361
      %s379 = sphi 0, %s379
      %s381 = sphi 0, %s379
      %s382 = sphi 0, %s381
      %s396 = sphi 0, %s382
      %s402 = sphi 0, %s404
      %s405 = sphi 0, %s402
      %s406 = sphi 0, %s405
      %s422 = sphi 0, %s406
    $region4: #{tcn_forward.1} parent=1 // loop_header_branch
      %33 = sbr.rel (%p31) target = $region8
    $region5: #{tcn_forward.1} parent=1 // loop_body
      %s35 = ssub.s32 %s30, 1
      %s36 = ssub.s32 %s30, 2
      %s37 = sadd.s32 %s30, 1
      %s38 = ssub.s32 %s30, %s37
      %p39 = scmp.eq.s32.totalorder %s38, 0
      %s41 = sadd.s32 %s40, 1
      %s42 = scalar_select %p39, %s40, %s41
      %p45 = pneg %p39
      %p46 = scmp.eq.s32.totalorder %s30, 1
      %p47 = por %p45, %p46
      %p48 = scmp.ne.s32.totalorder %s40, %s43
      %p49 = scmp.eq.s32.totalorder %s30, 0
      %p50 = por %p48, %p49
      %p51 = scmp.ne.s32.totalorder %s40, %s43
      %p52 = scmp.eq.s32.totalorder %s35, 1
      %p53 = por %p51, %p52
      %p54 = scmp.ne.s32.totalorder %s43, %s44
      %p55 = scmp.eq.s32.totalorder %s35, 0
      %p56 = por %p54, %p55
      %p57 = scmp.ne.s32.totalorder %s43, %s44
      %p58 = scmp.eq.s32.totalorder %s36, 1
      %p59 = por %p57, %p58
      %p61 = scmp.ne.s32.totalorder %s44, %s60
      %p62 = scmp.eq.s32.totalorder %s36, 0
      %p63 = por %p61, %p62
      %s65 = sadd.s32 %s64, 1
      %p68 = scmp.eq.s32.totalorder %s30, 1
      %p69 = scmp.ne.s32.totalorder %s64, %s66
      %p70 = scmp.eq.s32.totalorder %s30, 0
      %p71 = por %p69, %p70
      %p72 = scmp.ne.s32.totalorder %s64, %s66
      %p73 = scmp.eq.s32.totalorder %s35, 1
      %p74 = por %p72, %p73
      %p75 = scmp.ne.s32.totalorder %s66, %s67
      %p76 = scmp.eq.s32.totalorder %s35, 0
      %p77 = por %p75, %p76
      %p78 = scmp.ne.s32.totalorder %s66, %s67
      %p79 = scmp.eq.s32.totalorder %s36, 1
      %p80 = por %p78, %p79
      %p82 = scmp.ne.s32.totalorder %s67, %s81
      %p83 = scmp.eq.s32.totalorder %s36, 0
      %p84 = por %p82, %p83
      %s86 = sadd.s32 %s85, 1
      %p89 = scmp.eq.s32.totalorder %s30, 1
      %p90 = scmp.ne.s32.totalorder %s85, %s87
      %p91 = scmp.eq.s32.totalorder %s30, 0
      %p92 = por %p90, %p91
      %p93 = scmp.ne.s32.totalorder %s85, %s87
      %p94 = scmp.eq.s32.totalorder %s35, 1
      %p95 = por %p93, %p94
      %p96 = scmp.ne.s32.totalorder %s87, %s88
      %p97 = scmp.eq.s32.totalorder %s35, 0
      %p98 = por %p96, %p97
      %p99 = scmp.ne.s32.totalorder %s87, %s88
      %p100 = scmp.eq.s32.totalorder %s36, 1
      %p101 = por %p99, %p100
      %p103 = scmp.ne.s32.totalorder %s88, %s102
      %p104 = scmp.eq.s32.totalorder %s36, 0
      %p105 = por %p103, %p104
      %s107 = sadd.s32 %s106, 1
      %p110 = scmp.eq.s32.totalorder %s30, 1
      %p111 = scmp.ne.s32.totalorder %s106, %s108
      %p112 = scmp.eq.s32.totalorder %s30, 0
      %p113 = por %p111, %p112
      %p114 = scmp.ne.s32.totalorder %s106, %s108
      %p115 = scmp.eq.s32.totalorder %s35, 1
      %p116 = por %p114, %p115
      %p117 = scmp.ne.s32.totalorder %s108, %s109
      %p118 = scmp.eq.s32.totalorder %s35, 0
      %p119 = por %p117, %p118
      %p120 = scmp.ne.s32.totalorder %s108, %s109
      %p121 = scmp.eq.s32.totalorder %s36, 1
      %p122 = por %p120, %p121
      %p124 = scmp.ne.s32.totalorder %s109, %s123
      %p125 = scmp.eq.s32.totalorder %s36, 0
      %p126 = por %p124, %p125
      %s128 = sadd.s32 %s127, 1
      %p131 = scmp.eq.s32.totalorder %s30, 1
      %p132 = scmp.ne.s32.totalorder %s127, %s129
      %p133 = scmp.eq.s32.totalorder %s30, 0
      %p134 = por %p132, %p133
      %p135 = scmp.ne.s32.totalorder %s127, %s129
      %p136 = scmp.eq.s32.totalorder %s35, 1
      %p137 = por %p135, %p136
      %p138 = scmp.ne.s32.totalorder %s129, %s130
      %p139 = scmp.eq.s32.totalorder %s35, 0
      %p140 = por %p138, %p139
      %p141 = scmp.ne.s32.totalorder %s129, %s130
      %p142 = scmp.eq.s32.totalorder %s36, 1
      %p143 = por %p141, %p142
      %p145 = scmp.ne.s32.totalorder %s130, %s144
      %p146 = scmp.eq.s32.totalorder %s36, 0
      %p147 = por %p145, %p146
      %s149 = sadd.s32 %s148, 1
      %p152 = scmp.eq.s32.totalorder %s30, 1
      %p153 = scmp.ne.s32.totalorder %s148, %s150
      %p154 = scmp.eq.s32.totalorder %s30, 0
      %p155 = por %p153, %p154
      %p156 = scmp.ne.s32.totalorder %s148, %s150
      %p157 = scmp.eq.s32.totalorder %s35, 1
      %p158 = por %p156, %p157
      %p159 = scmp.ne.s32.totalorder %s150, %s151
      %p160 = scmp.eq.s32.totalorder %s35, 0
      %p161 = por %p159, %p160
      %p162 = scmp.ne.s32.totalorder %s150, %s151
      %p163 = scmp.eq.s32.totalorder %s36, 1
      %p164 = por %p162, %p163
      %p166 = scmp.ne.s32.totalorder %s151, %s165
      %p167 = scmp.eq.s32.totalorder %s36, 0
      %p168 = por %p166, %p167
      %s170 = sadd.s32 %s169, 1
      %p173 = scmp.eq.s32.totalorder %s30, 1
      %p174 = scmp.ne.s32.totalorder %s169, %s171
      %p175 = scmp.eq.s32.totalorder %s30, 0
      %p176 = por %p174, %p175
      %p177 = scmp.ne.s32.totalorder %s169, %s171
      %p178 = scmp.eq.s32.totalorder %s35, 1
      %p179 = por %p177, %p178
      %p180 = scmp.ne.s32.totalorder %s171, %s172
      %p181 = scmp.eq.s32.totalorder %s35, 0
      %p182 = por %p180, %p181
      %p183 = scmp.ne.s32.totalorder %s171, %s172
      %p184 = scmp.eq.s32.totalorder %s36, 1
      %p185 = por %p183, %p184
      %p187 = scmp.ne.s32.totalorder %s172, %s186
      %p188 = scmp.eq.s32.totalorder %s36, 0
      %p189 = por %p187, %p188
      %s191 = sadd.s32 %s190, 1
      %p194 = scmp.eq.s32.totalorder %s30, 1
      %p195 = scmp.ne.s32.totalorder %s190, %s192
      %p196 = scmp.eq.s32.totalorder %s30, 0
      %p197 = por %p195, %p196
      %p198 = scmp.ne.s32.totalorder %s190, %s192
      %p199 = scmp.eq.s32.totalorder %s35, 1
      %p200 = por %p198, %p199
      %p201 = scmp.ne.s32.totalorder %s192, %s193
      %p202 = scmp.eq.s32.totalorder %s35, 0
      %p203 = por %p201, %p202
      %p204 = scmp.ne.s32.totalorder %s192, %s193
      %p205 = scmp.eq.s32.totalorder %s36, 1
      %p206 = por %p204, %p205
      %p208 = scmp.ne.s32.totalorder %s193, %s207
      %p209 = scmp.eq.s32.totalorder %s36, 0
      %p210 = por %p208, %p209
      %s212 = sadd.s32 %s211, 1
      %p215 = scmp.eq.s32.totalorder %s30, 1
      %p216 = scmp.ne.s32.totalorder %s211, %s213
      %p217 = scmp.eq.s32.totalorder %s30, 0
      %p218 = por %p216, %p217
      %p219 = scmp.ne.s32.totalorder %s211, %s213
      %p220 = scmp.eq.s32.totalorder %s35, 1
      %p221 = por %p219, %p220
      %p222 = scmp.ne.s32.totalorder %s213, %s214
      %p223 = scmp.eq.s32.totalorder %s35, 0
      %p224 = por %p222, %p223
      %p225 = scmp.ne.s32.totalorder %s213, %s214
      %p226 = scmp.eq.s32.totalorder %s36, 1
      %p227 = por %p225, %p226
      %p229 = scmp.ne.s32.totalorder %s214, %s228
      %p230 = scmp.eq.s32.totalorder %s36, 0
      %p231 = por %p229, %p230
      %s233 = sadd.s32 %s232, 1
      %p236 = scmp.eq.s32.totalorder %s30, 1
      %p237 = scmp.ne.s32.totalorder %s232, %s234
      %p238 = scmp.eq.s32.totalorder %s30, 0
      %p239 = por %p237, %p238
      %p240 = scmp.ne.s32.totalorder %s232, %s234
      %p241 = scmp.eq.s32.totalorder %s35, 1
      %p242 = por %p240, %p241
      %p243 = scmp.ne.s32.totalorder %s234, %s235
      %p244 = scmp.eq.s32.totalorder %s35, 0
      %p245 = por %p243, %p244
      %p246 = scmp.ne.s32.totalorder %s234, %s235
      %p247 = scmp.eq.s32.totalorder %s36, 1
      %p248 = por %p246, %p247
      %p250 = scmp.ne.s32.totalorder %s235, %s249
      %p251 = scmp.eq.s32.totalorder %s36, 0
      %p252 = por %p250, %p251
      %s254 = sadd.s32 %s253, 1
      %p257 = scmp.eq.s32.totalorder %s30, 1
      %p258 = scmp.ne.s32.totalorder %s253, %s255
      %p259 = scmp.eq.s32.totalorder %s30, 0
      %p260 = por %p258, %p259
      %p261 = scmp.ne.s32.totalorder %s253, %s255
      %p262 = scmp.eq.s32.totalorder %s35, 1
      %p263 = por %p261, %p262
      %p264 = scmp.ne.s32.totalorder %s255, %s256
      %p265 = scmp.eq.s32.totalorder %s35, 0
      %p266 = por %p264, %p265
      %p267 = scmp.ne.s32.totalorder %s255, %s256
      %p268 = scmp.eq.s32.totalorder %s36, 1
      %p269 = por %p267, %p268
      %p271 = scmp.ne.s32.totalorder %s256, %s270
      %p272 = scmp.eq.s32.totalorder %s36, 0
      %p273 = por %p271, %p272
      %s275 = sadd.s32 %s274, 1
      %p278 = scmp.eq.s32.totalorder %s30, 1
      %p279 = scmp.ne.s32.totalorder %s274, %s276
      %p280 = scmp.eq.s32.totalorder %s30, 0
      %p281 = por %p279, %p280
      %p282 = scmp.ne.s32.totalorder %s274, %s276
      %p283 = scmp.eq.s32.totalorder %s35, 1
      %p284 = por %p282, %p283
      %p285 = scmp.ne.s32.totalorder %s276, %s277
      %p286 = scmp.eq.s32.totalorder %s35, 0
      %p287 = por %p285, %p286
      %p288 = scmp.ne.s32.totalorder %s276, %s277
      %p289 = scmp.eq.s32.totalorder %s36, 1
      %p290 = por %p288, %p289
      %p292 = scmp.ne.s32.totalorder %s277, %s291
      %p293 = scmp.eq.s32.totalorder %s36, 0
      %p294 = por %p292, %p293
      %s296 = sadd.s32 %s295, 1
      %p299 = scmp.eq.s32.totalorder %s30, 1
      %p300 = scmp.ne.s32.totalorder %s295, %s297
      %p301 = scmp.eq.s32.totalorder %s30, 0
      %p302 = por %p300, %p301
      %p303 = scmp.ne.s32.totalorder %s295, %s297
      %p304 = scmp.eq.s32.totalorder %s35, 1
      %p305 = por %p303, %p304
      %p306 = scmp.ne.s32.totalorder %s297, %s298
      %p307 = scmp.eq.s32.totalorder %s35, 0
      %p308 = por %p306, %p307
      %p309 = scmp.ne.s32.totalorder %s297, %s298
      %p310 = scmp.eq.s32.totalorder %s36, 1
      %p311 = por %p309, %p310
      %p313 = scmp.ne.s32.totalorder %s298, %s312
      %p314 = scmp.eq.s32.totalorder %s36, 0
      %p315 = por %p313, %p314
      %s317 = sadd.s32 %s316, 1
      %p320 = scmp.eq.s32.totalorder %s30, 1
      %p321 = scmp.ne.s32.totalorder %s316, %s318
      %p322 = scmp.eq.s32.totalorder %s30, 0
      %p323 = por %p321, %p322
      %p324 = scmp.ne.s32.totalorder %s316, %s318
      %p325 = scmp.eq.s32.totalorder %s35, 1
      %p326 = por %p324, %p325
      %p327 = scmp.ne.s32.totalorder %s318, %s319
      %p328 = scmp.eq.s32.totalorder %s35, 0
      %p329 = por %p327, %p328
      %p330 = scmp.ne.s32.totalorder %s318, %s319
      %p331 = scmp.eq.s32.totalorder %s36, 1
      %p332 = por %p330, %p331
      %p334 = scmp.ne.s32.totalorder %s319, %s333
      %p335 = scmp.eq.s32.totalorder %s36, 0
      %p336 = por %p334, %p335
      %s338 = sadd.s32 %s337, 1
      %p341 = scmp.eq.s32.totalorder %s30, 1
      %p342 = scmp.ne.s32.totalorder %s337, %s339
      %p343 = scmp.eq.s32.totalorder %s30, 0
      %p344 = por %p342, %p343
      %p345 = scmp.ne.s32.totalorder %s337, %s339
      %p346 = scmp.eq.s32.totalorder %s35, 1
      %p347 = por %p345, %p346
      %p348 = scmp.ne.s32.totalorder %s339, %s340
      %p349 = scmp.eq.s32.totalorder %s35, 0
      %p350 = por %p348, %p349
      %p351 = scmp.ne.s32.totalorder %s339, %s340
      %p352 = scmp.eq.s32.totalorder %s36, 1
      %p353 = por %p351, %p352
      %p355 = scmp.ne.s32.totalorder %s340, %s354
      %p356 = scmp.eq.s32.totalorder %s36, 0
      %p357 = por %p355, %p356
      %s359 = sadd.s32 %s358, 1
      %p362 = scmp.eq.s32.totalorder %s30, 1
      %p363 = scmp.ne.s32.totalorder %s358, %s360
      %p364 = scmp.eq.s32.totalorder %s30, 0
      %p365 = por %p363, %p364
      %p366 = scmp.ne.s32.totalorder %s358, %s360
      %p367 = scmp.eq.s32.totalorder %s35, 1
      %p368 = por %p366, %p367
      %p369 = scmp.ne.s32.totalorder %s360, %s361
      %p370 = scmp.eq.s32.totalorder %s35, 0
      %p371 = por %p369, %p370
      %p372 = scmp.ne.s32.totalorder %s360, %s361
      %p373 = scmp.eq.s32.totalorder %s36, 1
      %p374 = por %p372, %p373
      %p376 = scmp.ne.s32.totalorder %s361, %s375
      %p377 = scmp.eq.s32.totalorder %s36, 0
      %p378 = por %p376, %p377
      %s380 = sadd.s32 %s379, 1
      %p383 = scmp.eq.s32.totalorder %s30, 1
      %p384 = scmp.ne.s32.totalorder %s379, %s381
      %p385 = scmp.eq.s32.totalorder %s30, 0
      %p386 = por %p384, %p385
      %p387 = scmp.ne.s32.totalorder %s379, %s381
      %p388 = scmp.eq.s32.totalorder %s35, 1
      %p389 = por %p387, %p388
      %p390 = scmp.ne.s32.totalorder %s381, %s382
      %p391 = scmp.eq.s32.totalorder %s35, 0
      %p392 = por %p390, %p391
      %p393 = scmp.ne.s32.totalorder %s381, %s382
      %p394 = scmp.eq.s32.totalorder %s36, 1
      %p395 = por %p393, %p394
      %p397 = scmp.ne.s32.totalorder %s382, %s396
      %p398 = scmp.eq.s32.totalorder %s36, 0
      %p399 = por %p397, %p398
      %s400 = ssub.s32 %s30, %s37
      %p401 = scmp.eq.s32.totalorder %s400, 0
      %s403 = sadd.s32 %s402, 1
      %s404 = scalar_select %p401, %s402, %s403
      %p407 = pneg %p401
      %p408 = scmp.eq.s32.totalorder %s30, 1
      %p409 = por %p407, %p408
      %p410 = scmp.ne.s32.totalorder %s402, %s405
      %p411 = scmp.eq.s32.totalorder %s30, 0
      %p412 = por %p410, %p411
      %p413 = scmp.ne.s32.totalorder %s402, %s405
      %p414 = scmp.eq.s32.totalorder %s35, 1
      %p415 = por %p413, %p414
      %p416 = scmp.ne.s32.totalorder %s405, %s406
      %p417 = scmp.eq.s32.totalorder %s35, 0
      %p418 = por %p416, %p417
      %p419 = scmp.ne.s32.totalorder %s405, %s406
      %p420 = scmp.eq.s32.totalorder %s36, 1
      %p421 = por %p419, %p420
      %p423 = scmp.ne.s32.totalorder %s406, %s422
      %p424 = scmp.eq.s32.totalorder %s36, 0
      %p425 = por %p423, %p424
      %p426 = scmp.le.s32.totalorder 1, %s30
      %p427 = scmp.lt.s32.totalorder %s30, 3
      %p428 = pnand %p426, %p427
      %p429 = pneg %p428
      // Predicated region
      $region9: #{tcn_forward.1} parent=5 // pred_check
        _
      $region10: #{tcn_forward.1} parent=5 // pred_check_branch
        %431 = sbr.rel (%p428) target = $region12
      $region11: #{tcn_forward.1} parent=5 // pred_region
        %s432 = ssub.s32 %s30, 1
        // Predicated region
        $region13: #{tcn_forward.1} parent=11 // pred_check
          %p433 = pneg %p77
        $region14: #{tcn_forward.1} parent=11 // pred_check_branch
          %435 = sbr.rel (%p433) target = $region16
        $region15: #{tcn_forward.1} parent=11 // pred_region
          %s437 = ssub.s32 3072, 3072
          %438 = vsyncadd [#allocation5], %s437
          %s439 = sshll.u32 [#allocation4], 4
          %s440 = int_to_ptr.vmem [resolvable:$true] %s439
          %445 = dma.hbm_to_vmem [thread:$0]  %s1, 3072, %s440, [#allocation5], 64, 64, 4
        $region16: #{tcn_forward.1} parent=11 // pred_fallthru
          _
        // Predicated region
        $region17: #{tcn_forward.1} parent=11 // pred_check
          %p446 = pneg %p98
        $region18: #{tcn_forward.1} parent=11 // pred_check_branch
          %448 = sbr.rel (%p446) target = $region20
        $region19: #{tcn_forward.1} parent=11 // pred_region
          _
        $region20: #{tcn_forward.1} parent=11 // pred_fallthru
          _
        // Predicated region
        $region21: #{tcn_forward.1} parent=11 // pred_check
          %p449 = pneg %p119
        $region22: #{tcn_forward.1} parent=11 // pred_check_branch
          %451 = sbr.rel (%p449) target = $region24
        $region23: #{tcn_forward.1} parent=11 // pred_region
          %s453 = ssub.s32 3072, 3072
          %454 = vsyncadd [#allocation7], %s453
          %s455 = sshll.u32 [#allocation6], 4
          %s456 = int_to_ptr.vmem [resolvable:$true] %s455
          %461 = dma.hbm_to_vmem [thread:$0]  %s3, 3072, %s456, [#allocation7], 64, 64, 4
        $region24: #{tcn_forward.1} parent=11 // pred_fallthru
          _
        // Predicated region
        $region25: #{tcn_forward.1} parent=11 // pred_check
          %p462 = pneg %p140
        $region26: #{tcn_forward.1} parent=11 // pred_check_branch
          %464 = sbr.rel (%p462) target = $region28
        $region27: #{tcn_forward.1} parent=11 // pred_region
          %s466 = ssub.s32 16, 16
          %467 = vsyncadd [#allocation7], %s466
          %s469 = sshll.u32 [#allocation8], 4
          %s470 = int_to_ptr.vmem [resolvable:$true] %s469
          %472 = dma.hbm_to_vmem [thread:$0]  %s4, 16, %s470, [#allocation7]
        $region28: #{tcn_forward.1} parent=11 // pred_fallthru
          _
        // Predicated region
        $region29: #{tcn_forward.1} parent=11 // pred_check
          %p473 = pneg %p161
        $region30: #{tcn_forward.1} parent=11 // pred_check_branch
          %475 = sbr.rel (%p473) target = $region32
        $region31: #{tcn_forward.1} parent=11 // pred_region
          _
        $region32: #{tcn_forward.1} parent=11 // pred_fallthru
          _
        // Predicated region
        $region33: #{tcn_forward.1} parent=11 // pred_check
          %p476 = pneg %p182
        $region34: #{tcn_forward.1} parent=11 // pred_check_branch
          %478 = sbr.rel (%p476) target = $region36
        $region35: #{tcn_forward.1} parent=11 // pred_region
          %s480 = ssub.s32 16, 16
          %481 = vsyncadd [#allocation10], %s480
          %s483 = sshll.u32 [#allocation9], 4
          %s484 = int_to_ptr.vmem [resolvable:$true] %s483
          %486 = dma.hbm_to_vmem [thread:$0]  %s6, 16, %s484, [#allocation10]
        $region36: #{tcn_forward.1} parent=11 // pred_fallthru
          _
        // Predicated region
        $region37: #{tcn_forward.1} parent=11 // pred_check
          %p487 = pneg %p203
        $region38: #{tcn_forward.1} parent=11 // pred_check_branch
          %489 = sbr.rel (%p487) target = $region40
        $region39: #{tcn_forward.1} parent=11 // pred_region
          %s491 = ssub.s32 3072, 3072
          %492 = vsyncadd [#allocation10], %s491
          %s493 = sshll.u32 [#allocation11], 4
          %s494 = int_to_ptr.vmem [resolvable:$true] %s493
          %499 = dma.hbm_to_vmem [thread:$0]  %s7, 3072, %s494, [#allocation10], 64, 64, 4
        $region40: #{tcn_forward.1} parent=11 // pred_fallthru
          _
        // Predicated region
        $region41: #{tcn_forward.1} parent=11 // pred_check
          %p500 = pneg %p224
        $region42: #{tcn_forward.1} parent=11 // pred_check_branch
          %502 = sbr.rel (%p500) target = $region44
        $region43: #{tcn_forward.1} parent=11 // pred_region
          %s504 = ssub.s32 16, 16
          %505 = vsyncadd [#allocation13], %s504
          %s507 = sshll.u32 [#allocation12], 4
          %s508 = int_to_ptr.vmem [resolvable:$true] %s507
          %510 = dma.hbm_to_vmem [thread:$0]  %s8, 16, %s508, [#allocation13]
        $region44: #{tcn_forward.1} parent=11 // pred_fallthru
          _
        // Predicated region
        $region45: #{tcn_forward.1} parent=11 // pred_check
          %p511 = pneg %p245
        $region46: #{tcn_forward.1} parent=11 // pred_check_branch
          %513 = sbr.rel (%p511) target = $region48
        $region47: #{tcn_forward.1} parent=11 // pred_region
          %s515 = ssub.s32 3072, 3072
          %516 = vsyncadd [#allocation13], %s515
          %s517 = sshll.u32 [#allocation14], 4
          %s518 = int_to_ptr.vmem [resolvable:$true] %s517
          %523 = dma.hbm_to_vmem [thread:$0]  %s9, 3072, %s518, [#allocation13], 64, 64, 4
        $region48: #{tcn_forward.1} parent=11 // pred_fallthru
          _
        // Predicated region
        $region49: #{tcn_forward.1} parent=11 // pred_check
          %p524 = pneg %p266
        $region50: #{tcn_forward.1} parent=11 // pred_check_branch
          %526 = sbr.rel (%p524) target = $region52
        $region51: #{tcn_forward.1} parent=11 // pred_region
          %s528 = ssub.s32 16, 16
          %529 = vsyncadd [#allocation16], %s528
          %s531 = sshll.u32 [#allocation15], 4
          %s532 = int_to_ptr.vmem [resolvable:$true] %s531
          %534 = dma.hbm_to_vmem [thread:$0]  %s10, 16, %s532, [#allocation16]
        $region52: #{tcn_forward.1} parent=11 // pred_fallthru
          _
        // Predicated region
        $region53: #{tcn_forward.1} parent=11 // pred_check
          %p535 = pneg %p287
        $region54: #{tcn_forward.1} parent=11 // pred_check_branch
          %537 = sbr.rel (%p535) target = $region56
        $region55: #{tcn_forward.1} parent=11 // pred_region
          %s539 = ssub.s32 3072, 3072
          %540 = vsyncadd [#allocation16], %s539
          %s541 = sshll.u32 [#allocation17], 4
          %s542 = int_to_ptr.vmem [resolvable:$true] %s541
          %547 = dma.hbm_to_vmem [thread:$0]  %s11, 3072, %s542, [#allocation16], 64, 64, 4
        $region56: #{tcn_forward.1} parent=11 // pred_fallthru
          _
        // Predicated region
        $region57: #{tcn_forward.1} parent=11 // pred_check
          %p548 = pneg %p308
        $region58: #{tcn_forward.1} parent=11 // pred_check_branch
          %550 = sbr.rel (%p548) target = $region60
        $region59: #{tcn_forward.1} parent=11 // pred_region
          %s552 = ssub.s32 16, 16
          %553 = vsyncadd [#allocation19], %s552
          %s555 = sshll.u32 [#allocation18], 4
          %s556 = int_to_ptr.vmem [resolvable:$true] %s555
          %558 = dma.hbm_to_vmem [thread:$0]  %s12, 16, %s556, [#allocation19]
        $region60: #{tcn_forward.1} parent=11 // pred_fallthru
          _
        // Predicated region
        $region61: #{tcn_forward.1} parent=11 // pred_check
          %p559 = pneg %p329
        $region62: #{tcn_forward.1} parent=11 // pred_check_branch
          %561 = sbr.rel (%p559) target = $region64
        $region63: #{tcn_forward.1} parent=11 // pred_region
          %s563 = ssub.s32 3072, 3072
          %564 = vsyncadd [#allocation19], %s563
          %s565 = sshll.u32 [#allocation20], 4
          %s566 = int_to_ptr.vmem [resolvable:$true] %s565
          %571 = dma.hbm_to_vmem [thread:$0]  %s13, 3072, %s566, [#allocation19], 64, 64, 4
        $region64: #{tcn_forward.1} parent=11 // pred_fallthru
          _
        // Predicated region
        $region65: #{tcn_forward.1} parent=11 // pred_check
          %p572 = pneg %p350
        $region66: #{tcn_forward.1} parent=11 // pred_check_branch
          %574 = sbr.rel (%p572) target = $region68
        $region67: #{tcn_forward.1} parent=11 // pred_region
          %s576 = ssub.s32 16, 16
          %577 = vsyncadd [#allocation22], %s576
          %s579 = sshll.u32 [#allocation21], 4
          %s580 = int_to_ptr.vmem [resolvable:$true] %s579
          %582 = dma.hbm_to_vmem [thread:$0]  %s14, 16, %s580, [#allocation22]
        $region68: #{tcn_forward.1} parent=11 // pred_fallthru
          _
        // Predicated region
        $region69: #{tcn_forward.1} parent=11 // pred_check
          %p583 = pneg %p371
        $region70: #{tcn_forward.1} parent=11 // pred_check_branch
          %585 = sbr.rel (%p583) target = $region72
        $region71: #{tcn_forward.1} parent=11 // pred_region
          _
        $region72: #{tcn_forward.1} parent=11 // pred_fallthru
          _
        // Predicated region
        $region73: #{tcn_forward.1} parent=11 // pred_check
          %p586 = pneg %p392
        $region74: #{tcn_forward.1} parent=11 // pred_check_branch
          %588 = sbr.rel (%p586) target = $region76
        $region75: #{tcn_forward.1} parent=11 // pred_region
          %s590 = ssub.s32 16, 16
          %591 = vsyncadd [#allocation22], %s590
          %s593 = sshll.u32 [#allocation23], 4
          %s594 = int_to_ptr.vmem [resolvable:$true] %s593
          %596 = dma.hbm_to_vmem [thread:$0]  %s16, 16, %s594, [#allocation22]
        $region76: #{tcn_forward.1} parent=11 // pred_fallthru
          _
      $region12: #{tcn_forward.1} parent=5 // pred_fallthru
        _
      %p597 = scmp.lt.s32.totalorder %s30, 2
      // Predicated region
      $region77: #{tcn_forward.1} parent=5 // pred_check
        %p598 = pneg %p597
      $region78: #{tcn_forward.1} parent=5 // pred_check_branch
        %600 = sbr.rel (%p598) target = $region80
      $region79: #{tcn_forward.1} parent=5 // pred_region
        // Predicated region
        $region81: #{tcn_forward.1} parent=79 // pred_check
          %p601 = pneg %p50
        $region82: #{tcn_forward.1} parent=79 // pred_check_branch
          %603 = sbr.rel (%p601) target = $region84
        $region83: #{tcn_forward.1} parent=79 // pred_region
          %p604 = scmp.lt.s32.totalorder %s30, 1
          %s605 = scalar_select %p604, %s30, 1
          %s606 = smul.addr %s605, 2
          %s607 = smul.addr %s606, 4
          %s608 = scalar_lea.vmem %s0, %s607
        $region84: #{tcn_forward.1} parent=79 // pred_fallthru
          _
      $region80: #{tcn_forward.1} parent=5 // pred_fallthru
        _
      %p609 = scmp.le.s32.totalorder 1, %s30
      %p610 = scmp.lt.s32.totalorder %s30, 3
      %p611 = pnand %p609, %p610
      %p612 = pneg %p611
      // Predicated region
      $region85: #{tcn_forward.1} parent=5 // pred_check
        _
      $region86: #{tcn_forward.1} parent=5 // pred_check_branch
        %614 = sbr.rel (%p611) target = $region88
      $region87: #{tcn_forward.1} parent=5 // pred_region
        %s615 = ssub.s32 %s30, 1
        // Predicated region
        $region89: #{tcn_forward.1} parent=87 // pred_check
          %p616 = pneg %p77
        $region90: #{tcn_forward.1} parent=87 // pred_check_branch
          %618 = sbr.rel (%p616) target = $region92
        $region91: #{tcn_forward.1} parent=87 // pred_region
          %619 = dma.done [#allocation5], 3072
        $region92: #{tcn_forward.1} parent=87 // pred_fallthru
          _
        // Predicated region
        $region93: #{tcn_forward.1} parent=87 // pred_check
          %p620 = pneg %p119
        $region94: #{tcn_forward.1} parent=87 // pred_check_branch
          %622 = sbr.rel (%p620) target = $region96
        $region95: #{tcn_forward.1} parent=87 // pred_region
          %623 = dma.done [#allocation7], 3072
        $region96: #{tcn_forward.1} parent=87 // pred_fallthru
          _
        // Predicated region
        $region97: #{tcn_forward.1} parent=87 // pred_check
          %p624 = pneg %p140
        $region98: #{tcn_forward.1} parent=87 // pred_check_branch
          %626 = sbr.rel (%p624) target = $region100
        $region99: #{tcn_forward.1} parent=87 // pred_region
          %627 = dma.done [#allocation7], 16
        $region100: #{tcn_forward.1} parent=87 // pred_fallthru
          _
        // Predicated region
        $region101: #{tcn_forward.1} parent=87 // pred_check
          %p628 = pneg %p182
        $region102: #{tcn_forward.1} parent=87 // pred_check_branch
          %630 = sbr.rel (%p628) target = $region104
        $region103: #{tcn_forward.1} parent=87 // pred_region
          %631 = dma.done [#allocation10], 16
        $region104: #{tcn_forward.1} parent=87 // pred_fallthru
          _
        // Predicated region
        $region105: #{tcn_forward.1} parent=87 // pred_check
          %p632 = pneg %p203
        $region106: #{tcn_forward.1} parent=87 // pred_check_branch
          %634 = sbr.rel (%p632) target = $region108
        $region107: #{tcn_forward.1} parent=87 // pred_region
          %635 = dma.done [#allocation10], 3072
        $region108: #{tcn_forward.1} parent=87 // pred_fallthru
          _
        // Predicated region
        $region109: #{tcn_forward.1} parent=87 // pred_check
          %p636 = pneg %p224
        $region110: #{tcn_forward.1} parent=87 // pred_check_branch
          %638 = sbr.rel (%p636) target = $region112
        $region111: #{tcn_forward.1} parent=87 // pred_region
          %639 = dma.done [#allocation13], 16
        $region112: #{tcn_forward.1} parent=87 // pred_fallthru
          _
        // Predicated region
        $region113: #{tcn_forward.1} parent=87 // pred_check
          %p640 = pneg %p245
        $region114: #{tcn_forward.1} parent=87 // pred_check_branch
          %642 = sbr.rel (%p640) target = $region116
        $region115: #{tcn_forward.1} parent=87 // pred_region
          %643 = dma.done [#allocation13], 3072
        $region116: #{tcn_forward.1} parent=87 // pred_fallthru
          _
        // Predicated region
        $region117: #{tcn_forward.1} parent=87 // pred_check
          %p644 = pneg %p266
        $region118: #{tcn_forward.1} parent=87 // pred_check_branch
          %646 = sbr.rel (%p644) target = $region120
        $region119: #{tcn_forward.1} parent=87 // pred_region
          %647 = dma.done [#allocation16], 16
        $region120: #{tcn_forward.1} parent=87 // pred_fallthru
          _
        // Predicated region
        $region121: #{tcn_forward.1} parent=87 // pred_check
          %p648 = pneg %p287
        $region122: #{tcn_forward.1} parent=87 // pred_check_branch
          %650 = sbr.rel (%p648) target = $region124
        $region123: #{tcn_forward.1} parent=87 // pred_region
          %651 = dma.done [#allocation16], 3072
        $region124: #{tcn_forward.1} parent=87 // pred_fallthru
          _
        // Predicated region
        $region125: #{tcn_forward.1} parent=87 // pred_check
          %p652 = pneg %p308
        $region126: #{tcn_forward.1} parent=87 // pred_check_branch
          %654 = sbr.rel (%p652) target = $region128
        $region127: #{tcn_forward.1} parent=87 // pred_region
          %655 = dma.done [#allocation19], 16
        $region128: #{tcn_forward.1} parent=87 // pred_fallthru
          _
        // Predicated region
        $region129: #{tcn_forward.1} parent=87 // pred_check
          %p656 = pneg %p329
        $region130: #{tcn_forward.1} parent=87 // pred_check_branch
          %658 = sbr.rel (%p656) target = $region132
        $region131: #{tcn_forward.1} parent=87 // pred_region
          %659 = dma.done [#allocation19], 3072
        $region132: #{tcn_forward.1} parent=87 // pred_fallthru
          _
        // Predicated region
        $region133: #{tcn_forward.1} parent=87 // pred_check
          %p660 = pneg %p350
        $region134: #{tcn_forward.1} parent=87 // pred_check_branch
          %662 = sbr.rel (%p660) target = $region136
        $region135: #{tcn_forward.1} parent=87 // pred_region
          %663 = dma.done [#allocation22], 16
        $region136: #{tcn_forward.1} parent=87 // pred_fallthru
          _
        // Predicated region
        $region137: #{tcn_forward.1} parent=87 // pred_check
          %p664 = pneg %p392
        $region138: #{tcn_forward.1} parent=87 // pred_check_branch
          %666 = sbr.rel (%p664) target = $region140
        $region139: #{tcn_forward.1} parent=87 // pred_region
          %667 = dma.done [#allocation22], 16
        $region140: #{tcn_forward.1} parent=87 // pred_fallthru
          _
        %p668 = scmp.lt.s32.totalorder %s35, 1
        %s669 = scalar_select %p668, %s35, 1
        %s670 = smul.addr %s669, 2
        %s671 = smul.addr %s670, 4
        %s672 = scalar_lea.vmem %s0, %s671
        %p673 = pneg %p56
        %p674 = pneg %p53
        %p675 = pneg %p77
        %p676 = pneg %p74
        %p677 = pneg %p98
        %p678 = pneg %p95
        %p679 = pneg %p119
        %p680 = pneg %p116
        %p681 = pneg %p140
        %p682 = pneg %p137
        %p683 = pneg %p161
        %p684 = pneg %p158
        %p685 = pneg %p182
        %p686 = pneg %p179
        %p687 = pneg %p203
        %p688 = pneg %p200
        %p689 = pneg %p224
        %p690 = pneg %p221
        %p691 = pneg %p245
        %p692 = pneg %p242
        %p693 = pneg %p266
        %p694 = pneg %p263
        %p695 = pneg %p287
        %p696 = pneg %p284
        %p697 = pneg %p308
        %p698 = pneg %p305
        %p699 = pneg %p329
        %p700 = pneg %p326
        %p701 = pneg %p350
        %p702 = pneg %p347
        %p703 = pneg %p371
        %p704 = pneg %p368
        %p705 = pneg %p392
        %p706 = pneg %p389
        %p707 = pneg %p418
        %p708 = pneg %p415
        %p709 = scmp.lt.s32.totalorder %s35, 1
        %s710 = scalar_select %p709, %s35, 1
        %s711 = smul.addr %s710, 2
        %s712 = smul.addr %s711, 4
        %s713 = scalar_lea.vmem %s17, %s712
        %p714 = scmp.lt.s32.totalorder %s35, 1
        %s715 = scalar_select %p714, %s35, 1
        %s716 = smul.addr %s715, 2
        %s717 = smul.addr %s716, 4
        %s718 = scalar_lea.vmem %s0, %s717
        %p719 = scmp.lt.s32.totalorder %s35, 1
        %s720 = scalar_select %p719, %s35, 1
        %s721 = smul.addr %s720, 2
        %s722 = smul.addr %s721, 4
        %s723 = scalar_lea.vmem %s17, %s722
        %725 = vst [vmem:[#allocation2] sm:$0xf] 0
        %726 = vst [vmem:[#allocation3] sm:$0xf] 0
        %v727 = vld [vmem:[%s718] sm:$0xf]
        %v728 = vld [vmem:[%s718 + $0x4] sm:$0xf]
        %729 = vst [vmem:[#allocation2 + $0x4] sm:$0xf] %v727
        %730 = vst [vmem:[#allocation2 + $0x8] sm:$0xf] %v728
        %v731 = vld [vmem:[#allocation2] sm:$0x8]
        %v732 = vld [vmem:[#allocation2 + $0x4] sm:$0xf]
        %v733 = vld [vmem:[#allocation2 + $0x8] sm:$0x7]
        %v734 = vld [vmem:[#allocation2 + $0x8] sm:$0xf]
        %v738 = vunpack.c.l.b16 %v731
        %v739 = vunpack.c.l.b16 %v732
        %v740 = vunpack.c.l.b16 %v733
        %v741 = vpack.c.b16 %v739, %v738
        %v742 = vpack.c.b16 %v740, %v740
        %v744 = vunpack.c.l.b16 %v734
        %v745 = vpack.c.b16 %v744, %v744
        %vm746 = vsmask.f32 7424
        %v748 = vshrl.u32 %v741, 16
        %v750 = vshll.u32 %v741, 16
        %v752 = vrot.slane %v750, 1
        %v753 = vor.u32 %v748, %v752
        %v755 = vshll.u32 %v745, 16
        %v757 = vrot.slane %v755, 1
        %v758 = vsel %vm746, %v753, %v757
        %v759 = vshrl.u32 %v745, 16
        %v761 = vor.u32 %v759, %v757
        %v762 = vpack.c.b16 %v744, %v739
        %v763 = vrot.slane %v762, 5
        %v764 = vld [vmem:[#allocation4] sm:$0xf]
        %v765 = vld [vmem:[#allocation4 + $0x4] sm:$0xf]
        %v766 = vld [vmem:[#allocation4 + $0x8] sm:$0xf]
        %v767 = vld [vmem:[#allocation4 + $0xc] sm:$0xf]
        %v768 = vld [vmem:[#allocation4 + $0x10] sm:$0xf]
        %v769 = vld [vmem:[#allocation4 + $0x14] sm:$0xf]
        %v770 = vld [vmem:[#allocation4 + $0x18] sm:$0xf]
        %v771 = vld [vmem:[#allocation4 + $0x1c] sm:$0xf]
        %v772 = vld [vmem:[#allocation4 + $0x20] sm:$0xf]
        %v773 = vld [vmem:[#allocation4 + $0x24] sm:$0xf]
        %v774 = vld [vmem:[#allocation4 + $0x28] sm:$0xf]
        %v775 = vld [vmem:[#allocation4 + $0x2c] sm:$0xf]
        %v776 = vld [vmem:[#allocation4 + $0x30] sm:$0xf]
        %v777 = vld [vmem:[#allocation4 + $0x34] sm:$0xf]
        %v778 = vld [vmem:[#allocation4 + $0x38] sm:$0xf]
        %v779 = vld [vmem:[#allocation4 + $0x3c] sm:$0xf]
        %v780 = vld [vmem:[#allocation4 + $0x40] sm:$0xf]
        %v781 = vld [vmem:[#allocation4 + $0x44] sm:$0xf]
        %v782 = vld [vmem:[#allocation4 + $0x48] sm:$0xf]
        %v783 = vld [vmem:[#allocation4 + $0x4c] sm:$0xf]
        %v784 = vld [vmem:[#allocation4 + $0x50] sm:$0xf]
        %v785 = vld [vmem:[#allocation4 + $0x54] sm:$0xf]
        %v786 = vld [vmem:[#allocation4 + $0x58] sm:$0xf]
        %v787 = vld [vmem:[#allocation4 + $0x5c] sm:$0xf]
        %v788 = vld [vmem:[#allocation4 + $0x60] sm:$0xf]
        %v789 = vld [vmem:[#allocation4 + $0x64] sm:$0xf]
        %v790 = vld [vmem:[#allocation4 + $0x68] sm:$0xf]
        %v791 = vld [vmem:[#allocation4 + $0x6c] sm:$0xf]
        %v792 = vld [vmem:[#allocation4 + $0x70] sm:$0xf]
        %v793 = vld [vmem:[#allocation4 + $0x74] sm:$0xf]
        %v794 = vld [vmem:[#allocation4 + $0x78] sm:$0xf]
        %v795 = vld [vmem:[#allocation4 + $0x7c] sm:$0xf]
        %v796 = vld [vmem:[#allocation4 + $0x80] sm:$0xf]
        %v797 = vld [vmem:[#allocation4 + $0x84] sm:$0xf]
        %v798 = vld [vmem:[#allocation4 + $0x88] sm:$0xf]
        %v799 = vld [vmem:[#allocation4 + $0x8c] sm:$0xf]
        %v800 = vld [vmem:[#allocation4 + $0x90] sm:$0xf]
        %v801 = vld [vmem:[#allocation4 + $0x94] sm:$0xf]
        %v802 = vld [vmem:[#allocation4 + $0x98] sm:$0xf]
        %v803 = vld [vmem:[#allocation4 + $0x9c] sm:$0xf]
        %v804 = vld [vmem:[#allocation4 + $0xa0] sm:$0xf]
        %v805 = vld [vmem:[#allocation4 + $0xa4] sm:$0xf]
        %v806 = vld [vmem:[#allocation4 + $0xa8] sm:$0xf]
        %v807 = vld [vmem:[#allocation4 + $0xac] sm:$0xf]
        %v808 = vld [vmem:[#allocation4 + $0xb0] sm:$0xf]
        %v809 = vld [vmem:[#allocation4 + $0xb4] sm:$0xf]
        %v810 = vld [vmem:[#allocation4 + $0xb8] sm:$0xf]
        %v811 = vld [vmem:[#allocation4 + $0xbc] sm:$0xf]
        %v812 = vld [vmem:[%s2] sm:$0x1]
        %v814 = vlaneseq
        %v815 = vshrl.u32 %v814, 7
        %v816 = vsub.s32 0, %v815
        %v817 = vrot.slane %v812, %v816
        %vm819 = vcmask 1044480
        %v820 = vrot.slane %v741, 3
        %v821 = vrot.slane %v742, 3
        %v822 = vsel %vm819, %v820, %v821
        %v823 = vrot.slane %v758, 3
        %v824 = vrot.slane %v761, 3
        %v825 = vsel %vm819, %v823, %v824
        %v826 = vrot.slane %v763, 3
        %v827 = vsel %vm819, %v826, %v826
        %v879 = vunpack.c.l.b16 %v764
        %v880 = vunpack.c.l.b16 %v765
        %v881 = vunpack.c.l.b16 %v766
        %v882 = vunpack.c.l.b16 %v767
        %v883 = vunpack.c.l.b16 %v768
        %v884 = vunpack.c.l.b16 %v769
        %v885 = vunpack.c.l.b16 %v770
        %v886 = vunpack.c.l.b16 %v771
        %v887 = vunpack.c.l.b16 %v772
        %v888 = vunpack.c.l.b16 %v773
        %v889 = vunpack.c.l.b16 %v774
        %v890 = vunpack.c.l.b16 %v775
        %v891 = vunpack.c.l.b16 %v776
        %v892 = vunpack.c.l.b16 %v777
        %v893 = vunpack.c.l.b16 %v778
        %v894 = vunpack.c.l.b16 %v779
        %v895 = vunpack.c.l.b16 %v780
        %v896 = vunpack.c.l.b16 %v781
        %v897 = vunpack.c.l.b16 %v782
        %v898 = vunpack.c.l.b16 %v783
        %v899 = vunpack.c.l.b16 %v784
        %v900 = vunpack.c.l.b16 %v785
        %v901 = vunpack.c.l.b16 %v786
        %v902 = vunpack.c.l.b16 %v787
        %v903 = vunpack.c.l.b16 %v788
        %v904 = vunpack.c.l.b16 %v789
        %v905 = vunpack.c.l.b16 %v790
        %v906 = vunpack.c.l.b16 %v791
        %v907 = vunpack.c.l.b16 %v792
        %v908 = vunpack.c.l.b16 %v793
        %v909 = vunpack.c.l.b16 %v794
        %v910 = vunpack.c.l.b16 %v795
        %v911 = vunpack.c.l.b16 %v796
        %v912 = vunpack.c.l.b16 %v797
        %v913 = vunpack.c.l.b16 %v798
        %v914 = vunpack.c.l.b16 %v799
        %v915 = vunpack.c.l.b16 %v800
        %v916 = vunpack.c.l.b16 %v801
        %v917 = vunpack.c.l.b16 %v802
        %v918 = vunpack.c.l.b16 %v803
        %v919 = vunpack.c.l.b16 %v804
        %v920 = vunpack.c.l.b16 %v805
        %v921 = vunpack.c.l.b16 %v806
        %v922 = vunpack.c.l.b16 %v807
        %v923 = vunpack.c.l.b16 %v808
        %v924 = vunpack.c.l.b16 %v809
        %v925 = vunpack.c.l.b16 %v810
        %v926 = vunpack.c.l.b16 %v811
        %v927 = vpack.c.b16 %v880, %v879
        %v928 = vpack.c.b16 %v882, %v881
        %v929 = vpack.c.b16 %v884, %v883
        %v930 = vpack.c.b16 %v886, %v885
        %v931 = vpack.c.b16 %v888, %v887
        %v932 = vpack.c.b16 %v890, %v889
        %v933 = vpack.c.b16 %v892, %v891
        %v934 = vpack.c.b16 %v894, %v893
        %v935 = vpack.c.b16 %v896, %v895
        %v936 = vpack.c.b16 %v898, %v897
        %v937 = vpack.c.b16 %v900, %v899
        %v938 = vpack.c.b16 %v902, %v901
        %v939 = vpack.c.b16 %v904, %v903
        %v940 = vpack.c.b16 %v906, %v905
        %v941 = vpack.c.b16 %v908, %v907
        %v942 = vpack.c.b16 %v910, %v909
        %v943 = vpack.c.b16 %v912, %v911
        %v944 = vpack.c.b16 %v914, %v913
        %v945 = vpack.c.b16 %v916, %v915
        %v946 = vpack.c.b16 %v918, %v917
        %v947 = vpack.c.b16 %v920, %v919
        %v948 = vpack.c.b16 %v922, %v921
        %v949 = vpack.c.b16 %v924, %v923
        %v950 = vpack.c.b16 %v926, %v925
        %975 = vmatprep.subr.bf16.mxu0 0
        %976 = vmatpush1.bf16.msra.mxu0 %v927
        %977 = vmatprep.subr.bf16.mxu0 0
        %978 = vmatpush1.bf16.msra.mxu0 %v928
        %979 = vmatprep.subr.bf16.mxu0 0
        %980 = vmatpush1.bf16.msra.mxu0 %v929
        %981 = vmatprep.subr.bf16.mxu0 0
        %982 = vmatpush1.bf16.msra.mxu0 %v930
        %983 = vmatprep.subr.bf16.mxu0 0
        %984 = vmatpush1.bf16.msra.mxu0 %v931
        %985 = vmatprep.subr.bf16.mxu0 0
        %986 = vmatpush1.bf16.msra.mxu0 %v932
        %987 = vmatprep.subr.bf16.mxu0 0
        %988 = vmatpush1.bf16.msra.mxu0 %v933
        %989 = vmatprep.subr.bf16.mxu0 0
        %990 = vmatpush1.bf16.msra.mxu0 %v934
        %991 = vmatprep.subr.bf16.mxu0 0
        %992 = vmatpush1.bf16.msra.mxu0 %v935
        %993 = vmatprep.subr.bf16.mxu0 0
        %994 = vmatpush1.bf16.msra.mxu0 %v936
        %995 = vmatprep.subr.bf16.mxu0 0
        %996 = vmatpush1.bf16.msra.mxu0 %v937
        %997 = vmatprep.subr.bf16.mxu0 0
        %998 = vmatpush1.bf16.msra.mxu0 %v938
        %999 = vmatprep.subr.bf16.mxu0 0
        %1000 = vmatpush1.bf16.msra.mxu0 %v939
        %1001 = vmatprep.subr.bf16.mxu0 0
        %1002 = vmatpush1.bf16.msra.mxu0 %v940
        %1003 = vmatprep.subr.bf16.mxu0 0
        %1004 = vmatpush1.bf16.msra.mxu0 %v941
        %1005 = vmatprep.subr.bf16.mxu0 0
        %1006 = vmatpush1.bf16.msra.mxu0 %v942
        %1007 = vmatprep.mubr.bf16.mxu0 %v825
        %1008 = vmatmul.mubr.bf16.gmra.mrb[0].mxu0 %v822
        %v1009 = vpop.f32.mrb[0].mxu0
        %v1010 = vadd.f32 %v817, %v1009
        %v1011 = vpop.f32.mrb[0].mxu0
        %v1012 = vpop.f32.mrb[0].mxu0
        %v1013 = vadd.f32 %v817, %v1012
        %v1014 = vpop.f32.mrb[0].mxu0
        %1015 = vdwg.mxu0
        %1016 = vmatprep.subr.bf16.mxu0 0
        %1017 = vmatpush1.bf16.msra.mxu0 %v943
        %1018 = vmatprep.subr.bf16.mxu0 0
        %1019 = vmatpush1.bf16.msra.mxu0 %v944
        %1020 = vmatprep.subr.bf16.mxu0 0
        %1021 = vmatpush1.bf16.msra.mxu0 %v945
        %1022 = vmatprep.subr.bf16.mxu0 0
        %1023 = vmatpush1.bf16.msra.mxu0 %v946
        %1024 = vmatprep.subr.bf16.mxu0 0
        %1025 = vmatpush1.bf16.msra.mxu0 %v947
        %1026 = vmatprep.subr.bf16.mxu0 0
        %1027 = vmatpush1.bf16.msra.mxu0 %v948
        %1028 = vmatprep.subr.bf16.mxu0 0
        %1029 = vmatpush1.bf16.msra.mxu0 %v949
        %1030 = vmatprep.subr.bf16.mxu0 0
        %1031 = vmatpush1.bf16.msra.mxu0 %v950
        %1032 = vmatprep.subr.bf16.mxu0 0
        %1033 = vmatpush1.bf16.msra.mxu0 0
        %1034 = vmatprep.subr.bf16.mxu0 0
        %1035 = vmatpush1.bf16.msra.mxu0 0
        %1036 = vmatprep.subr.bf16.mxu0 0
        %1037 = vmatpush1.bf16.msra.mxu0 0
        %1038 = vmatprep.subr.bf16.mxu0 0
        %1039 = vmatpush1.bf16.msra.mxu0 0
        %1040 = vmatprep.subr.bf16.mxu0 0
        %1041 = vmatpush1.bf16.msra.mxu0 0
        %1042 = vmatprep.subr.bf16.mxu0 0
        %1043 = vmatpush1.bf16.msra.mxu0 0
        %1044 = vmatprep.subr.bf16.mxu0 0
        %1045 = vmatpush1.bf16.msra.mxu0 0
        %1046 = vmatprep.subr.bf16.mxu0 0
        %1047 = vmatpush1.bf16.msra.mxu0 0
        %1048 = vmatprep.mubr.bf16.mxu0 0
        %1049 = vmatmul.mubr.bf16.gmra.mrb[0].mxu0 %v827
        %v1050 = vpop.f32.mrb[0].mxu0
        %v1051 = vadd.f32 %v1010, %v1050
        %v1052 = vpop.f32.mrb[0].mxu0
        %v1053 = vpop.f32.mrb[0].mxu0
        %v1054 = vadd.f32 %v1013, %v1053
        %v1055 = vpop.f32.mrb[0].mxu0
        %1056 = vdwg.mxu0
        %v1057 = vmax.f32 %v1051, 0.0
        %v1058 = vmax.f32 %v1054, 0.0
        %v1059 = vpack.c.bf16 %v1058, %v1057
        %v1061 = vunpack.c.l.b16 %v1059
        %v1062 = vunpack.c.h.b16 %v1059
        %v1063 = vpack.c.b16 %v1061, %v1061
        %v1064 = vpack.c.b16 %v1062, %v1062
        %1067 = vst [vmem:[#allocation3 + $0x4] sm:$0xf] %v1063
        %1068 = vst [vmem:[#allocation3 + $0x8] sm:$0xf] %v1064
        %v1069 = vld [vmem:[#allocation3] sm:$0x8]
        %v1070 = vld [vmem:[#allocation3 + $0x4] sm:$0xf]
        %v1071 = vld [vmem:[#allocation3 + $0x8] sm:$0x7]
        %v1072 = vld [vmem:[#allocation3 + $0x8] sm:$0xf]
        %v1076 = vunpack.c.l.b16 %v1069
        %v1077 = vunpack.c.l.b16 %v1070
        %v1078 = vunpack.c.l.b16 %v1071
        %v1079 = vpack.c.b16 %v1077, %v1076
        %v1080 = vpack.c.b16 %v1078, %v1078
        %v1082 = vunpack.c.l.b16 %v1072
        %v1083 = vpack.c.b16 %v1082, %v1082
        %v1085 = vshrl.u32 %v1079, 16
        %v1087 = vshll.u32 %v1079, 16
        %v1089 = vrot.slane %v1087, 1
        %v1090 = vor.u32 %v1085, %v1089
        %v1092 = vshll.u32 %v1083, 16
        %v1094 = vrot.slane %v1092, 1
        %v1095 = vsel %vm746, %v1090, %v1094
        %v1096 = vshrl.u32 %v1083, 16
        %v1098 = vor.u32 %v1096, %v1094
        %v1099 = vpack.c.b16 %v1082, %v1077
        %v1100 = vrot.slane %v1099, 5
        %v1101 = vld [vmem:[#allocation6] sm:$0xf]
        %v1102 = vld [vmem:[#allocation6 + $0x4] sm:$0xf]
        %v1103 = vld [vmem:[#allocation6 + $0x8] sm:$0xf]
        %v1104 = vld [vmem:[#allocation6 + $0xc] sm:$0xf]
        %v1105 = vld [vmem:[#allocation6 + $0x10] sm:$0xf]
        %v1106 = vld [vmem:[#allocation6 + $0x14] sm:$0xf]
        %v1107 = vld [vmem:[#allocation6 + $0x18] sm:$0xf]
        %v1108 = vld [vmem:[#allocation6 + $0x1c] sm:$0xf]
        %v1109 = vld [vmem:[#allocation6 + $0x20] sm:$0xf]
        %v1110 = vld [vmem:[#allocation6 + $0x24] sm:$0xf]
        %v1111 = vld [vmem:[#allocation6 + $0x28] sm:$0xf]
        %v1112 = vld [vmem:[#allocation6 + $0x2c] sm:$0xf]
        %v1113 = vld [vmem:[#allocation6 + $0x30] sm:$0xf]
        %v1114 = vld [vmem:[#allocation6 + $0x34] sm:$0xf]
        %v1115 = vld [vmem:[#allocation6 + $0x38] sm:$0xf]
        %v1116 = vld [vmem:[#allocation6 + $0x3c] sm:$0xf]
        %v1117 = vld [vmem:[#allocation6 + $0x40] sm:$0xf]
        %v1118 = vld [vmem:[#allocation6 + $0x44] sm:$0xf]
        %v1119 = vld [vmem:[#allocation6 + $0x48] sm:$0xf]
        %v1120 = vld [vmem:[#allocation6 + $0x4c] sm:$0xf]
        %v1121 = vld [vmem:[#allocation6 + $0x50] sm:$0xf]
        %v1122 = vld [vmem:[#allocation6 + $0x54] sm:$0xf]
        %v1123 = vld [vmem:[#allocation6 + $0x58] sm:$0xf]
        %v1124 = vld [vmem:[#allocation6 + $0x5c] sm:$0xf]
        %v1125 = vld [vmem:[#allocation6 + $0x60] sm:$0xf]
        %v1126 = vld [vmem:[#allocation6 + $0x64] sm:$0xf]
        %v1127 = vld [vmem:[#allocation6 + $0x68] sm:$0xf]
        %v1128 = vld [vmem:[#allocation6 + $0x6c] sm:$0xf]
        %v1129 = vld [vmem:[#allocation6 + $0x70] sm:$0xf]
        %v1130 = vld [vmem:[#allocation6 + $0x74] sm:$0xf]
        %v1131 = vld [vmem:[#allocation6 + $0x78] sm:$0xf]
        %v1132 = vld [vmem:[#allocation6 + $0x7c] sm:$0xf]
        %v1133 = vld [vmem:[#allocation6 + $0x80] sm:$0xf]
        %v1134 = vld [vmem:[#allocation6 + $0x84] sm:$0xf]
        %v1135 = vld [vmem:[#allocation6 + $0x88] sm:$0xf]
        %v1136 = vld [vmem:[#allocation6 + $0x8c] sm:$0xf]
        %v1137 = vld [vmem:[#allocation6 + $0x90] sm:$0xf]
        %v1138 = vld [vmem:[#allocation6 + $0x94] sm:$0xf]
        %v1139 = vld [vmem:[#allocation6 + $0x98] sm:$0xf]
        %v1140 = vld [vmem:[#allocation6 + $0x9c] sm:$0xf]
        %v1141 = vld [vmem:[#allocation6 + $0xa0] sm:$0xf]
        %v1142 = vld [vmem:[#allocation6 + $0xa4] sm:$0xf]
        %v1143 = vld [vmem:[#allocation6 + $0xa8] sm:$0xf]
        %v1144 = vld [vmem:[#allocation6 + $0xac] sm:$0xf]
        %v1145 = vld [vmem:[#allocation6 + $0xb0] sm:$0xf]
        %v1146 = vld [vmem:[#allocation6 + $0xb4] sm:$0xf]
        %v1147 = vld [vmem:[#allocation6 + $0xb8] sm:$0xf]
        %v1148 = vld [vmem:[#allocation6 + $0xbc] sm:$0xf]
        %v1149 = vld [vmem:[#allocation8] sm:$0x1]
        %v1151 = vlaneseq
        %v1152 = vshrl.u32 %v1151, 7
        %v1153 = vsub.s32 0, %v1152
        %v1154 = vrot.slane %v1149, %v1153
        %v1156 = vrot.slane %v1079, 3
        %v1157 = vrot.slane %v1080, 3
        %v1158 = vsel %vm819, %v1156, %v1157
        %v1159 = vrot.slane %v1095, 3
        %v1160 = vrot.slane %v1098, 3
        %v1161 = vsel %vm819, %v1159, %v1160
        %v1162 = vrot.slane %v1100, 3
        %v1163 = vsel %vm819, %v1162, %v1162
        %v1215 = vunpack.c.l.b16 %v1101
        %v1216 = vunpack.c.l.b16 %v1102
        %v1217 = vunpack.c.l.b16 %v1103
        %v1218 = vunpack.c.l.b16 %v1104
        %v1219 = vunpack.c.l.b16 %v1105
        %v1220 = vunpack.c.l.b16 %v1106
        %v1221 = vunpack.c.l.b16 %v1107
        %v1222 = vunpack.c.l.b16 %v1108
        %v1223 = vunpack.c.l.b16 %v1109
        %v1224 = vunpack.c.l.b16 %v1110
        %v1225 = vunpack.c.l.b16 %v1111
        %v1226 = vunpack.c.l.b16 %v1112
        %v1227 = vunpack.c.l.b16 %v1113
        %v1228 = vunpack.c.l.b16 %v1114
        %v1229 = vunpack.c.l.b16 %v1115
        %v1230 = vunpack.c.l.b16 %v1116
        %v1231 = vunpack.c.l.b16 %v1117
        %v1232 = vunpack.c.l.b16 %v1118
        %v1233 = vunpack.c.l.b16 %v1119
        %v1234 = vunpack.c.l.b16 %v1120
        %v1235 = vunpack.c.l.b16 %v1121
        %v1236 = vunpack.c.l.b16 %v1122
        %v1237 = vunpack.c.l.b16 %v1123
        %v1238 = vunpack.c.l.b16 %v1124
        %v1239 = vunpack.c.l.b16 %v1125
        %v1240 = vunpack.c.l.b16 %v1126
        %v1241 = vunpack.c.l.b16 %v1127
        %v1242 = vunpack.c.l.b16 %v1128
        %v1243 = vunpack.c.l.b16 %v1129
        %v1244 = vunpack.c.l.b16 %v1130
        %v1245 = vunpack.c.l.b16 %v1131
        %v1246 = vunpack.c.l.b16 %v1132
        %v1247 = vunpack.c.l.b16 %v1133
        %v1248 = vunpack.c.l.b16 %v1134
        %v1249 = vunpack.c.l.b16 %v1135
        %v1250 = vunpack.c.l.b16 %v1136
        %v1251 = vunpack.c.l.b16 %v1137
        %v1252 = vunpack.c.l.b16 %v1138
        %v1253 = vunpack.c.l.b16 %v1139
        %v1254 = vunpack.c.l.b16 %v1140
        %v1255 = vunpack.c.l.b16 %v1141
        %v1256 = vunpack.c.l.b16 %v1142
        %v1257 = vunpack.c.l.b16 %v1143
        %v1258 = vunpack.c.l.b16 %v1144
        %v1259 = vunpack.c.l.b16 %v1145
        %v1260 = vunpack.c.l.b16 %v1146
        %v1261 = vunpack.c.l.b16 %v1147
        %v1262 = vunpack.c.l.b16 %v1148
        %v1263 = vpack.c.b16 %v1216, %v1215
        %v1264 = vpack.c.b16 %v1218, %v1217
        %v1265 = vpack.c.b16 %v1220, %v1219
        %v1266 = vpack.c.b16 %v1222, %v1221
        %v1267 = vpack.c.b16 %v1224, %v1223
        %v1268 = vpack.c.b16 %v1226, %v1225
        %v1269 = vpack.c.b16 %v1228, %v1227
        %v1270 = vpack.c.b16 %v1230, %v1229
        %v1271 = vpack.c.b16 %v1232, %v1231
        %v1272 = vpack.c.b16 %v1234, %v1233
        %v1273 = vpack.c.b16 %v1236, %v1235
        %v1274 = vpack.c.b16 %v1238, %v1237
        %v1275 = vpack.c.b16 %v1240, %v1239
        %v1276 = vpack.c.b16 %v1242, %v1241
        %v1277 = vpack.c.b16 %v1244, %v1243
        %v1278 = vpack.c.b16 %v1246, %v1245
        %v1279 = vpack.c.b16 %v1248, %v1247
        %v1280 = vpack.c.b16 %v1250, %v1249
        %v1281 = vpack.c.b16 %v1252, %v1251
        %v1282 = vpack.c.b16 %v1254, %v1253
        %v1283 = vpack.c.b16 %v1256, %v1255
        %v1284 = vpack.c.b16 %v1258, %v1257
        %v1285 = vpack.c.b16 %v1260, %v1259
        %v1286 = vpack.c.b16 %v1262, %v1261
        %1311 = vmatprep.subr.bf16.mxu0 0
        %1312 = vmatpush1.bf16.msra.mxu0 %v1263
        %1313 = vmatprep.subr.bf16.mxu0 0
        %1314 = vmatpush1.bf16.msra.mxu0 %v1264
        %1315 = vmatprep.subr.bf16.mxu0 0
        %1316 = vmatpush1.bf16.msra.mxu0 %v1265
        %1317 = vmatprep.subr.bf16.mxu0 0
        %1318 = vmatpush1.bf16.msra.mxu0 %v1266
        %1319 = vmatprep.subr.bf16.mxu0 0
        %1320 = vmatpush1.bf16.msra.mxu0 %v1267
        %1321 = vmatprep.subr.bf16.mxu0 0
        %1322 = vmatpush1.bf16.msra.mxu0 %v1268
        %1323 = vmatprep.subr.bf16.mxu0 0
        %1324 = vmatpush1.bf16.msra.mxu0 %v1269
        %1325 = vmatprep.subr.bf16.mxu0 0
        %1326 = vmatpush1.bf16.msra.mxu0 %v1270
        %1327 = vmatprep.subr.bf16.mxu0 0
        %1328 = vmatpush1.bf16.msra.mxu0 %v1271
        %1329 = vmatprep.subr.bf16.mxu0 0
        %1330 = vmatpush1.bf16.msra.mxu0 %v1272
        %1331 = vmatprep.subr.bf16.mxu0 0
        %1332 = vmatpush1.bf16.msra.mxu0 %v1273
        %1333 = vmatprep.subr.bf16.mxu0 0
        %1334 = vmatpush1.bf16.msra.mxu0 %v1274
        %1335 = vmatprep.subr.bf16.mxu0 0
        %1336 = vmatpush1.bf16.msra.mxu0 %v1275
        %1337 = vmatprep.subr.bf16.mxu0 0
        %1338 = vmatpush1.bf16.msra.mxu0 %v1276
        %1339 = vmatprep.subr.bf16.mxu0 0
        %1340 = vmatpush1.bf16.msra.mxu0 %v1277
        %1341 = vmatprep.subr.bf16.mxu0 0
        %1342 = vmatpush1.bf16.msra.mxu0 %v1278
        %1343 = vmatprep.mubr.bf16.mxu0 %v1161
        %1344 = vmatmul.mubr.bf16.gmra.mrb[0].mxu0 %v1158
        %v1345 = vpop.f32.mrb[0].mxu0
        %v1346 = vadd.f32 %v1154, %v1345
        %v1347 = vpop.f32.mrb[0].mxu0
        %v1348 = vpop.f32.mrb[0].mxu0
        %v1349 = vadd.f32 %v1154, %v1348
        %v1350 = vpop.f32.mrb[0].mxu0
        %1351 = vdwg.mxu0
        %1352 = vmatprep.subr.bf16.mxu0 0
        %1353 = vmatpush1.bf16.msra.mxu0 %v1279
        %1354 = vmatprep.subr.bf16.mxu0 0
        %1355 = vmatpush1.bf16.msra.mxu0 %v1280
        %1356 = vmatprep.subr.bf16.mxu0 0
        %1357 = vmatpush1.bf16.msra.mxu0 %v1281
        %1358 = vmatprep.subr.bf16.mxu0 0
        %1359 = vmatpush1.bf16.msra.mxu0 %v1282
        %1360 = vmatprep.subr.bf16.mxu0 0
        %1361 = vmatpush1.bf16.msra.mxu0 %v1283
        %1362 = vmatprep.subr.bf16.mxu0 0
        %1363 = vmatpush1.bf16.msra.mxu0 %v1284
        %1364 = vmatprep.subr.bf16.mxu0 0
        %1365 = vmatpush1.bf16.msra.mxu0 %v1285
        %1366 = vmatprep.subr.bf16.mxu0 0
        %1367 = vmatpush1.bf16.msra.mxu0 %v1286
        %1368 = vmatprep.subr.bf16.mxu0 0
        %1369 = vmatpush1.bf16.msra.mxu0 0
        %1370 = vmatprep.subr.bf16.mxu0 0
        %1371 = vmatpush1.bf16.msra.mxu0 0
        %1372 = vmatprep.subr.bf16.mxu0 0
        %1373 = vmatpush1.bf16.msra.mxu0 0
        %1374 = vmatprep.subr.bf16.mxu0 0
        %1375 = vmatpush1.bf16.msra.mxu0 0
        %1376 = vmatprep.subr.bf16.mxu0 0
        %1377 = vmatpush1.bf16.msra.mxu0 0
        %1378 = vmatprep.subr.bf16.mxu0 0
        %1379 = vmatpush1.bf16.msra.mxu0 0
        %1380 = vmatprep.subr.bf16.mxu0 0
        %1381 = vmatpush1.bf16.msra.mxu0 0
        %1382 = vmatprep.subr.bf16.mxu0 0
        %1383 = vmatpush1.bf16.msra.mxu0 0
        %1384 = vmatprep.mubr.bf16.mxu0 0
        %1385 = vmatmul.mubr.bf16.gmra.mrb[0].mxu0 %v1163
        %v1386 = vpop.f32.mrb[0].mxu0
        %v1387 = vadd.f32 %v1346, %v1386
        %v1388 = vpop.f32.mrb[0].mxu0
        %v1389 = vpop.f32.mrb[0].mxu0
        %v1390 = vadd.f32 %v1349, %v1389
        %v1391 = vpop.f32.mrb[0].mxu0
        %1392 = vdwg.mxu0
        %v1393 = vmax.f32 %v1387, 0.0
        %v1394 = vmax.f32 %v1390, 0.0
        %v1395 = vld [vmem:[#allocation2 + $0x4] sm:$0xf]
        %v1396 = vld [vmem:[#allocation2 + $0x8] sm:$0xf]
        %v1397 = vld [vmem:[%s5] sm:$0xf]
        %v1398 = vld [vmem:[%s5 + $0x4] sm:$0xf]
        %v1399 = vld [vmem:[%s5 + $0x8] sm:$0xf]
        %v1400 = vld [vmem:[%s5 + $0xc] sm:$0xf]
        %v1401 = vld [vmem:[%s5 + $0x10] sm:$0xf]
        %v1402 = vld [vmem:[%s5 + $0x14] sm:$0xf]
        %v1403 = vld [vmem:[%s5 + $0x18] sm:$0xf]
        %v1404 = vld [vmem:[%s5 + $0x1c] sm:$0xf]
        %v1405 = vld [vmem:[%s5 + $0x20] sm:$0xf]
        %v1406 = vld [vmem:[%s5 + $0x24] sm:$0xf]
        %v1407 = vld [vmem:[%s5 + $0x28] sm:$0xf]
        %v1408 = vld [vmem:[%s5 + $0x2c] sm:$0xf]
        %v1409 = vld [vmem:[%s5 + $0x30] sm:$0xf]
        %v1410 = vld [vmem:[%s5 + $0x34] sm:$0xf]
        %v1411 = vld [vmem:[%s5 + $0x38] sm:$0xf]
        %v1412 = vld [vmem:[%s5 + $0x3c] sm:$0xf]
        %v1413 = vld [vmem:[#allocation9] sm:$0x1]
        %v1415 = vlaneseq
        %v1416 = vshrl.u32 %v1415, 7
        %v1417 = vsub.s32 0, %v1416
        %v1418 = vrot.slane %v1413, %v1417
        %v1422 = vunpack.c.l.b16 %v1395
        %v1423 = vunpack.c.l.b16 %v1396
        %v1424 = vpack.c.b16 %v1423, %v1422
        %v1442 = vunpack.c.l.b16 %v1397
        %v1443 = vunpack.c.l.b16 %v1398
        %v1444 = vunpack.c.l.b16 %v1399
        %v1445 = vunpack.c.l.b16 %v1400
        %v1446 = vunpack.c.l.b16 %v1401
        %v1447 = vunpack.c.l.b16 %v1402
        %v1448 = vunpack.c.l.b16 %v1403
        %v1449 = vunpack.c.l.b16 %v1404
        %v1450 = vunpack.c.l.b16 %v1405
        %v1451 = vunpack.c.l.b16 %v1406
        %v1452 = vunpack.c.l.b16 %v1407
        %v1453 = vunpack.c.l.b16 %v1408
        %v1454 = vunpack.c.l.b16 %v1409
        %v1455 = vunpack.c.l.b16 %v1410
        %v1456 = vunpack.c.l.b16 %v1411
        %v1457 = vunpack.c.l.b16 %v1412
        %v1458 = vpack.c.b16 %v1443, %v1442
        %v1459 = vpack.c.b16 %v1445, %v1444
        %v1460 = vpack.c.b16 %v1447, %v1446
        %v1461 = vpack.c.b16 %v1449, %v1448
        %v1462 = vpack.c.b16 %v1451, %v1450
        %v1463 = vpack.c.b16 %v1453, %v1452
        %v1464 = vpack.c.b16 %v1455, %v1454
        %v1465 = vpack.c.b16 %v1457, %v1456
        %1474 = vmatprep.subr.bf16.mxu0 0
        %1475 = vmatpush1.bf16.msra.mxu0 %v1458
        %1476 = vmatprep.subr.bf16.mxu0 0
        %1477 = vmatpush1.bf16.msra.mxu0 %v1459
        %1478 = vmatprep.subr.bf16.mxu0 0
        %1479 = vmatpush1.bf16.msra.mxu0 %v1460
        %1480 = vmatprep.subr.bf16.mxu0 0
        %1481 = vmatpush1.bf16.msra.mxu0 %v1461
        %1482 = vmatprep.subr.bf16.mxu0 0
        %1483 = vmatpush1.bf16.msra.mxu0 %v1462
        %1484 = vmatprep.subr.bf16.mxu0 0
        %1485 = vmatpush1.bf16.msra.mxu0 %v1463
        %1486 = vmatprep.subr.bf16.mxu0 0
        %1487 = vmatpush1.bf16.msra.mxu0 %v1464
        %1488 = vmatprep.subr.bf16.mxu0 0
        %1489 = vmatpush1.bf16.msra.mxu0 %v1465
        %1490 = vmatprep.subr.bf16.mxu0 0
        %1491 = vmatpush1.bf16.msra.mxu0 0
        %1492 = vmatprep.subr.bf16.mxu0 0
        %1493 = vmatpush1.bf16.msra.mxu0 0
        %1494 = vmatprep.subr.bf16.mxu0 0
        %1495 = vmatpush1.bf16.msra.mxu0 0
        %1496 = vmatprep.subr.bf16.mxu0 0
        %1497 = vmatpush1.bf16.msra.mxu0 0
        %1498 = vmatprep.subr.bf16.mxu0 0
        %1499 = vmatpush1.bf16.msra.mxu0 0
        %1500 = vmatprep.subr.bf16.mxu0 0
        %1501 = vmatpush1.bf16.msra.mxu0 0
        %1502 = vmatprep.subr.bf16.mxu0 0
        %1503 = vmatpush1.bf16.msra.mxu0 0
        %1504 = vmatprep.subr.bf16.mxu0 0
        %1505 = vmatpush1.bf16.msra.mxu0 0
        %1506 = vmatprep.mubr.bf16.mxu0 0
        %1507 = vmatmul.mubr.bf16.gmra.mrb[0].mxu0 %v1424
        %v1508 = vpop.f32.mrb[0].mxu0
        %v1509 = vadd.f32 %v1418, %v1508
        %v1510 = vpop.f32.mrb[0].mxu0
        %v1511 = vpop.f32.mrb[0].mxu0
        %v1512 = vadd.f32 %v1418, %v1511
        %v1513 = vpop.f32.mrb[0].mxu0
        %1514 = vdwg.mxu0
        %v1515 = vadd.f32 %v1393, %v1509
        %v1516 = vadd.f32 %v1394, %v1512
        %v1517 = vpack.c.bf16 %v1516, %v1515
        %v1519 = vunpack.c.l.b16 %v1517
        %v1520 = vunpack.c.h.b16 %v1517
        %v1521 = vpack.c.b16 %v1519, %v1519
        %v1522 = vpack.c.b16 %v1520, %v1520
        %1525 = vst [vmem:[#allocation2 + $0x4] sm:$0xf] %v1521
        %1526 = vst [vmem:[#allocation2 + $0x8] sm:$0xf] %v1522
        %v1527 = vld [vmem:[#allocation2] sm:$0xc]
        %v1528 = vld [vmem:[#allocation2 + $0x4] sm:$0xf]
        %v1529 = vld [vmem:[#allocation2 + $0x8] sm:$0x3]
        %v1530 = vld [vmem:[#allocation2] sm:$0x8]
        %v1531 = vld [vmem:[#allocation2 + $0x8] sm:$0x7]
        %v1532 = vld [vmem:[#allocation2 + $0x8] sm:$0xf]
        %v1536 = vunpack.c.l.b16 %v1527
        %v1537 = vunpack.c.l.b16 %v1528
        %v1538 = vunpack.c.l.b16 %v1529
        %v1539 = vpack.c.b16 %v1537, %v1536
        %v1540 = vpack.c.b16 %v1538, %v1538
        %v1543 = vunpack.c.l.b16 %v1530
        %v1544 = vunpack.c.l.b16 %v1531
        %v1545 = vpack.c.b16 %v1537, %v1543
        %v1546 = vpack.c.b16 %v1544, %v1544
        %vm1547 = vcmask 1046528
        %v1548 = vrot.slane %v1545, 1
        %v1549 = vrot.slane %v1546, 1
        %v1550 = vsel %vm1547, %v1548, %v1549
        %v1552 = vunpack.c.l.b16 %v1532
        %v1553 = vpack.c.b16 %v1552, %v1537
        %v1554 = vrot.slane %v1553, 6
        %v1555 = vld [vmem:[#allocation11] sm:$0xf]
        %v1556 = vld [vmem:[#allocation11 + $0x4] sm:$0xf]
        %v1557 = vld [vmem:[#allocation11 + $0x8] sm:$0xf]
        %v1558 = vld [vmem:[#allocation11 + $0xc] sm:$0xf]
        %v1559 = vld [vmem:[#allocation11 + $0x10] sm:$0xf]
        %v1560 = vld [vmem:[#allocation11 + $0x14] sm:$0xf]
        %v1561 = vld [vmem:[#allocation11 + $0x18] sm:$0xf]
        %v1562 = vld [vmem:[#allocation11 + $0x1c] sm:$0xf]
        %v1563 = vld [vmem:[#allocation11 + $0x20] sm:$0xf]
        %v1564 = vld [vmem:[#allocation11 + $0x24] sm:$0xf]
        %v1565 = vld [vmem:[#allocation11 + $0x28] sm:$0xf]
        %v1566 = vld [vmem:[#allocation11 + $0x2c] sm:$0xf]
        %v1567 = vld [vmem:[#allocation11 + $0x30] sm:$0xf]
        %v1568 = vld [vmem:[#allocation11 + $0x34] sm:$0xf]
        %v1569 = vld [vmem:[#allocation11 + $0x38] sm:$0xf]
        %v1570 = vld [vmem:[#allocation11 + $0x3c] sm:$0xf]
        %v1571 = vld [vmem:[#allocation11 + $0x40] sm:$0xf]
        %v1572 = vld [vmem:[#allocation11 + $0x44] sm:$0xf]
        %v1573 = vld [vmem:[#allocation11 + $0x48] sm:$0xf]
        %v1574 = vld [vmem:[#allocation11 + $0x4c] sm:$0xf]
        %v1575 = vld [vmem:[#allocation11 + $0x50] sm:$0xf]
        %v1576 = vld [vmem:[#allocation11 + $0x54] sm:$0xf]
        %v1577 = vld [vmem:[#allocation11 + $0x58] sm:$0xf]
        %v1578 = vld [vmem:[#allocation11 + $0x5c] sm:$0xf]
        %v1579 = vld [vmem:[#allocation11 + $0x60] sm:$0xf]
        %v1580 = vld [vmem:[#allocation11 + $0x64] sm:$0xf]
        %v1581 = vld [vmem:[#allocation11 + $0x68] sm:$0xf]
        %v1582 = vld [vmem:[#allocation11 + $0x6c] sm:$0xf]
        %v1583 = vld [vmem:[#allocation11 + $0x70] sm:$0xf]
        %v1584 = vld [vmem:[#allocation11 + $0x74] sm:$0xf]
        %v1585 = vld [vmem:[#allocation11 + $0x78] sm:$0xf]
        %v1586 = vld [vmem:[#allocation11 + $0x7c] sm:$0xf]
        %v1587 = vld [vmem:[#allocation11 + $0x80] sm:$0xf]
        %v1588 = vld [vmem:[#allocation11 + $0x84] sm:$0xf]
        %v1589 = vld [vmem:[#allocation11 + $0x88] sm:$0xf]
        %v1590 = vld [vmem:[#allocation11 + $0x8c] sm:$0xf]
        %v1591 = vld [vmem:[#allocation11 + $0x90] sm:$0xf]
        %v1592 = vld [vmem:[#allocation11 + $0x94] sm:$0xf]
        %v1593 = vld [vmem:[#allocation11 + $0x98] sm:$0xf]
        %v1594 = vld [vmem:[#allocation11 + $0x9c] sm:$0xf]
        %v1595 = vld [vmem:[#allocation11 + $0xa0] sm:$0xf]
        %v1596 = vld [vmem:[#allocation11 + $0xa4] sm:$0xf]
        %v1597 = vld [vmem:[#allocation11 + $0xa8] sm:$0xf]
        %v1598 = vld [vmem:[#allocation11 + $0xac] sm:$0xf]
        %v1599 = vld [vmem:[#allocation11 + $0xb0] sm:$0xf]
        %v1600 = vld [vmem:[#allocation11 + $0xb4] sm:$0xf]
        %v1601 = vld [vmem:[#allocation11 + $0xb8] sm:$0xf]
        %v1602 = vld [vmem:[#allocation11 + $0xbc] sm:$0xf]
        %v1603 = vld [vmem:[#allocation12] sm:$0x1]
        %v1605 = vlaneseq
        %v1606 = vshrl.u32 %v1605, 7
        %v1607 = vsub.s32 0, %v1606
        %v1608 = vrot.slane %v1603, %v1607
        %vm1610 = vcmask 1045504
        %v1611 = vrot.slane %v1539, 2
        %v1612 = vrot.slane %v1540, 2
        %v1613 = vsel %vm1610, %v1611, %v1612
        %v1614 = vrot.slane %v1550, 2
        %v1615 = vrot.slane %v1549, 2
        %v1616 = vsel %vm1610, %v1614, %v1615
        %v1617 = vrot.slane %v1554, 2
        %v1618 = vsel %vm1610, %v1617, %v1617
        %v1670 = vunpack.c.l.b16 %v1555
        %v1671 = vunpack.c.l.b16 %v1556
        %v1672 = vunpack.c.l.b16 %v1557
        %v1673 = vunpack.c.l.b16 %v1558
        %v1674 = vunpack.c.l.b16 %v1559
        %v1675 = vunpack.c.l.b16 %v1560
        %v1676 = vunpack.c.l.b16 %v1561
        %v1677 = vunpack.c.l.b16 %v1562
        %v1678 = vunpack.c.l.b16 %v1563
        %v1679 = vunpack.c.l.b16 %v1564
        %v1680 = vunpack.c.l.b16 %v1565
        %v1681 = vunpack.c.l.b16 %v1566
        %v1682 = vunpack.c.l.b16 %v1567
        %v1683 = vunpack.c.l.b16 %v1568
        %v1684 = vunpack.c.l.b16 %v1569
        %v1685 = vunpack.c.l.b16 %v1570
        %v1686 = vunpack.c.l.b16 %v1571
        %v1687 = vunpack.c.l.b16 %v1572
        %v1688 = vunpack.c.l.b16 %v1573
        %v1689 = vunpack.c.l.b16 %v1574
        %v1690 = vunpack.c.l.b16 %v1575
        %v1691 = vunpack.c.l.b16 %v1576
        %v1692 = vunpack.c.l.b16 %v1577
        %v1693 = vunpack.c.l.b16 %v1578
        %v1694 = vunpack.c.l.b16 %v1579
        %v1695 = vunpack.c.l.b16 %v1580
        %v1696 = vunpack.c.l.b16 %v1581
        %v1697 = vunpack.c.l.b16 %v1582
        %v1698 = vunpack.c.l.b16 %v1583
        %v1699 = vunpack.c.l.b16 %v1584
        %v1700 = vunpack.c.l.b16 %v1585
        %v1701 = vunpack.c.l.b16 %v1586
        %v1702 = vunpack.c.l.b16 %v1587
        %v1703 = vunpack.c.l.b16 %v1588
        %v1704 = vunpack.c.l.b16 %v1589
        %v1705 = vunpack.c.l.b16 %v1590
        %v1706 = vunpack.c.l.b16 %v1591
        %v1707 = vunpack.c.l.b16 %v1592
        %v1708 = vunpack.c.l.b16 %v1593
        %v1709 = vunpack.c.l.b16 %v1594
        %v1710 = vunpack.c.l.b16 %v1595
        %v1711 = vunpack.c.l.b16 %v1596
        %v1712 = vunpack.c.l.b16 %v1597
        %v1713 = vunpack.c.l.b16 %v1598
        %v1714 = vunpack.c.l.b16 %v1599
        %v1715 = vunpack.c.l.b16 %v1600
        %v1716 = vunpack.c.l.b16 %v1601
        %v1717 = vunpack.c.l.b16 %v1602
        %v1718 = vpack.c.b16 %v1671, %v1670
        %v1719 = vpack.c.b16 %v1673, %v1672
        %v1720 = vpack.c.b16 %v1675, %v1674
        %v1721 = vpack.c.b16 %v1677, %v1676
        %v1722 = vpack.c.b16 %v1679, %v1678
        %v1723 = vpack.c.b16 %v1681, %v1680
        %v1724 = vpack.c.b16 %v1683, %v1682
        %v1725 = vpack.c.b16 %v1685, %v1684
        %v1726 = vpack.c.b16 %v1687, %v1686
        %v1727 = vpack.c.b16 %v1689, %v1688
        %v1728 = vpack.c.b16 %v1691, %v1690
        %v1729 = vpack.c.b16 %v1693, %v1692
        %v1730 = vpack.c.b16 %v1695, %v1694
        %v1731 = vpack.c.b16 %v1697, %v1696
        %v1732 = vpack.c.b16 %v1699, %v1698
        %v1733 = vpack.c.b16 %v1701, %v1700
        %v1734 = vpack.c.b16 %v1703, %v1702
        %v1735 = vpack.c.b16 %v1705, %v1704
        %v1736 = vpack.c.b16 %v1707, %v1706
        %v1737 = vpack.c.b16 %v1709, %v1708
        %v1738 = vpack.c.b16 %v1711, %v1710
        %v1739 = vpack.c.b16 %v1713, %v1712
        %v1740 = vpack.c.b16 %v1715, %v1714
        %v1741 = vpack.c.b16 %v1717, %v1716
        %1766 = vmatprep.subr.bf16.mxu0 0
        %1767 = vmatpush1.bf16.msra.mxu0 %v1718
        %1768 = vmatprep.subr.bf16.mxu0 0
        %1769 = vmatpush1.bf16.msra.mxu0 %v1719
        %1770 = vmatprep.subr.bf16.mxu0 0
        %1771 = vmatpush1.bf16.msra.mxu0 %v1720
        %1772 = vmatprep.subr.bf16.mxu0 0
        %1773 = vmatpush1.bf16.msra.mxu0 %v1721
        %1774 = vmatprep.subr.bf16.mxu0 0
        %1775 = vmatpush1.bf16.msra.mxu0 %v1722
        %1776 = vmatprep.subr.bf16.mxu0 0
        %1777 = vmatpush1.bf16.msra.mxu0 %v1723
        %1778 = vmatprep.subr.bf16.mxu0 0
        %1779 = vmatpush1.bf16.msra.mxu0 %v1724
        %1780 = vmatprep.subr.bf16.mxu0 0
        %1781 = vmatpush1.bf16.msra.mxu0 %v1725
        %1782 = vmatprep.subr.bf16.mxu0 0
        %1783 = vmatpush1.bf16.msra.mxu0 %v1726
        %1784 = vmatprep.subr.bf16.mxu0 0
        %1785 = vmatpush1.bf16.msra.mxu0 %v1727
        %1786 = vmatprep.subr.bf16.mxu0 0
        %1787 = vmatpush1.bf16.msra.mxu0 %v1728
        %1788 = vmatprep.subr.bf16.mxu0 0
        %1789 = vmatpush1.bf16.msra.mxu0 %v1729
        %1790 = vmatprep.subr.bf16.mxu0 0
        %1791 = vmatpush1.bf16.msra.mxu0 %v1730
        %1792 = vmatprep.subr.bf16.mxu0 0
        %1793 = vmatpush1.bf16.msra.mxu0 %v1731
        %1794 = vmatprep.subr.bf16.mxu0 0
        %1795 = vmatpush1.bf16.msra.mxu0 %v1732
        %1796 = vmatprep.subr.bf16.mxu0 0
        %1797 = vmatpush1.bf16.msra.mxu0 %v1733
        %1798 = vmatprep.mubr.bf16.mxu0 %v1616
        %1799 = vmatmul.mubr.bf16.gmra.mrb[0].mxu0 %v1613
        %v1800 = vpop.f32.mrb[0].mxu0
        %v1801 = vadd.f32 %v1608, %v1800
        %v1802 = vpop.f32.mrb[0].mxu0
        %v1803 = vpop.f32.mrb[0].mxu0
        %v1804 = vadd.f32 %v1608, %v1803
        %v1805 = vpop.f32.mrb[0].mxu0
        %1806 = vdwg.mxu0
        %1807 = vmatprep.subr.bf16.mxu0 0
        %1808 = vmatpush1.bf16.msra.mxu0 %v1734
        %1809 = vmatprep.subr.bf16.mxu0 0
        %1810 = vmatpush1.bf16.msra.mxu0 %v1735
        %1811 = vmatprep.subr.bf16.mxu0 0
        %1812 = vmatpush1.bf16.msra.mxu0 %v1736
        %1813 = vmatprep.subr.bf16.mxu0 0
        %1814 = vmatpush1.bf16.msra.mxu0 %v1737
        %1815 = vmatprep.subr.bf16.mxu0 0
        %1816 = vmatpush1.bf16.msra.mxu0 %v1738
        %1817 = vmatprep.subr.bf16.mxu0 0
        %1818 = vmatpush1.bf16.msra.mxu0 %v1739
        %1819 = vmatprep.subr.bf16.mxu0 0
        %1820 = vmatpush1.bf16.msra.mxu0 %v1740
        %1821 = vmatprep.subr.bf16.mxu0 0
        %1822 = vmatpush1.bf16.msra.mxu0 %v1741
        %1823 = vmatprep.subr.bf16.mxu0 0
        %1824 = vmatpush1.bf16.msra.mxu0 0
        %1825 = vmatprep.subr.bf16.mxu0 0
        %1826 = vmatpush1.bf16.msra.mxu0 0
        %1827 = vmatprep.subr.bf16.mxu0 0
        %1828 = vmatpush1.bf16.msra.mxu0 0
        %1829 = vmatprep.subr.bf16.mxu0 0
        %1830 = vmatpush1.bf16.msra.mxu0 0
        %1831 = vmatprep.subr.bf16.mxu0 0
        %1832 = vmatpush1.bf16.msra.mxu0 0
        %1833 = vmatprep.subr.bf16.mxu0 0
        %1834 = vmatpush1.bf16.msra.mxu0 0
        %1835 = vmatprep.subr.bf16.mxu0 0
        %1836 = vmatpush1.bf16.msra.mxu0 0
        %1837 = vmatprep.subr.bf16.mxu0 0
        %1838 = vmatpush1.bf16.msra.mxu0 0
        %1839 = vmatprep.mubr.bf16.mxu0 0
        %1840 = vmatmul.mubr.bf16.gmra.mrb[0].mxu0 %v1618
        %v1841 = vpop.f32.mrb[0].mxu0
        %v1842 = vadd.f32 %v1801, %v1841
        %v1843 = vpop.f32.mrb[0].mxu0
        %v1844 = vpop.f32.mrb[0].mxu0
        %v1845 = vadd.f32 %v1804, %v1844
        %v1846 = vpop.f32.mrb[0].mxu0
        %1847 = vdwg.mxu0
        %v1848 = vmax.f32 %v1842, 0.0
        %v1849 = vmax.f32 %v1845, 0.0
        %v1850 = vpack.c.bf16 %v1849, %v1848
        %v1852 = vunpack.c.l.b16 %v1850
        %v1853 = vunpack.c.h.b16 %v1850
        %v1854 = vpack.c.b16 %v1852, %v1852
        %v1855 = vpack.c.b16 %v1853, %v1853
        %1858 = vst [vmem:[#allocation3 + $0x4] sm:$0xf] %v1854
        %1859 = vst [vmem:[#allocation3 + $0x8] sm:$0xf] %v1855
        %v1860 = vld [vmem:[#allocation3] sm:$0xc]
        %v1861 = vld [vmem:[#allocation3 + $0x4] sm:$0xf]
        %v1862 = vld [vmem:[#allocation3 + $0x8] sm:$0x3]
        %v1863 = vld [vmem:[#allocation3] sm:$0x8]
        %v1864 = vld [vmem:[#allocation3 + $0x8] sm:$0x7]
        %v1865 = vld [vmem:[#allocation3 + $0x8] sm:$0xf]
        %v1869 = vunpack.c.l.b16 %v1860
        %v1870 = vunpack.c.l.b16 %v1861
        %v1871 = vunpack.c.l.b16 %v1862
        %v1872 = vpack.c.b16 %v1870, %v1869
        %v1873 = vpack.c.b16 %v1871, %v1871
        %v1876 = vunpack.c.l.b16 %v1863
        %v1877 = vunpack.c.l.b16 %v1864
        %v1878 = vpack.c.b16 %v1870, %v1876
        %v1879 = vpack.c.b16 %v1877, %v1877
        %v1880 = vrot.slane %v1878, 1
        %v1881 = vrot.slane %v1879, 1
        %v1882 = vsel %vm1547, %v1880, %v1881
        %v1884 = vunpack.c.l.b16 %v1865
        %v1885 = vpack.c.b16 %v1884, %v1870
        %v1886 = vrot.slane %v1885, 6
        %v1887 = vld [vmem:[#allocation14] sm:$0xf]
        %v1888 = vld [vmem:[#allocation14 + $0x4] sm:$0xf]
        %v1889 = vld [vmem:[#allocation14 + $0x8] sm:$0xf]
        %v1890 = vld [vmem:[#allocation14 + $0xc] sm:$0xf]
        %v1891 = vld [vmem:[#allocation14 + $0x10] sm:$0xf]
        %v1892 = vld [vmem:[#allocation14 + $0x14] sm:$0xf]
        %v1893 = vld [vmem:[#allocation14 + $0x18] sm:$0xf]
        %v1894 = vld [vmem:[#allocation14 + $0x1c] sm:$0xf]
        %v1895 = vld [vmem:[#allocation14 + $0x20] sm:$0xf]
        %v1896 = vld [vmem:[#allocation14 + $0x24] sm:$0xf]
        %v1897 = vld [vmem:[#allocation14 + $0x28] sm:$0xf]
        %v1898 = vld [vmem:[#allocation14 + $0x2c] sm:$0xf]
        %v1899 = vld [vmem:[#allocation14 + $0x30] sm:$0xf]
        %v1900 = vld [vmem:[#allocation14 + $0x34] sm:$0xf]
        %v1901 = vld [vmem:[#allocation14 + $0x38] sm:$0xf]
        %v1902 = vld [vmem:[#allocation14 + $0x3c] sm:$0xf]
        %v1903 = vld [vmem:[#allocation14 + $0x40] sm:$0xf]
        %v1904 = vld [vmem:[#allocation14 + $0x44] sm:$0xf]
        %v1905 = vld [vmem:[#allocation14 + $0x48] sm:$0xf]
        %v1906 = vld [vmem:[#allocation14 + $0x4c] sm:$0xf]
        %v1907 = vld [vmem:[#allocation14 + $0x50] sm:$0xf]
        %v1908 = vld [vmem:[#allocation14 + $0x54] sm:$0xf]
        %v1909 = vld [vmem:[#allocation14 + $0x58] sm:$0xf]
        %v1910 = vld [vmem:[#allocation14 + $0x5c] sm:$0xf]
        %v1911 = vld [vmem:[#allocation14 + $0x60] sm:$0xf]
        %v1912 = vld [vmem:[#allocation14 + $0x64] sm:$0xf]
        %v1913 = vld [vmem:[#allocation14 + $0x68] sm:$0xf]
        %v1914 = vld [vmem:[#allocation14 + $0x6c] sm:$0xf]
        %v1915 = vld [vmem:[#allocation14 + $0x70] sm:$0xf]
        %v1916 = vld [vmem:[#allocation14 + $0x74] sm:$0xf]
        %v1917 = vld [vmem:[#allocation14 + $0x78] sm:$0xf]
        %v1918 = vld [vmem:[#allocation14 + $0x7c] sm:$0xf]
        %v1919 = vld [vmem:[#allocation14 + $0x80] sm:$0xf]
        %v1920 = vld [vmem:[#allocation14 + $0x84] sm:$0xf]
        %v1921 = vld [vmem:[#allocation14 + $0x88] sm:$0xf]
        %v1922 = vld [vmem:[#allocation14 + $0x8c] sm:$0xf]
        %v1923 = vld [vmem:[#allocation14 + $0x90] sm:$0xf]
        %v1924 = vld [vmem:[#allocation14 + $0x94] sm:$0xf]
        %v1925 = vld [vmem:[#allocation14 + $0x98] sm:$0xf]
        %v1926 = vld [vmem:[#allocation14 + $0x9c] sm:$0xf]
        %v1927 = vld [vmem:[#allocation14 + $0xa0] sm:$0xf]
        %v1928 = vld [vmem:[#allocation14 + $0xa4] sm:$0xf]
        %v1929 = vld [vmem:[#allocation14 + $0xa8] sm:$0xf]
        %v1930 = vld [vmem:[#allocation14 + $0xac] sm:$0xf]
        %v1931 = vld [vmem:[#allocation14 + $0xb0] sm:$0xf]
        %v1932 = vld [vmem:[#allocation14 + $0xb4] sm:$0xf]
        %v1933 = vld [vmem:[#allocation14 + $0xb8] sm:$0xf]
        %v1934 = vld [vmem:[#allocation14 + $0xbc] sm:$0xf]
        %v1935 = vld [vmem:[#allocation15] sm:$0x1]
        %v1937 = vlaneseq
        %v1938 = vshrl.u32 %v1937, 7
        %v1939 = vsub.s32 0, %v1938
        %v1940 = vrot.slane %v1935, %v1939
        %v1942 = vrot.slane %v1872, 2
        %v1943 = vrot.slane %v1873, 2
        %v1944 = vsel %vm1610, %v1942, %v1943
        %v1945 = vrot.slane %v1882, 2
        %v1946 = vrot.slane %v1881, 2
        %v1947 = vsel %vm1610, %v1945, %v1946
        %v1948 = vrot.slane %v1886, 2
        %v1949 = vsel %vm1610, %v1948, %v1948
        %v2001 = vunpack.c.l.b16 %v1887
        %v2002 = vunpack.c.l.b16 %v1888
        %v2003 = vunpack.c.l.b16 %v1889
        %v2004 = vunpack.c.l.b16 %v1890
        %v2005 = vunpack.c.l.b16 %v1891
        %v2006 = vunpack.c.l.b16 %v1892
        %v2007 = vunpack.c.l.b16 %v1893
        %v2008 = vunpack.c.l.b16 %v1894
        %v2009 = vunpack.c.l.b16 %v1895
        %v2010 = vunpack.c.l.b16 %v1896
        %v2011 = vunpack.c.l.b16 %v1897
        %v2012 = vunpack.c.l.b16 %v1898
        %v2013 = vunpack.c.l.b16 %v1899
        %v2014 = vunpack.c.l.b16 %v1900
        %v2015 = vunpack.c.l.b16 %v1901
        %v2016 = vunpack.c.l.b16 %v1902
        %v2017 = vunpack.c.l.b16 %v1903
        %v2018 = vunpack.c.l.b16 %v1904
        %v2019 = vunpack.c.l.b16 %v1905
        %v2020 = vunpack.c.l.b16 %v1906
        %v2021 = vunpack.c.l.b16 %v1907
        %v2022 = vunpack.c.l.b16 %v1908
        %v2023 = vunpack.c.l.b16 %v1909
        %v2024 = vunpack.c.l.b16 %v1910
        %v2025 = vunpack.c.l.b16 %v1911
        %v2026 = vunpack.c.l.b16 %v1912
        %v2027 = vunpack.c.l.b16 %v1913
        %v2028 = vunpack.c.l.b16 %v1914
        %v2029 = vunpack.c.l.b16 %v1915
        %v2030 = vunpack.c.l.b16 %v1916
        %v2031 = vunpack.c.l.b16 %v1917
        %v2032 = vunpack.c.l.b16 %v1918
        %v2033 = vunpack.c.l.b16 %v1919
        %v2034 = vunpack.c.l.b16 %v1920
        %v2035 = vunpack.c.l.b16 %v1921
        %v2036 = vunpack.c.l.b16 %v1922
        %v2037 = vunpack.c.l.b16 %v1923
        %v2038 = vunpack.c.l.b16 %v1924
        %v2039 = vunpack.c.l.b16 %v1925
        %v2040 = vunpack.c.l.b16 %v1926
        %v2041 = vunpack.c.l.b16 %v1927
        %v2042 = vunpack.c.l.b16 %v1928
        %v2043 = vunpack.c.l.b16 %v1929
        %v2044 = vunpack.c.l.b16 %v1930
        %v2045 = vunpack.c.l.b16 %v1931
        %v2046 = vunpack.c.l.b16 %v1932
        %v2047 = vunpack.c.l.b16 %v1933
        %v2048 = vunpack.c.l.b16 %v1934
        %v2049 = vpack.c.b16 %v2002, %v2001
        %v2050 = vpack.c.b16 %v2004, %v2003
        %v2051 = vpack.c.b16 %v2006, %v2005
        %v2052 = vpack.c.b16 %v2008, %v2007
        %v2053 = vpack.c.b16 %v2010, %v2009
        %v2054 = vpack.c.b16 %v2012, %v2011
        %v2055 = vpack.c.b16 %v2014, %v2013
        %v2056 = vpack.c.b16 %v2016, %v2015
        %v2057 = vpack.c.b16 %v2018, %v2017
        %v2058 = vpack.c.b16 %v2020, %v2019
        %v2059 = vpack.c.b16 %v2022, %v2021
        %v2060 = vpack.c.b16 %v2024, %v2023
        %v2061 = vpack.c.b16 %v2026, %v2025
        %v2062 = vpack.c.b16 %v2028, %v2027
        %v2063 = vpack.c.b16 %v2030, %v2029
        %v2064 = vpack.c.b16 %v2032, %v2031
        %v2065 = vpack.c.b16 %v2034, %v2033
        %v2066 = vpack.c.b16 %v2036, %v2035
        %v2067 = vpack.c.b16 %v2038, %v2037
        %v2068 = vpack.c.b16 %v2040, %v2039
        %v2069 = vpack.c.b16 %v2042, %v2041
        %v2070 = vpack.c.b16 %v2044, %v2043
        %v2071 = vpack.c.b16 %v2046, %v2045
        %v2072 = vpack.c.b16 %v2048, %v2047
        %2097 = vmatprep.subr.bf16.mxu0 0
        %2098 = vmatpush1.bf16.msra.mxu0 %v2049
        %2099 = vmatprep.subr.bf16.mxu0 0
        %2100 = vmatpush1.bf16.msra.mxu0 %v2050
        %2101 = vmatprep.subr.bf16.mxu0 0
        %2102 = vmatpush1.bf16.msra.mxu0 %v2051
        %2103 = vmatprep.subr.bf16.mxu0 0
        %2104 = vmatpush1.bf16.msra.mxu0 %v2052
        %2105 = vmatprep.subr.bf16.mxu0 0
        %2106 = vmatpush1.bf16.msra.mxu0 %v2053
        %2107 = vmatprep.subr.bf16.mxu0 0
        %2108 = vmatpush1.bf16.msra.mxu0 %v2054
        %2109 = vmatprep.subr.bf16.mxu0 0
        %2110 = vmatpush1.bf16.msra.mxu0 %v2055
        %2111 = vmatprep.subr.bf16.mxu0 0
        %2112 = vmatpush1.bf16.msra.mxu0 %v2056
        %2113 = vmatprep.subr.bf16.mxu0 0
        %2114 = vmatpush1.bf16.msra.mxu0 %v2057
        %2115 = vmatprep.subr.bf16.mxu0 0
        %2116 = vmatpush1.bf16.msra.mxu0 %v2058
        %2117 = vmatprep.subr.bf16.mxu0 0
        %2118 = vmatpush1.bf16.msra.mxu0 %v2059
        %2119 = vmatprep.subr.bf16.mxu0 0
        %2120 = vmatpush1.bf16.msra.mxu0 %v2060
        %2121 = vmatprep.subr.bf16.mxu0 0
        %2122 = vmatpush1.bf16.msra.mxu0 %v2061
        %2123 = vmatprep.subr.bf16.mxu0 0
        %2124 = vmatpush1.bf16.msra.mxu0 %v2062
        %2125 = vmatprep.subr.bf16.mxu0 0
        %2126 = vmatpush1.bf16.msra.mxu0 %v2063
        %2127 = vmatprep.subr.bf16.mxu0 0
        %2128 = vmatpush1.bf16.msra.mxu0 %v2064
        %2129 = vmatprep.mubr.bf16.mxu0 %v1947
        %2130 = vmatmul.mubr.bf16.gmra.mrb[0].mxu0 %v1944
        %v2131 = vpop.f32.mrb[0].mxu0
        %v2132 = vadd.f32 %v1940, %v2131
        %v2133 = vpop.f32.mrb[0].mxu0
        %v2134 = vpop.f32.mrb[0].mxu0
        %v2135 = vadd.f32 %v1940, %v2134
        %v2136 = vpop.f32.mrb[0].mxu0
        %2137 = vdwg.mxu0
        %2138 = vmatprep.subr.bf16.mxu0 0
        %2139 = vmatpush1.bf16.msra.mxu0 %v2065
        %2140 = vmatprep.subr.bf16.mxu0 0
        %2141 = vmatpush1.bf16.msra.mxu0 %v2066
        %2142 = vmatprep.subr.bf16.mxu0 0
        %2143 = vmatpush1.bf16.msra.mxu0 %v2067
        %2144 = vmatprep.subr.bf16.mxu0 0
        %2145 = vmatpush1.bf16.msra.mxu0 %v2068
        %2146 = vmatprep.subr.bf16.mxu0 0
        %2147 = vmatpush1.bf16.msra.mxu0 %v2069
        %2148 = vmatprep.subr.bf16.mxu0 0
        %2149 = vmatpush1.bf16.msra.mxu0 %v2070
        %2150 = vmatprep.subr.bf16.mxu0 0
        %2151 = vmatpush1.bf16.msra.mxu0 %v2071
        %2152 = vmatprep.subr.bf16.mxu0 0
        %2153 = vmatpush1.bf16.msra.mxu0 %v2072
        %2154 = vmatprep.subr.bf16.mxu0 0
        %2155 = vmatpush1.bf16.msra.mxu0 0
        %2156 = vmatprep.subr.bf16.mxu0 0
        %2157 = vmatpush1.bf16.msra.mxu0 0
        %2158 = vmatprep.subr.bf16.mxu0 0
        %2159 = vmatpush1.bf16.msra.mxu0 0
        %2160 = vmatprep.subr.bf16.mxu0 0
        %2161 = vmatpush1.bf16.msra.mxu0 0
        %2162 = vmatprep.subr.bf16.mxu0 0
        %2163 = vmatpush1.bf16.msra.mxu0 0
        %2164 = vmatprep.subr.bf16.mxu0 0
        %2165 = vmatpush1.bf16.msra.mxu0 0
        %2166 = vmatprep.subr.bf16.mxu0 0
        %2167 = vmatpush1.bf16.msra.mxu0 0
        %2168 = vmatprep.subr.bf16.mxu0 0
        %2169 = vmatpush1.bf16.msra.mxu0 0
        %2170 = vmatprep.mubr.bf16.mxu0 0
        %2171 = vmatmul.mubr.bf16.gmra.mrb[0].mxu0 %v1949
        %v2172 = vpop.f32.mrb[0].mxu0
        %v2173 = vadd.f32 %v2132, %v2172
        %v2174 = vpop.f32.mrb[0].mxu0
        %v2175 = vpop.f32.mrb[0].mxu0
        %v2176 = vadd.f32 %v2135, %v2175
        %v2177 = vpop.f32.mrb[0].mxu0
        %2178 = vdwg.mxu0
        %v2179 = vmax.f32 %v2173, 0.0
        %v2180 = vmax.f32 %v2176, 0.0
        %v2181 = vld [vmem:[#allocation2 + $0x4] sm:$0xf]
        %v2182 = vld [vmem:[#allocation2 + $0x8] sm:$0xf]
        %v2183 = vunpack.c.l.bf16 %v2181
        %v2184 = vunpack.c.l.bf16 %v2182
        %v2185 = vadd.f32 %v2179, %v2183
        %v2186 = vadd.f32 %v2180, %v2184
        %v2187 = vpack.c.bf16 %v2186, %v2185
        %v2189 = vunpack.c.l.b16 %v2187
        %v2190 = vunpack.c.h.b16 %v2187
        %v2191 = vpack.c.b16 %v2189, %v2189
        %v2192 = vpack.c.b16 %v2190, %v2190
        %2195 = vst [vmem:[#allocation2 + $0x4] sm:$0xf] %v2191
        %2196 = vst [vmem:[#allocation2 + $0x8] sm:$0xf] %v2192
        %v2197 = vld [vmem:[#allocation2] sm:$0xf]
        %v2198 = vld [vmem:[#allocation2 + $0x4] sm:$0xf]
        %v2199 = vld [vmem:[#allocation2] sm:$0xc]
        %v2200 = vld [vmem:[#allocation2 + $0x4] sm:$0xf]
        %v2201 = vld [vmem:[#allocation2 + $0x8] sm:$0x3]
        %v2202 = vld [vmem:[#allocation2 + $0x8] sm:$0xf]
        %v2205 = vunpack.c.l.b16 %v2197
        %v2206 = vunpack.c.l.b16 %v2198
        %v2207 = vpack.c.b16 %v2206, %v2205
        %v2212 = vunpack.c.l.b16 %v2199
        %v2213 = vunpack.c.l.b16 %v2200
        %v2214 = vunpack.c.l.b16 %v2201
        %v2215 = vpack.c.b16 %v2213, %v2212
        %v2216 = vpack.c.b16 %v2214, %v2214
        %v2217 = vrot.slane %v2215, 2
        %v2218 = vrot.slane %v2216, 2
        %v2219 = vsel %vm1610, %v2217, %v2218
        %v2222 = vunpack.c.l.b16 %v2202
        %v2223 = vpack.c.b16 %v2222, %v2213
        %v2225 = vld [vmem:[#allocation17] sm:$0xf]
        %v2226 = vld [vmem:[#allocation17 + $0x4] sm:$0xf]
        %v2227 = vld [vmem:[#allocation17 + $0x8] sm:$0xf]
        %v2228 = vld [vmem:[#allocation17 + $0xc] sm:$0xf]
        %v2229 = vld [vmem:[#allocation17 + $0x10] sm:$0xf]
        %v2230 = vld [vmem:[#allocation17 + $0x14] sm:$0xf]
        %v2231 = vld [vmem:[#allocation17 + $0x18] sm:$0xf]
        %v2232 = vld [vmem:[#allocation17 + $0x1c] sm:$0xf]
        %v2233 = vld [vmem:[#allocation17 + $0x20] sm:$0xf]
        %v2234 = vld [vmem:[#allocation17 + $0x24] sm:$0xf]
        %v2235 = vld [vmem:[#allocation17 + $0x28] sm:$0xf]
        %v2236 = vld [vmem:[#allocation17 + $0x2c] sm:$0xf]
        %v2237 = vld [vmem:[#allocation17 + $0x30] sm:$0xf]
        %v2238 = vld [vmem:[#allocation17 + $0x34] sm:$0xf]
        %v2239 = vld [vmem:[#allocation17 + $0x38] sm:$0xf]
        %v2240 = vld [vmem:[#allocation17 + $0x3c] sm:$0xf]
        %v2241 = vld [vmem:[#allocation17 + $0x40] sm:$0xf]
        %v2242 = vld [vmem:[#allocation17 + $0x44] sm:$0xf]
        %v2243 = vld [vmem:[#allocation17 + $0x48] sm:$0xf]
        %v2244 = vld [vmem:[#allocation17 + $0x4c] sm:$0xf]
        %v2245 = vld [vmem:[#allocation17 + $0x50] sm:$0xf]
        %v2246 = vld [vmem:[#allocation17 + $0x54] sm:$0xf]
        %v2247 = vld [vmem:[#allocation17 + $0x58] sm:$0xf]
        %v2248 = vld [vmem:[#allocation17 + $0x5c] sm:$0xf]
        %v2249 = vld [vmem:[#allocation17 + $0x60] sm:$0xf]
        %v2250 = vld [vmem:[#allocation17 + $0x64] sm:$0xf]
        %v2251 = vld [vmem:[#allocation17 + $0x68] sm:$0xf]
        %v2252 = vld [vmem:[#allocation17 + $0x6c] sm:$0xf]
        %v2253 = vld [vmem:[#allocation17 + $0x70] sm:$0xf]
        %v2254 = vld [vmem:[#allocation17 + $0x74] sm:$0xf]
        %v2255 = vld [vmem:[#allocation17 + $0x78] sm:$0xf]
        %v2256 = vld [vmem:[#allocation17 + $0x7c] sm:$0xf]
        %v2257 = vld [vmem:[#allocation17 + $0x80] sm:$0xf]
        %v2258 = vld [vmem:[#allocation17 + $0x84] sm:$0xf]
        %v2259 = vld [vmem:[#allocation17 + $0x88] sm:$0xf]
        %v2260 = vld [vmem:[#allocation17 + $0x8c] sm:$0xf]
        %v2261 = vld [vmem:[#allocation17 + $0x90] sm:$0xf]
        %v2262 = vld [vmem:[#allocation17 + $0x94] sm:$0xf]
        %v2263 = vld [vmem:[#allocation17 + $0x98] sm:$0xf]
        %v2264 = vld [vmem:[#allocation17 + $0x9c] sm:$0xf]
        %v2265 = vld [vmem:[#allocation17 + $0xa0] sm:$0xf]
        %v2266 = vld [vmem:[#allocation17 + $0xa4] sm:$0xf]
        %v2267 = vld [vmem:[#allocation17 + $0xa8] sm:$0xf]
        %v2268 = vld [vmem:[#allocation17 + $0xac] sm:$0xf]
        %v2269 = vld [vmem:[#allocation17 + $0xb0] sm:$0xf]
        %v2270 = vld [vmem:[#allocation17 + $0xb4] sm:$0xf]
        %v2271 = vld [vmem:[#allocation17 + $0xb8] sm:$0xf]
        %v2272 = vld [vmem:[#allocation17 + $0xbc] sm:$0xf]
        %v2273 = vld [vmem:[#allocation18] sm:$0x1]
        %v2275 = vlaneseq
        %v2276 = vshrl.u32 %v2275, 7
        %v2277 = vsub.s32 0, %v2276
        %v2278 = vrot.slane %v2273, %v2277
        %v2328 = vunpack.c.l.b16 %v2225
        %v2329 = vunpack.c.l.b16 %v2226
        %v2330 = vunpack.c.l.b16 %v2227
        %v2331 = vunpack.c.l.b16 %v2228
        %v2332 = vunpack.c.l.b16 %v2229
        %v2333 = vunpack.c.l.b16 %v2230
        %v2334 = vunpack.c.l.b16 %v2231
        %v2335 = vunpack.c.l.b16 %v2232
        %v2336 = vunpack.c.l.b16 %v2233
        %v2337 = vunpack.c.l.b16 %v2234
        %v2338 = vunpack.c.l.b16 %v2235
        %v2339 = vunpack.c.l.b16 %v2236
        %v2340 = vunpack.c.l.b16 %v2237
        %v2341 = vunpack.c.l.b16 %v2238
        %v2342 = vunpack.c.l.b16 %v2239
        %v2343 = vunpack.c.l.b16 %v2240
        %v2344 = vunpack.c.l.b16 %v2241
        %v2345 = vunpack.c.l.b16 %v2242
        %v2346 = vunpack.c.l.b16 %v2243
        %v2347 = vunpack.c.l.b16 %v2244
        %v2348 = vunpack.c.l.b16 %v2245
        %v2349 = vunpack.c.l.b16 %v2246
        %v2350 = vunpack.c.l.b16 %v2247
        %v2351 = vunpack.c.l.b16 %v2248
        %v2352 = vunpack.c.l.b16 %v2249
        %v2353 = vunpack.c.l.b16 %v2250
        %v2354 = vunpack.c.l.b16 %v2251
        %v2355 = vunpack.c.l.b16 %v2252
        %v2356 = vunpack.c.l.b16 %v2253
        %v2357 = vunpack.c.l.b16 %v2254
        %v2358 = vunpack.c.l.b16 %v2255
        %v2359 = vunpack.c.l.b16 %v2256
        %v2360 = vunpack.c.l.b16 %v2257
        %v2361 = vunpack.c.l.b16 %v2258
        %v2362 = vunpack.c.l.b16 %v2259
        %v2363 = vunpack.c.l.b16 %v2260
        %v2364 = vunpack.c.l.b16 %v2261
        %v2365 = vunpack.c.l.b16 %v2262
        %v2366 = vunpack.c.l.b16 %v2263
        %v2367 = vunpack.c.l.b16 %v2264
        %v2368 = vunpack.c.l.b16 %v2265
        %v2369 = vunpack.c.l.b16 %v2266
        %v2370 = vunpack.c.l.b16 %v2267
        %v2371 = vunpack.c.l.b16 %v2268
        %v2372 = vunpack.c.l.b16 %v2269
        %v2373 = vunpack.c.l.b16 %v2270
        %v2374 = vunpack.c.l.b16 %v2271
        %v2375 = vunpack.c.l.b16 %v2272
        %v2376 = vpack.c.b16 %v2329, %v2328
        %v2377 = vpack.c.b16 %v2331, %v2330
        %v2378 = vpack.c.b16 %v2333, %v2332
        %v2379 = vpack.c.b16 %v2335, %v2334
        %v2380 = vpack.c.b16 %v2337, %v2336
        %v2381 = vpack.c.b16 %v2339, %v2338
        %v2382 = vpack.c.b16 %v2341, %v2340
        %v2383 = vpack.c.b16 %v2343, %v2342
        %v2384 = vpack.c.b16 %v2345, %v2344
        %v2385 = vpack.c.b16 %v2347, %v2346
        %v2386 = vpack.c.b16 %v2349, %v2348
        %v2387 = vpack.c.b16 %v2351, %v2350
        %v2388 = vpack.c.b16 %v2353, %v2352
        %v2389 = vpack.c.b16 %v2355, %v2354
        %v2390 = vpack.c.b16 %v2357, %v2356
        %v2391 = vpack.c.b16 %v2359, %v2358
        %v2392 = vpack.c.b16 %v2361, %v2360
        %v2393 = vpack.c.b16 %v2363, %v2362
        %v2394 = vpack.c.b16 %v2365, %v2364
        %v2395 = vpack.c.b16 %v2367, %v2366
        %v2396 = vpack.c.b16 %v2369, %v2368
        %v2397 = vpack.c.b16 %v2371, %v2370
        %v2398 = vpack.c.b16 %v2373, %v2372
        %v2399 = vpack.c.b16 %v2375, %v2374
        %2424 = vmatprep.subr.bf16.mxu0 0
        %2425 = vmatpush1.bf16.msra.mxu0 %v2376
        %2426 = vmatprep.subr.bf16.mxu0 0
        %2427 = vmatpush1.bf16.msra.mxu0 %v2377
        %2428 = vmatprep.subr.bf16.mxu0 0
        %2429 = vmatpush1.bf16.msra.mxu0 %v2378
        %2430 = vmatprep.subr.bf16.mxu0 0
        %2431 = vmatpush1.bf16.msra.mxu0 %v2379
        %2432 = vmatprep.subr.bf16.mxu0 0
        %2433 = vmatpush1.bf16.msra.mxu0 %v2380
        %2434 = vmatprep.subr.bf16.mxu0 0
        %2435 = vmatpush1.bf16.msra.mxu0 %v2381
        %2436 = vmatprep.subr.bf16.mxu0 0
        %2437 = vmatpush1.bf16.msra.mxu0 %v2382
        %2438 = vmatprep.subr.bf16.mxu0 0
        %2439 = vmatpush1.bf16.msra.mxu0 %v2383
        %2440 = vmatprep.subr.bf16.mxu0 0
        %2441 = vmatpush1.bf16.msra.mxu0 %v2384
        %2442 = vmatprep.subr.bf16.mxu0 0
        %2443 = vmatpush1.bf16.msra.mxu0 %v2385
        %2444 = vmatprep.subr.bf16.mxu0 0
        %2445 = vmatpush1.bf16.msra.mxu0 %v2386
        %2446 = vmatprep.subr.bf16.mxu0 0
        %2447 = vmatpush1.bf16.msra.mxu0 %v2387
        %2448 = vmatprep.subr.bf16.mxu0 0
        %2449 = vmatpush1.bf16.msra.mxu0 %v2388
        %2450 = vmatprep.subr.bf16.mxu0 0
        %2451 = vmatpush1.bf16.msra.mxu0 %v2389
        %2452 = vmatprep.subr.bf16.mxu0 0
        %2453 = vmatpush1.bf16.msra.mxu0 %v2390
        %2454 = vmatprep.subr.bf16.mxu0 0
        %2455 = vmatpush1.bf16.msra.mxu0 %v2391
        %2456 = vmatprep.mubr.bf16.mxu0 %v2219
        %2457 = vmatmul.mubr.bf16.gmra.mrb[0].mxu0 %v2207
        %v2458 = vpop.f32.mrb[0].mxu0
        %v2459 = vadd.f32 %v2278, %v2458
        %v2460 = vpop.f32.mrb[0].mxu0
        %v2461 = vpop.f32.mrb[0].mxu0
        %v2462 = vadd.f32 %v2278, %v2461
        %v2463 = vpop.f32.mrb[0].mxu0
        %2464 = vdwg.mxu0
        %2465 = vmatprep.subr.bf16.mxu0 0
        %2466 = vmatpush1.bf16.msra.mxu0 %v2392
        %2467 = vmatprep.subr.bf16.mxu0 0
        %2468 = vmatpush1.bf16.msra.mxu0 %v2393
        %2469 = vmatprep.subr.bf16.mxu0 0
        %2470 = vmatpush1.bf16.msra.mxu0 %v2394
        %2471 = vmatprep.subr.bf16.mxu0 0
        %2472 = vmatpush1.bf16.msra.mxu0 %v2395
        %2473 = vmatprep.subr.bf16.mxu0 0
        %2474 = vmatpush1.bf16.msra.mxu0 %v2396
        %2475 = vmatprep.subr.bf16.mxu0 0
        %2476 = vmatpush1.bf16.msra.mxu0 %v2397
        %2477 = vmatprep.subr.bf16.mxu0 0
        %2478 = vmatpush1.bf16.msra.mxu0 %v2398
        %2479 = vmatprep.subr.bf16.mxu0 0
        %2480 = vmatpush1.bf16.msra.mxu0 %v2399
        %2481 = vmatprep.subr.bf16.mxu0 0
        %2482 = vmatpush1.bf16.msra.mxu0 0
        %2483 = vmatprep.subr.bf16.mxu0 0
        %2484 = vmatpush1.bf16.msra.mxu0 0
        %2485 = vmatprep.subr.bf16.mxu0 0
        %2486 = vmatpush1.bf16.msra.mxu0 0
        %2487 = vmatprep.subr.bf16.mxu0 0
        %2488 = vmatpush1.bf16.msra.mxu0 0
        %2489 = vmatprep.subr.bf16.mxu0 0
        %2490 = vmatpush1.bf16.msra.mxu0 0
        %2491 = vmatprep.subr.bf16.mxu0 0
        %2492 = vmatpush1.bf16.msra.mxu0 0
        %2493 = vmatprep.subr.bf16.mxu0 0
        %2494 = vmatpush1.bf16.msra.mxu0 0
        %2495 = vmatprep.subr.bf16.mxu0 0
        %2496 = vmatpush1.bf16.msra.mxu0 0
        %2497 = vmatprep.mubr.bf16.mxu0 0
        %2498 = vmatmul.mubr.bf16.gmra.mrb[0].mxu0 %v2223
        %v2499 = vpop.f32.mrb[0].mxu0
        %v2500 = vadd.f32 %v2459, %v2499
        %v2501 = vpop.f32.mrb[0].mxu0
        %v2502 = vpop.f32.mrb[0].mxu0
        %v2503 = vadd.f32 %v2462, %v2502
        %v2504 = vpop.f32.mrb[0].mxu0
        %2505 = vdwg.mxu0
        %v2506 = vmax.f32 %v2500, 0.0
        %v2507 = vmax.f32 %v2503, 0.0
        %v2508 = vpack.c.bf16 %v2507, %v2506
        %v2510 = vunpack.c.l.b16 %v2508
        %v2511 = vunpack.c.h.b16 %v2508
        %v2512 = vpack.c.b16 %v2510, %v2510
        %v2513 = vpack.c.b16 %v2511, %v2511
        %2516 = vst [vmem:[#allocation3 + $0x4] sm:$0xf] %v2512
        %2517 = vst [vmem:[#allocation3 + $0x8] sm:$0xf] %v2513
        %v2518 = vld [vmem:[#allocation3] sm:$0xf]
        %v2519 = vld [vmem:[#allocation3 + $0x4] sm:$0xf]
        %v2520 = vld [vmem:[#allocation3] sm:$0xc]
        %v2521 = vld [vmem:[#allocation3 + $0x4] sm:$0xf]
        %v2522 = vld [vmem:[#allocation3 + $0x8] sm:$0x3]
        %v2523 = vld [vmem:[#allocation3 + $0x8] sm:$0xf]
        %v2526 = vunpack.c.l.b16 %v2518
        %v2527 = vunpack.c.l.b16 %v2519
        %v2528 = vpack.c.b16 %v2527, %v2526
        %v2533 = vunpack.c.l.b16 %v2520
        %v2534 = vunpack.c.l.b16 %v2521
        %v2535 = vunpack.c.l.b16 %v2522
        %v2536 = vpack.c.b16 %v2534, %v2533
        %v2537 = vpack.c.b16 %v2535, %v2535
        %v2538 = vrot.slane %v2536, 2
        %v2539 = vrot.slane %v2537, 2
        %v2540 = vsel %vm1610, %v2538, %v2539
        %v2543 = vunpack.c.l.b16 %v2523
        %v2544 = vpack.c.b16 %v2543, %v2534
        %v2546 = vld [vmem:[#allocation20] sm:$0xf]
        %v2547 = vld [vmem:[#allocation20 + $0x4] sm:$0xf]
        %v2548 = vld [vmem:[#allocation20 + $0x8] sm:$0xf]
        %v2549 = vld [vmem:[#allocation20 + $0xc] sm:$0xf]
        %v2550 = vld [vmem:[#allocation20 + $0x10] sm:$0xf]
        %v2551 = vld [vmem:[#allocation20 + $0x14] sm:$0xf]
        %v2552 = vld [vmem:[#allocation20 + $0x18] sm:$0xf]
        %v2553 = vld [vmem:[#allocation20 + $0x1c] sm:$0xf]
        %v2554 = vld [vmem:[#allocation20 + $0x20] sm:$0xf]
        %v2555 = vld [vmem:[#allocation20 + $0x24] sm:$0xf]
        %v2556 = vld [vmem:[#allocation20 + $0x28] sm:$0xf]
        %v2557 = vld [vmem:[#allocation20 + $0x2c] sm:$0xf]
        %v2558 = vld [vmem:[#allocation20 + $0x30] sm:$0xf]
        %v2559 = vld [vmem:[#allocation20 + $0x34] sm:$0xf]
        %v2560 = vld [vmem:[#allocation20 + $0x38] sm:$0xf]
        %v2561 = vld [vmem:[#allocation20 + $0x3c] sm:$0xf]
        %v2562 = vld [vmem:[#allocation20 + $0x40] sm:$0xf]
        %v2563 = vld [vmem:[#allocation20 + $0x44] sm:$0xf]
        %v2564 = vld [vmem:[#allocation20 + $0x48] sm:$0xf]
        %v2565 = vld [vmem:[#allocation20 + $0x4c] sm:$0xf]
        %v2566 = vld [vmem:[#allocation20 + $0x50] sm:$0xf]
        %v2567 = vld [vmem:[#allocation20 + $0x54] sm:$0xf]
        %v2568 = vld [vmem:[#allocation20 + $0x58] sm:$0xf]
        %v2569 = vld [vmem:[#allocation20 + $0x5c] sm:$0xf]
        %v2570 = vld [vmem:[#allocation20 + $0x60] sm:$0xf]
        %v2571 = vld [vmem:[#allocation20 + $0x64] sm:$0xf]
        %v2572 = vld [vmem:[#allocation20 + $0x68] sm:$0xf]
        %v2573 = vld [vmem:[#allocation20 + $0x6c] sm:$0xf]
        %v2574 = vld [vmem:[#allocation20 + $0x70] sm:$0xf]
        %v2575 = vld [vmem:[#allocation20 + $0x74] sm:$0xf]
        %v2576 = vld [vmem:[#allocation20 + $0x78] sm:$0xf]
        %v2577 = vld [vmem:[#allocation20 + $0x7c] sm:$0xf]
        %v2578 = vld [vmem:[#allocation20 + $0x80] sm:$0xf]
        %v2579 = vld [vmem:[#allocation20 + $0x84] sm:$0xf]
        %v2580 = vld [vmem:[#allocation20 + $0x88] sm:$0xf]
        %v2581 = vld [vmem:[#allocation20 + $0x8c] sm:$0xf]
        %v2582 = vld [vmem:[#allocation20 + $0x90] sm:$0xf]
        %v2583 = vld [vmem:[#allocation20 + $0x94] sm:$0xf]
        %v2584 = vld [vmem:[#allocation20 + $0x98] sm:$0xf]
        %v2585 = vld [vmem:[#allocation20 + $0x9c] sm:$0xf]
        %v2586 = vld [vmem:[#allocation20 + $0xa0] sm:$0xf]
        %v2587 = vld [vmem:[#allocation20 + $0xa4] sm:$0xf]
        %v2588 = vld [vmem:[#allocation20 + $0xa8] sm:$0xf]
        %v2589 = vld [vmem:[#allocation20 + $0xac] sm:$0xf]
        %v2590 = vld [vmem:[#allocation20 + $0xb0] sm:$0xf]
        %v2591 = vld [vmem:[#allocation20 + $0xb4] sm:$0xf]
        %v2592 = vld [vmem:[#allocation20 + $0xb8] sm:$0xf]
        %v2593 = vld [vmem:[#allocation20 + $0xbc] sm:$0xf]
        %v2594 = vld [vmem:[#allocation21] sm:$0x1]
        %v2596 = vlaneseq
        %v2597 = vshrl.u32 %v2596, 7
        %v2598 = vsub.s32 0, %v2597
        %v2599 = vrot.slane %v2594, %v2598
        %v2649 = vunpack.c.l.b16 %v2546
        %v2650 = vunpack.c.l.b16 %v2547
        %v2651 = vunpack.c.l.b16 %v2548
        %v2652 = vunpack.c.l.b16 %v2549
        %v2653 = vunpack.c.l.b16 %v2550
        %v2654 = vunpack.c.l.b16 %v2551
        %v2655 = vunpack.c.l.b16 %v2552
        %v2656 = vunpack.c.l.b16 %v2553
        %v2657 = vunpack.c.l.b16 %v2554
        %v2658 = vunpack.c.l.b16 %v2555
        %v2659 = vunpack.c.l.b16 %v2556
        %v2660 = vunpack.c.l.b16 %v2557
        %v2661 = vunpack.c.l.b16 %v2558
        %v2662 = vunpack.c.l.b16 %v2559
        %v2663 = vunpack.c.l.b16 %v2560
        %v2664 = vunpack.c.l.b16 %v2561
        %v2665 = vunpack.c.l.b16 %v2562
        %v2666 = vunpack.c.l.b16 %v2563
        %v2667 = vunpack.c.l.b16 %v2564
        %v2668 = vunpack.c.l.b16 %v2565
        %v2669 = vunpack.c.l.b16 %v2566
        %v2670 = vunpack.c.l.b16 %v2567
        %v2671 = vunpack.c.l.b16 %v2568
        %v2672 = vunpack.c.l.b16 %v2569
        %v2673 = vunpack.c.l.b16 %v2570
        %v2674 = vunpack.c.l.b16 %v2571
        %v2675 = vunpack.c.l.b16 %v2572
        %v2676 = vunpack.c.l.b16 %v2573
        %v2677 = vunpack.c.l.b16 %v2574
        %v2678 = vunpack.c.l.b16 %v2575
        %v2679 = vunpack.c.l.b16 %v2576
        %v2680 = vunpack.c.l.b16 %v2577
        %v2681 = vunpack.c.l.b16 %v2578
        %v2682 = vunpack.c.l.b16 %v2579
        %v2683 = vunpack.c.l.b16 %v2580
        %v2684 = vunpack.c.l.b16 %v2581
        %v2685 = vunpack.c.l.b16 %v2582
        %v2686 = vunpack.c.l.b16 %v2583
        %v2687 = vunpack.c.l.b16 %v2584
        %v2688 = vunpack.c.l.b16 %v2585
        %v2689 = vunpack.c.l.b16 %v2586
        %v2690 = vunpack.c.l.b16 %v2587
        %v2691 = vunpack.c.l.b16 %v2588
        %v2692 = vunpack.c.l.b16 %v2589
        %v2693 = vunpack.c.l.b16 %v2590
        %v2694 = vunpack.c.l.b16 %v2591
        %v2695 = vunpack.c.l.b16 %v2592
        %v2696 = vunpack.c.l.b16 %v2593
        %v2697 = vpack.c.b16 %v2650, %v2649
        %v2698 = vpack.c.b16 %v2652, %v2651
        %v2699 = vpack.c.b16 %v2654, %v2653
        %v2700 = vpack.c.b16 %v2656, %v2655
        %v2701 = vpack.c.b16 %v2658, %v2657
        %v2702 = vpack.c.b16 %v2660, %v2659
        %v2703 = vpack.c.b16 %v2662, %v2661
        %v2704 = vpack.c.b16 %v2664, %v2663
        %v2705 = vpack.c.b16 %v2666, %v2665
        %v2706 = vpack.c.b16 %v2668, %v2667
        %v2707 = vpack.c.b16 %v2670, %v2669
        %v2708 = vpack.c.b16 %v2672, %v2671
        %v2709 = vpack.c.b16 %v2674, %v2673
        %v2710 = vpack.c.b16 %v2676, %v2675
        %v2711 = vpack.c.b16 %v2678, %v2677
        %v2712 = vpack.c.b16 %v2680, %v2679
        %v2713 = vpack.c.b16 %v2682, %v2681
        %v2714 = vpack.c.b16 %v2684, %v2683
        %v2715 = vpack.c.b16 %v2686, %v2685
        %v2716 = vpack.c.b16 %v2688, %v2687
        %v2717 = vpack.c.b16 %v2690, %v2689
        %v2718 = vpack.c.b16 %v2692, %v2691
        %v2719 = vpack.c.b16 %v2694, %v2693
        %v2720 = vpack.c.b16 %v2696, %v2695
        %2745 = vmatprep.subr.bf16.mxu0 0
        %2746 = vmatpush1.bf16.msra.mxu0 %v2697
        %2747 = vmatprep.subr.bf16.mxu0 0
        %2748 = vmatpush1.bf16.msra.mxu0 %v2698
        %2749 = vmatprep.subr.bf16.mxu0 0
        %2750 = vmatpush1.bf16.msra.mxu0 %v2699
        %2751 = vmatprep.subr.bf16.mxu0 0
        %2752 = vmatpush1.bf16.msra.mxu0 %v2700
        %2753 = vmatprep.subr.bf16.mxu0 0
        %2754 = vmatpush1.bf16.msra.mxu0 %v2701
        %2755 = vmatprep.subr.bf16.mxu0 0
        %2756 = vmatpush1.bf16.msra.mxu0 %v2702
        %2757 = vmatprep.subr.bf16.mxu0 0
        %2758 = vmatpush1.bf16.msra.mxu0 %v2703
        %2759 = vmatprep.subr.bf16.mxu0 0
        %2760 = vmatpush1.bf16.msra.mxu0 %v2704
        %2761 = vmatprep.subr.bf16.mxu0 0
        %2762 = vmatpush1.bf16.msra.mxu0 %v2705
        %2763 = vmatprep.subr.bf16.mxu0 0
        %2764 = vmatpush1.bf16.msra.mxu0 %v2706
        %2765 = vmatprep.subr.bf16.mxu0 0
        %2766 = vmatpush1.bf16.msra.mxu0 %v2707
        %2767 = vmatprep.subr.bf16.mxu0 0
        %2768 = vmatpush1.bf16.msra.mxu0 %v2708
        %2769 = vmatprep.subr.bf16.mxu0 0
        %2770 = vmatpush1.bf16.msra.mxu0 %v2709
        %2771 = vmatprep.subr.bf16.mxu0 0
        %2772 = vmatpush1.bf16.msra.mxu0 %v2710
        %2773 = vmatprep.subr.bf16.mxu0 0
        %2774 = vmatpush1.bf16.msra.mxu0 %v2711
        %2775 = vmatprep.subr.bf16.mxu0 0
        %2776 = vmatpush1.bf16.msra.mxu0 %v2712
        %2777 = vmatprep.mubr.bf16.mxu0 %v2540
        %2778 = vmatmul.mubr.bf16.gmra.mrb[0].mxu0 %v2528
        %v2779 = vpop.f32.mrb[0].mxu0
        %v2780 = vadd.f32 %v2599, %v2779
        %v2781 = vpop.f32.mrb[0].mxu0
        %v2782 = vpop.f32.mrb[0].mxu0
        %v2783 = vadd.f32 %v2599, %v2782
        %v2784 = vpop.f32.mrb[0].mxu0
        %2785 = vdwg.mxu0
        %2786 = vmatprep.subr.bf16.mxu0 0
        %2787 = vmatpush1.bf16.msra.mxu0 %v2713
        %2788 = vmatprep.subr.bf16.mxu0 0
        %2789 = vmatpush1.bf16.msra.mxu0 %v2714
        %2790 = vmatprep.subr.bf16.mxu0 0
        %2791 = vmatpush1.bf16.msra.mxu0 %v2715
        %2792 = vmatprep.subr.bf16.mxu0 0
        %2793 = vmatpush1.bf16.msra.mxu0 %v2716
        %2794 = vmatprep.subr.bf16.mxu0 0
        %2795 = vmatpush1.bf16.msra.mxu0 %v2717
        %2796 = vmatprep.subr.bf16.mxu0 0
        %2797 = vmatpush1.bf16.msra.mxu0 %v2718
        %2798 = vmatprep.subr.bf16.mxu0 0
        %2799 = vmatpush1.bf16.msra.mxu0 %v2719
        %2800 = vmatprep.subr.bf16.mxu0 0
        %2801 = vmatpush1.bf16.msra.mxu0 %v2720
        %2802 = vmatprep.subr.bf16.mxu0 0
        %2803 = vmatpush1.bf16.msra.mxu0 0
        %2804 = vmatprep.subr.bf16.mxu0 0
        %2805 = vmatpush1.bf16.msra.mxu0 0
        %2806 = vmatprep.subr.bf16.mxu0 0
        %2807 = vmatpush1.bf16.msra.mxu0 0
        %2808 = vmatprep.subr.bf16.mxu0 0
        %2809 = vmatpush1.bf16.msra.mxu0 0
        %2810 = vmatprep.subr.bf16.mxu0 0
        %2811 = vmatpush1.bf16.msra.mxu0 0
        %2812 = vmatprep.subr.bf16.mxu0 0
        %2813 = vmatpush1.bf16.msra.mxu0 0
        %2814 = vmatprep.subr.bf16.mxu0 0
        %2815 = vmatpush1.bf16.msra.mxu0 0
        %2816 = vmatprep.subr.bf16.mxu0 0
        %2817 = vmatpush1.bf16.msra.mxu0 0
        %2818 = vmatprep.mubr.bf16.mxu0 0
        %2819 = vmatmul.mubr.bf16.gmra.mrb[0].mxu0 %v2544
        %v2820 = vpop.f32.mrb[0].mxu0
        %v2821 = vadd.f32 %v2780, %v2820
        %v2822 = vpop.f32.mrb[0].mxu0
        %v2823 = vpop.f32.mrb[0].mxu0
        %v2824 = vadd.f32 %v2783, %v2823
        %v2825 = vpop.f32.mrb[0].mxu0
        %2826 = vdwg.mxu0
        %v2827 = vld [vmem:[#allocation2 + $0x4] sm:$0xf]
        %v2828 = vld [vmem:[#allocation2 + $0x8] sm:$0xf]
        %v2829 = vld [vmem:[%s15] sm:$0xf]
        %v2830 = vld [vmem:[%s15 + $0x4] sm:$0xf]
        %v2831 = vld [vmem:[%s15 + $0x8] sm:$0xf]
        %v2832 = vld [vmem:[%s15 + $0xc] sm:$0xf]
        %v2833 = vld [vmem:[%s15 + $0x10] sm:$0xf]
        %v2834 = vld [vmem:[%s15 + $0x14] sm:$0xf]
        %v2835 = vld [vmem:[%s15 + $0x18] sm:$0xf]
        %v2836 = vld [vmem:[%s15 + $0x1c] sm:$0xf]
        %v2837 = vld [vmem:[%s15 + $0x20] sm:$0xf]
        %v2838 = vld [vmem:[%s15 + $0x24] sm:$0xf]
        %v2839 = vld [vmem:[%s15 + $0x28] sm:$0xf]
        %v2840 = vld [vmem:[%s15 + $0x2c] sm:$0xf]
        %v2841 = vld [vmem:[%s15 + $0x30] sm:$0xf]
        %v2842 = vld [vmem:[%s15 + $0x34] sm:$0xf]
        %v2843 = vld [vmem:[%s15 + $0x38] sm:$0xf]
        %v2844 = vld [vmem:[%s15 + $0x3c] sm:$0xf]
        %v2845 = vld [vmem:[#allocation23] sm:$0x1]
        %v2847 = vlaneseq
        %v2848 = vshrl.u32 %v2847, 7
        %v2849 = vsub.s32 0, %v2848
        %v2850 = vrot.slane %v2845, %v2849
        %v2854 = vunpack.c.l.b16 %v2827
        %v2855 = vunpack.c.l.b16 %v2828
        %v2856 = vpack.c.b16 %v2855, %v2854
        %v2874 = vunpack.c.l.b16 %v2829
        %v2875 = vunpack.c.l.b16 %v2830
        %v2876 = vunpack.c.l.b16 %v2831
        %v2877 = vunpack.c.l.b16 %v2832
        %v2878 = vunpack.c.l.b16 %v2833
        %v2879 = vunpack.c.l.b16 %v2834
        %v2880 = vunpack.c.l.b16 %v2835
        %v2881 = vunpack.c.l.b16 %v2836
        %v2882 = vunpack.c.l.b16 %v2837
        %v2883 = vunpack.c.l.b16 %v2838
        %v2884 = vunpack.c.l.b16 %v2839
        %v2885 = vunpack.c.l.b16 %v2840
        %v2886 = vunpack.c.l.b16 %v2841
        %v2887 = vunpack.c.l.b16 %v2842
        %v2888 = vunpack.c.l.b16 %v2843
        %v2889 = vunpack.c.l.b16 %v2844
        %v2890 = vpack.c.b16 %v2875, %v2874
        %v2891 = vpack.c.b16 %v2877, %v2876
        %v2892 = vpack.c.b16 %v2879, %v2878
        %v2893 = vpack.c.b16 %v2881, %v2880
        %v2894 = vpack.c.b16 %v2883, %v2882
        %v2895 = vpack.c.b16 %v2885, %v2884
        %v2896 = vpack.c.b16 %v2887, %v2886
        %v2897 = vpack.c.b16 %v2889, %v2888
        %2906 = vmatprep.subr.bf16.mxu0 0
        %2907 = vmatpush1.bf16.msra.mxu0 %v2890
        %2908 = vmatprep.subr.bf16.mxu0 0
        %2909 = vmatpush1.bf16.msra.mxu0 %v2891
        %2910 = vmatprep.subr.bf16.mxu0 0
        %2911 = vmatpush1.bf16.msra.mxu0 %v2892
        %2912 = vmatprep.subr.bf16.mxu0 0
        %2913 = vmatpush1.bf16.msra.mxu0 %v2893
        %2914 = vmatprep.subr.bf16.mxu0 0
        %2915 = vmatpush1.bf16.msra.mxu0 %v2894
        %2916 = vmatprep.subr.bf16.mxu0 0
        %2917 = vmatpush1.bf16.msra.mxu0 %v2895
        %2918 = vmatprep.subr.bf16.mxu0 0
        %2919 = vmatpush1.bf16.msra.mxu0 %v2896
        %2920 = vmatprep.subr.bf16.mxu0 0
        %2921 = vmatpush1.bf16.msra.mxu0 %v2897
        %2922 = vmatprep.subr.bf16.mxu0 0
        %2923 = vmatpush1.bf16.msra.mxu0 0
        %2924 = vmatprep.subr.bf16.mxu0 0
        %2925 = vmatpush1.bf16.msra.mxu0 0
        %2926 = vmatprep.subr.bf16.mxu0 0
        %2927 = vmatpush1.bf16.msra.mxu0 0
        %2928 = vmatprep.subr.bf16.mxu0 0
        %2929 = vmatpush1.bf16.msra.mxu0 0
        %2930 = vmatprep.subr.bf16.mxu0 0
        %2931 = vmatpush1.bf16.msra.mxu0 0
        %2932 = vmatprep.subr.bf16.mxu0 0
        %2933 = vmatpush1.bf16.msra.mxu0 0
        %2934 = vmatprep.subr.bf16.mxu0 0
        %2935 = vmatpush1.bf16.msra.mxu0 0
        %2936 = vmatprep.subr.bf16.mxu0 0
        %2937 = vmatpush1.bf16.msra.mxu0 0
        %2938 = vmatprep.mubr.bf16.mxu0 0
        %2939 = vmatmul.mubr.bf16.gmra.mrb[0].mxu0 %v2856
        %v2940 = vpop.f32.mrb[0].mxu0
        %v2941 = vadd.f32 %v2850, %v2940
        %v2942 = vpop.f32.mrb[0].mxu0
        %v2943 = vpop.f32.mrb[0].mxu0
        %v2944 = vadd.f32 %v2850, %v2943
        %v2945 = vpop.f32.mrb[0].mxu0
        %2946 = vdwg.mxu0
        %v2947 = vadd.f32 %v2821, %v2941
        %v2948 = vadd.f32 %v2824, %v2944
        %v2949 = vpack.c.bf16 %v2948, %v2947
        %v2951 = vunpack.c.l.b16 %v2949
        %v2952 = vunpack.c.h.b16 %v2949
        %v2953 = vpack.c.b16 %v2951, %v2951
        %v2954 = vpack.c.b16 %v2952, %v2952
        %2957 = vst [vmem:[#allocation2 + $0x4] sm:$0xf] %v2953
        %2958 = vst [vmem:[#allocation2 + $0x8] sm:$0xf] %v2954
        %v2959 = vld [vmem:[#allocation2 + $0x4] sm:$0xf]
        %v2960 = vld [vmem:[#allocation2 + $0x8] sm:$0xf]
        %2961 = vst [vmem:[%s723] sm:$0xf] %v2959
        %2962 = vst [vmem:[%s723 + $0x4] sm:$0xf] %v2960
        %p2963 = scmp.lt.s32.totalorder %s35, 1
        %s2964 = scalar_select %p2963, %s35, 1
        %s2965 = smul.addr %s2964, 2
        %s2966 = smul.addr %s2965, 4
        %s2967 = scalar_lea.vmem %s17, %s2966
        // Predicated region
        $region141: #{tcn_forward.1} parent=87 // pred_check
          %p2968 = pneg %p415
        $region142: #{tcn_forward.1} parent=87 // pred_check_branch
          %2970 = sbr.rel (%p2968) target = $region144
        $region143: #{tcn_forward.1} parent=87 // pred_region
          _
        $region144: #{tcn_forward.1} parent=87 // pred_fallthru
          _
      $region88: #{tcn_forward.1} parent=5 // pred_fallthru
        _
      %p2971 = scmp.le.s32.totalorder 2, %s30
      // Predicated region
      $region145: #{tcn_forward.1} parent=5 // pred_check
        %p2972 = pneg %p2971
      $region146: #{tcn_forward.1} parent=5 // pred_check_branch
        %2974 = sbr.rel (%p2972) target = $region148
      $region147: #{tcn_forward.1} parent=5 // pred_region
        %s2975 = ssub.s32 %s30, 2
        // Predicated region
        $region149: #{tcn_forward.1} parent=147 // pred_check
          %p2976 = pneg %p421
        $region150: #{tcn_forward.1} parent=147 // pred_check_branch
          %2978 = sbr.rel (%p2976) target = $region152
        $region151: #{tcn_forward.1} parent=147 // pred_region
          %p2979 = scmp.lt.s32.totalorder %s36, 1
          %s2980 = scalar_select %p2979, %s36, 1
          %s2981 = smul.addr %s2980, 2
          %s2982 = smul.addr %s2981, 4
          %s2983 = scalar_lea.vmem %s17, %s2982
        $region152: #{tcn_forward.1} parent=147 // pred_fallthru
          _
      $region148: #{tcn_forward.1} parent=5 // pred_fallthru
        _
    $region6: #{tcn_forward.1} parent=1 // loop_footer
      %s34 = sadd.s32 1, %s30
    $region7: #{tcn_forward.1} parent=1 // loop_footer_branch
      %29 = sbr.rel target = $region3
    $region8: #{tcn_forward.1} parent=1 // loop_exit
      _
    %2984 = vsyncpa [#allocation5], 1
    %s2985 = scalar_lea.sflag [#allocation5], 1
    %2986 = vsyncpa %s2985, 1
    %2987 = vsyncpa [#allocation7], 1
    %2988 = vsyncpa [#allocation10], 1
    %2989 = vsyncpa [#allocation13], 1
    %2990 = vsyncpa [#allocation16], 1
    %2991 = vsyncpa [#allocation19], 1
    %2992 = vsyncpa [#allocation22], 1

</llo_original>
